<compile_context>
chip_gen: v7x
topology: tpu7x:2x2x1
jax: 0.10.0
libtpu: 0.0.40
codegen_flags: <defaults>
</compile_context>

<pallas_src>
import functools

import jax
import jax.numpy as jnp
import numpy as np
from jax.experimental import pallas as pl
from jax.experimental.pallas import tpu as pltpu

EPS = 1e-5  # nn.InstanceNorm2d default


# ------------------------------ Pallas kernel -------------------------------

def _unet_innermost_kernel(xph_ref, wd_ref, bd_ref, wu_ref, o_ref, dp_ref, *,
                           compute_dtype):
    """Fused innermost U-Net block for one batch element.

    xph_ref: (1, Hp, Wp, 4*Cin)  channel-stacked polyphase split of the padded
                                  input; channel block p = py*2+px holds parity
                                  phase (py, px) of xpad.
    wd_ref : (4, 4*Cin, Ci)       down-conv weights grouped by 2x2 window
                                  offset q = qy*2+qx (channel order matches xph).
    bd_ref : (1, Ci)              down-conv bias.
    wu_ref : (16, Ci, Co)         up (transposed) conv 4x4 taps, t = ky*4+kx.
    o_ref  : (1, 4*Hh, Wh, Co)    polyphase InstanceNorm output (de-interleaved
                                  back to (H, W) by the wrapper).
    dp_ref : (Hh+2, Wh+2, Ci) f32 VMEM scratch: zero-padded down activation.
    """
    Hp = xph_ref.shape[1]
    Wp = xph_ref.shape[2]
    Cin4 = xph_ref.shape[3]
    Hh, Wh = Hp - 1, Wp - 1
    Ci = wd_ref.shape[2]
    Co = wu_ref.shape[2]
    HWo = Hh * Wh

    # ---- down path: LeakyReLU(0.2) -> Conv2d(k4, s2, p1) + bias -> ReLU ----
    xall = xph_ref[0].astype(jnp.float32)                 # (Hp, Wp, 4*Cin)
    xall = jnp.where(xall > 0, xall, 0.2 * xall)          # LeakyReLU (pad zeros stay 0)

    acc = jnp.zeros((HWo, Ci), jnp.float32)
    for qy in range(2):                                   # 4 accumulated matmuls
        for qx in range(2):
            tap = xall[qy:qy + Hh, qx:qx + Wh, :].reshape(HWo, Cin4)
            acc = acc + jnp.dot(tap.astype(compute_dtype), wd_ref[qy * 2 + qx],
                                preferred_element_type=jnp.float32)
    d = jnp.maximum(acc + bd_ref[...], 0.0)               # (HWo, Ci) f32

    # ---- stash d zero-padded (1-pixel halo) in VMEM: no HBM round-trip ----
    dp_ref[...] = jnp.zeros_like(dp_ref)
    dp_ref[pl.ds(1, Hh), pl.ds(1, Wh), :] = d.reshape(Hh, Wh, Ci)

    # ---- up path: ConvTranspose2d(k4, s2, p1); bias dropped (cancelled by IN) ----
    # Output phase (py, px) holds out[2a+py, 2b+px]; each phase is 4 tap matmuls.
    phase_acc = []
    for py in range(2):
        for px in range(2):
            uacc = jnp.zeros((HWo, Co), jnp.float32)
            for ky in ((1, 3) if py == 0 else (0, 2)):
                offy = (py + 3 - ky) // 2                  # row offset into padded d
                for kx in ((1, 3) if px == 0 else (0, 2)):
                    offx = (px + 3 - kx) // 2
                    tap = dp_ref[pl.ds(offy, Hh), pl.ds(offx, Wh), :]
                    tap = tap.reshape(HWo, Ci).astype(compute_dtype)
                    uacc = uacc + jnp.dot(tap, wu_ref[ky * 4 + kx],
                                          preferred_element_type=jnp.float32)
            phase_acc.append(uacc)

    # ---- InstanceNorm2d (affine=False): single-pass sum / sum-of-squares ----
    n = jnp.float32(4 * HWo)                              # = H * W
    s = phase_acc[0].sum(axis=0, keepdims=True)
    ss = (phase_acc[0] * phase_acc[0]).sum(axis=0, keepdims=True)
    for u in phase_acc[1:]:
        s = s + u.sum(axis=0, keepdims=True)
        ss = ss + (u * u).sum(axis=0, keepdims=True)
    mean = s / n
    var = ss / n - mean * mean                            # biased var, as in PyTorch
    inv = jax.lax.rsqrt(var + EPS)
    for p, u in enumerate(phase_acc):
        y = (u - mean) * inv
        o_ref[0, p * Hh:(p + 1) * Hh, :, :] = y.reshape(Hh, Wh, Co).astype(o_ref.dtype)


# ------------------------------ Python wrapper -------------------------------

def unet_innermost_forward(x_nchw, down_w, down_b, up_w, up_b=None,
                           compute_dtype=jnp.bfloat16):
    """Pallas forward of UnetSkipConnectionBlock(innermost=True, InstanceNorm2d).

    x_nchw : (B, Cin, H, W)
    down_w : (Ci, Cin, 4, 4)  PyTorch Conv2d weight,        down_b: (Ci,)
    up_w   : (Ci, Co, 4, 4)   PyTorch ConvTranspose2d weight, up_b: (Co,) -- unused
             in the kernel: a per-channel bias is exactly cancelled by the
             affine-less InstanceNorm that follows it.
    Returns (B, Cin + Co, H, W)  ==  torch.cat([x, model(x)], 1).
    """
    del up_b  # exactly cancelled by the InstanceNorm mean subtraction
    x_nchw = x_nchw.astype(jnp.float32)
    B, Cin, H, W = x_nchw.shape
    Ci = down_w.shape[0]
    Co = up_w.shape[1]
    if H % 16 or W % 16:
        raise ValueError("H and W must be multiples of 16 (sublane-aligned tiles)")
    Hh, Wh = H // 2, W // 2
    Hp, Wp = Hh + 1, Wh + 1

    x = jnp.transpose(x_nchw, (0, 2, 3, 1))                       # NHWC (C -> lanes)
    xp = jnp.pad(x, ((0, 0), (1, 1), (1, 1), (0, 0)))             # conv zero pad = 1
    # Polyphase (stride-2 parity) split stacked along the CHANNEL/lane axis:
    # pure re-arrangement, zero data inflation; enables 4 wide-K tap matmuls.
    xph = jnp.concatenate(
        [xp[:, py::2, px::2, :] for py in range(2) for px in range(2)],
        axis=-1).astype(compute_dtype)                            # (B, Hp, Wp, 4*Cin)

    # Down-conv weights grouped by 2x2 window offset q=(qy,qx); within each
    # group the 4 parity taps are concatenated along K in the same order as xph.
    wd_blocks = []
    for qy in range(2):
        for qx in range(2):
            parts = [jnp.transpose(down_w[:, :, 2 * qy + py, 2 * qx + px], (1, 0))
                     for py in range(2) for px in range(2)]
            wd_blocks.append(jnp.concatenate(parts, axis=0))      # (4*Cin, Ci)
    wd = jnp.stack(wd_blocks, axis=0).astype(compute_dtype)       # (4, 4*Cin, Ci)

    # Up (transposed) conv: per-tap matmul weights (t = ky*4 + kx).
    wu = jnp.transpose(up_w, (2, 3, 0, 1)).reshape(16, Ci, Co).astype(compute_dtype)
    bd = down_b.reshape(1, Ci).astype(jnp.float32)

    kernel = functools.partial(_unet_innermost_kernel, compute_dtype=compute_dtype)
    out_ph = pl.pallas_call(
        kernel,
        out_shape=jax.ShapeDtypeStruct((B, 4 * Hh, Wh, Co), jnp.float32),
        grid=(B,),
        in_specs=[
            pl.BlockSpec((1, Hp, Wp, 4 * Cin), lambda b: (b, 0, 0, 0)),
            pl.BlockSpec((4, 4 * Cin, Ci), lambda b: (0, 0, 0)),
            pl.BlockSpec((1, Ci), lambda b: (0, 0)),
            pl.BlockSpec((16, Ci, Co), lambda b: (0, 0, 0)),
        ],
        out_specs=pl.BlockSpec((1, 4 * Hh, Wh, Co), lambda b: (b, 0, 0, 0)),
        scratch_shapes=[pltpu.VMEM((Hh + 2, Wh + 2, Ci), jnp.float32)],
        compiler_params=pltpu.CompilerParams(
            dimension_semantics=("parallel",)),   # batch shards across v7x's 2 TCs
    )(xph, wd, bd, wu)

    # De-interleave the polyphase output back to (B, H, W, Co).
    h = out_ph.reshape(B, 2, 2, Hh, Wh, Co)
    h = jnp.transpose(h, (0, 3, 1, 4, 2, 5)).reshape(B, H, W, Co)
    h = jnp.transpose(h, (0, 3, 1, 2))                            # NCHW
    return jnp.concatenate([x_nchw, h], axis=1)                   # cat([x, model(x)])


# --------------------------- pure-JAX reference ------------------------------

def _reference(x, down_w, down_b, up_w, up_b):
    prec = jax.lax.Precision.HIGHEST
    h = jnp.where(x > 0, x, 0.2 * x)                              # LeakyReLU(0.2)
    h = jax.lax.conv_general_dilated(
        h, down_w, (2, 2), ((1, 1), (1, 1)),
        dimension_numbers=("NCHW", "OIHW", "NCHW"), precision=prec)
    h = h + down_b[None, :, None, None]
    h = jnp.maximum(h, 0.0)                                       # ReLU
    # ConvTranspose2d(k=4, s=2, p=1) == lhs-dilated conv with the flipped kernel.
    wt = jnp.transpose(jnp.flip(up_w, axis=(2, 3)), (1, 0, 2, 3))  # (Co, Ci, 4, 4)
    h = jax.lax.conv_general_dilated(
        h, wt, (1, 1), ((2, 2), (2, 2)), lhs_dilation=(2, 2),
        dimension_numbers=("NCHW", "OIHW", "NCHW"), precision=prec)
    h = h + up_b[None, :, None, None]
    mean = h.mean(axis=(2, 3), keepdims=True)                     # InstanceNorm2d
    var = ((h - mean) ** 2).mean(axis=(2, 3), keepdims=True)
    h = (h - mean) * jax.lax.rsqrt(var + EPS)
    return jnp.concatenate([x, h], axis=1)


# ----------------------------------- main ------------------------------------

if __name__ == "__main__":
    # Innermost block: input_nc = outer_nc = 4, inner_nc = 8, small spatial size.
    B, Cin, H, W = 2, 4, 16, 16
    inner_nc, outer_nc = 8, 4

    key = jax.random.PRNGKey(0)
    kx, kwd, kbd, kwu, kbu = jax.random.split(key, 5)
    x = jax.random.normal(kx, (B, Cin, H, W), dtype=jnp.float32)
    down_w = 0.1 * jax.random.normal(kwd, (inner_nc, Cin, 4, 4), jnp.float32)
    down_b = 0.1 * jax.random.normal(kbd, (inner_nc,), jnp.float32)
    up_w = 0.1 * jax.random.normal(kwu, (inner_nc, outer_nc, 4, 4), jnp.float32)
    up_b = 0.1 * jax.random.normal(kbu, (outer_nc,), jnp.float32)

    fwd = jax.jit(unet_innermost_forward, static_argnames=("compute_dtype",))
    ref = jax.block_until_ready(_reference(x, down_w, down_b, up_w, up_b))

    # Production path: bf16 MXU operands, f32 accumulation.
    # Tolerance budget: ~0.4% operand rounding amplified by InstanceNorm.
    out_bf16 = jax.block_until_ready(
        fwd(x, down_w, down_b, up_w, up_b, compute_dtype=jnp.bfloat16))
    np.testing.assert_allclose(np.asarray(out_bf16), np.asarray(ref),
                               rtol=5e-2, atol=5e-2)

    # f32 operand path (tolerance also covers MXU f32-emulation rounding).
    out_f32 = jax.block_until_ready(
        fwd(x, down_w, down_b, up_w, up_b, compute_dtype=jnp.float32))
    np.testing.assert_allclose(np.asarray(out_f32), np.asarray(ref),
                               rtol=2e-2, atol=2e-2)

    print("KERNEL_OK")
</pallas_src>

<mosaic_0001>
module attributes {stable_mosaic.version = 11 : i64} {
  func.func @_unet_innermost_kernel(%arg0: i32, %arg1: memref<1x9x9x16xbf16, #tpu.memory_space<vmem>>, %arg2: memref<4x16x8xbf16, #tpu.memory_space<vmem>>, %arg3: memref<1x8xf32, #tpu.memory_space<vmem>>, %arg4: memref<16x8x4xbf16, #tpu.memory_space<vmem>>, %arg5: memref<1x32x8x4xf32, #tpu.memory_space<vmem>>, %arg6: memref<10x10x8xf32, #tpu.memory_space<vmem>>) attributes {dimension_semantics = [#tpu.dimension_semantics<parallel>], iteration_bounds = array<i64: 2>, scalar_prefetch = 0 : i64, scratch_operands = 1 : i64, tpu.core_type = #tpu.core_type<tc>, window_params = [{transform_indices = @transform_0, window_bounds = array<i64: 1, 9, 9, 16>}, {pipeline_mode = #tpu.pipeline_mode<synchronous>, transform_indices = @transform_1, window_bounds = array<i64: 4, 16, 8>}, {pipeline_mode = #tpu.pipeline_mode<synchronous>, transform_indices = @transform_2, window_bounds = array<i64: 1, 8>}, {pipeline_mode = #tpu.pipeline_mode<synchronous>, transform_indices = @transform_3, window_bounds = array<i64: 16, 8, 4>}, {transform_indices = @transform_4, window_bounds = array<i64: 1, 32, 8, 4>}]} {
    %c0 = arith.constant 0 : index
    %c0_0 = arith.constant 0 : index
    %c0_1 = arith.constant 0 : index
    %c0_2 = arith.constant 0 : index
    %0 = vector.load %arg1[%c0, %c0_0, %c0_1, %c0_2] : memref<1x9x9x16xbf16, #tpu.memory_space<vmem>>, vector<1x9x9x16xbf16>
    %1 = vector.shape_cast %0 : vector<1x9x9x16xbf16> to vector<9x9x16xbf16>
    %2 = arith.extf %1 : vector<9x9x16xbf16> to vector<9x9x16xf32>
    %cst = arith.constant 0.000000e+00 : f32
    %3 = vector.broadcast %cst : f32 to vector<9x9x16xf32>
    %4 = arith.cmpf ogt, %2, %3 : vector<9x9x16xf32>
    %cst_3 = arith.constant 2.000000e-01 : f32
    %5 = vector.broadcast %cst_3 : f32 to vector<9x9x16xf32>
    %6 = arith.mulf %5, %2 : vector<9x9x16xf32>
    %7 = arith.select %4, %2, %6 : vector<9x9x16xi1>, vector<9x9x16xf32>
    %cst_4 = arith.constant 0.000000e+00 : f32
    %8 = vector.broadcast %cst_4 : f32 to vector<64x8xf32>
    %9 = vector.extract_strided_slice %7 {offsets = [0, 0, 0], sizes = [8, 8, 16], strides = [1, 1, 1]} : vector<9x9x16xf32> to vector<8x8x16xf32>
    %10 = vector.shape_cast %9 : vector<8x8x16xf32> to vector<64x16xf32>
    %11 = arith.truncf %10 : vector<64x16xf32> to vector<64x16xbf16>
    %c0_5 = arith.constant 0 : index
    %c0_6 = arith.constant 0 : index
    %c0_7 = arith.constant 0 : index
    %12 = vector.load %arg2[%c0_5, %c0_6, %c0_7] : memref<4x16x8xbf16, #tpu.memory_space<vmem>>, vector<1x16x8xbf16>
    %13 = vector.shape_cast %12 : vector<1x16x8xbf16> to vector<16x8xbf16>
    %cst_8 = arith.constant dense<0.000000e+00> : vector<64x8xf32>
    %14 = tpu.matmul %11, %13, %cst_8 {dimension_numbers = #tpu.dot_dimension_numbers<[1], [0], [0], [1], [0, 0, 1, 1], [], []>} : vector<64x16xbf16>, vector<16x8xbf16>, vector<64x8xf32> -> vector<64x8xf32>
    %15 = arith.addf %8, %14 : vector<64x8xf32>
    %16 = vector.extract_strided_slice %7 {offsets = [0, 1, 0], sizes = [8, 8, 16], strides = [1, 1, 1]} : vector<9x9x16xf32> to vector<8x8x16xf32>
    %17 = vector.shape_cast %16 : vector<8x8x16xf32> to vector<64x16xf32>
    %18 = arith.truncf %17 : vector<64x16xf32> to vector<64x16xbf16>
    %c1 = arith.constant 1 : index
    %c0_9 = arith.constant 0 : index
    %c0_10 = arith.constant 0 : index
    %19 = vector.load %arg2[%c1, %c0_9, %c0_10] : memref<4x16x8xbf16, #tpu.memory_space<vmem>>, vector<1x16x8xbf16>
    %20 = vector.shape_cast %19 : vector<1x16x8xbf16> to vector<16x8xbf16>
    %cst_11 = arith.constant dense<0.000000e+00> : vector<64x8xf32>
    %21 = tpu.matmul %18, %20, %cst_11 {dimension_numbers = #tpu.dot_dimension_numbers<[1], [0], [0], [1], [0, 0, 1, 1], [], []>} : vector<64x16xbf16>, vector<16x8xbf16>, vector<64x8xf32> -> vector<64x8xf32>
    %22 = arith.addf %15, %21 : vector<64x8xf32>
    %23 = vector.extract_strided_slice %7 {offsets = [1, 0, 0], sizes = [8, 8, 16], strides = [1, 1, 1]} : vector<9x9x16xf32> to vector<8x8x16xf32>
    %24 = vector.shape_cast %23 : vector<8x8x16xf32> to vector<64x16xf32>
    %25 = arith.truncf %24 : vector<64x16xf32> to vector<64x16xbf16>
    %c2 = arith.constant 2 : index
    %c0_12 = arith.constant 0 : index
    %c0_13 = arith.constant 0 : index
    %26 = vector.load %arg2[%c2, %c0_12, %c0_13] : memref<4x16x8xbf16, #tpu.memory_space<vmem>>, vector<1x16x8xbf16>
    %27 = vector.shape_cast %26 : vector<1x16x8xbf16> to vector<16x8xbf16>
    %cst_14 = arith.constant dense<0.000000e+00> : vector<64x8xf32>
    %28 = tpu.matmul %25, %27, %cst_14 {dimension_numbers = #tpu.dot_dimension_numbers<[1], [0], [0], [1], [0, 0, 1, 1], [], []>} : vector<64x16xbf16>, vector<16x8xbf16>, vector<64x8xf32> -> vector<64x8xf32>
    %29 = arith.addf %22, %28 : vector<64x8xf32>
    %30 = vector.extract_strided_slice %7 {offsets = [1, 1, 0], sizes = [8, 8, 16], strides = [1, 1, 1]} : vector<9x9x16xf32> to vector<8x8x16xf32>
    %31 = vector.shape_cast %30 : vector<8x8x16xf32> to vector<64x16xf32>
    %32 = arith.truncf %31 : vector<64x16xf32> to vector<64x16xbf16>
    %c3 = arith.constant 3 : index
    %c0_15 = arith.constant 0 : index
    %c0_16 = arith.constant 0 : index
    %33 = vector.load %arg2[%c3, %c0_15, %c0_16] : memref<4x16x8xbf16, #tpu.memory_space<vmem>>, vector<1x16x8xbf16>
    %34 = vector.shape_cast %33 : vector<1x16x8xbf16> to vector<16x8xbf16>
    %cst_17 = arith.constant dense<0.000000e+00> : vector<64x8xf32>
    %35 = tpu.matmul %32, %34, %cst_17 {dimension_numbers = #tpu.dot_dimension_numbers<[1], [0], [0], [1], [0, 0, 1, 1], [], []>} : vector<64x16xbf16>, vector<16x8xbf16>, vector<64x8xf32> -> vector<64x8xf32>
    %36 = arith.addf %29, %35 : vector<64x8xf32>
    %c0_18 = arith.constant 0 : index
    %c0_19 = arith.constant 0 : index
    %37 = vector.load %arg3[%c0_18, %c0_19] : memref<1x8xf32, #tpu.memory_space<vmem>>, vector<1x8xf32>
    %38 = vector.broadcast %37 : vector<1x8xf32> to vector<64x8xf32>
    %39 = arith.addf %36, %38 : vector<64x8xf32>
    %cst_20 = arith.constant 0.000000e+00 : f32
    %40 = vector.broadcast %cst_20 : f32 to vector<64x8xf32>
    %41 = arith.maximumf %39, %40 : vector<64x8xf32>
    %cst_21 = arith.constant 0.000000e+00 : f32
    %42 = vector.broadcast %cst_21 : f32 to vector<10x10x8xf32>
    %c0_22 = arith.constant 0 : index
    %c0_23 = arith.constant 0 : index
    %c0_24 = arith.constant 0 : index
    %43 = vector.load %arg6[%c0_22, %c0_23, %c0_24] : memref<10x10x8xf32, #tpu.memory_space<vmem>>, vector<10x10x8xf32>
    tpu.vector_store %arg6[%c0_22, %c0_23, %c0_24], %42 {strides = array<i32>} : memref<10x10x8xf32, #tpu.memory_space<vmem>>, vector<10x10x8xf32>,
    %44 = vector.shape_cast %41 : vector<64x8xf32> to vector<8x8x8xf32>
    %c1_25 = arith.constant 1 : index
    %c1_26 = arith.constant 1 : index
    %c0_27 = arith.constant 0 : index
    %45 = vector.load %arg6[%c1_25, %c1_26, %c0_27] : memref<10x10x8xf32, #tpu.memory_space<vmem>>, vector<8x8x8xf32>
    tpu.vector_store %arg6[%c1_25, %c1_26, %c0_27], %44 {strides = array<i32>} : memref<10x10x8xf32, #tpu.memory_space<vmem>>, vector<8x8x8xf32>,
    %cst_28 = arith.constant 0.000000e+00 : f32
    %46 = vector.broadcast %cst_28 : f32 to vector<64x4xf32>
    %c1_29 = arith.constant 1 : index
    %c1_30 = arith.constant 1 : index
    %c0_31 = arith.constant 0 : index
    %47 = vector.load %arg6[%c1_29, %c1_30, %c0_31] : memref<10x10x8xf32, #tpu.memory_space<vmem>>, vector<8x8x8xf32>
    %48 = vector.shape_cast %47 : vector<8x8x8xf32> to vector<64x8xf32>
    %49 = arith.truncf %48 : vector<64x8xf32> to vector<64x8xbf16>
    %c5 = arith.constant 5 : index
    %c0_32 = arith.constant 0 : index
    %c0_33 = arith.constant 0 : index
    %50 = vector.load %arg4[%c5, %c0_32, %c0_33] : memref<16x8x4xbf16, #tpu.memory_space<vmem>>, vector<1x8x4xbf16>
    %51 = vector.shape_cast %50 : vector<1x8x4xbf16> to vector<8x4xbf16>
    %cst_34 = arith.constant dense<0.000000e+00> : vector<64x4xf32>
    %52 = tpu.matmul %49, %51, %cst_34 {dimension_numbers = #tpu.dot_dimension_numbers<[1], [0], [0], [1], [0, 0, 1, 1], [], []>} : vector<64x8xbf16>, vector<8x4xbf16>, vector<64x4xf32> -> vector<64x4xf32>
    %53 = arith.addf %46, %52 : vector<64x4xf32>
    %c1_35 = arith.constant 1 : index
    %c0_36 = arith.constant 0 : index
    %c0_37 = arith.constant 0 : index
    %54 = vector.load %arg6[%c1_35, %c0_36, %c0_37] : memref<10x10x8xf32, #tpu.memory_space<vmem>>, vector<8x8x8xf32>
    %55 = vector.shape_cast %54 : vector<8x8x8xf32> to vector<64x8xf32>
    %56 = arith.truncf %55 : vector<64x8xf32> to vector<64x8xbf16>
    %c7 = arith.constant 7 : index
    %c0_38 = arith.constant 0 : index
    %c0_39 = arith.constant 0 : index
    %57 = vector.load %arg4[%c7, %c0_38, %c0_39] : memref<16x8x4xbf16, #tpu.memory_space<vmem>>, vector<1x8x4xbf16>
    %58 = vector.shape_cast %57 : vector<1x8x4xbf16> to vector<8x4xbf16>
    %cst_40 = arith.constant dense<0.000000e+00> : vector<64x4xf32>
    %59 = tpu.matmul %56, %58, %cst_40 {dimension_numbers = #tpu.dot_dimension_numbers<[1], [0], [0], [1], [0, 0, 1, 1], [], []>} : vector<64x8xbf16>, vector<8x4xbf16>, vector<64x4xf32> -> vector<64x4xf32>
    %60 = arith.addf %53, %59 : vector<64x4xf32>
    %c0_41 = arith.constant 0 : index
    %c1_42 = arith.constant 1 : index
    %c0_43 = arith.constant 0 : index
    %61 = vector.load %arg6[%c0_41, %c1_42, %c0_43] : memref<10x10x8xf32, #tpu.memory_space<vmem>>, vector<8x8x8xf32>
    %62 = vector.shape_cast %61 : vector<8x8x8xf32> to vector<64x8xf32>
    %63 = arith.truncf %62 : vector<64x8xf32> to vector<64x8xbf16>
    %c13 = arith.constant 13 : index
    %c0_44 = arith.constant 0 : index
    %c0_45 = arith.constant 0 : index
    %64 = vector.load %arg4[%c13, %c0_44, %c0_45] : memref<16x8x4xbf16, #tpu.memory_space<vmem>>, vector<1x8x4xbf16>
    %65 = vector.shape_cast %64 : vector<1x8x4xbf16> to vector<8x4xbf16>
    %cst_46 = arith.constant dense<0.000000e+00> : vector<64x4xf32>
    %66 = tpu.matmul %63, %65, %cst_46 {dimension_numbers = #tpu.dot_dimension_numbers<[1], [0], [0], [1], [0, 0, 1, 1], [], []>} : vector<64x8xbf16>, vector<8x4xbf16>, vector<64x4xf32> -> vector<64x4xf32>
    %67 = arith.addf %60, %66 : vector<64x4xf32>
    %c0_47 = arith.constant 0 : index
    %c0_48 = arith.constant 0 : index
    %c0_49 = arith.constant 0 : index
    %68 = vector.load %arg6[%c0_47, %c0_48, %c0_49] : memref<10x10x8xf32, #tpu.memory_space<vmem>>, vector<8x8x8xf32>
    %69 = vector.shape_cast %68 : vector<8x8x8xf32> to vector<64x8xf32>
    %70 = arith.truncf %69 : vector<64x8xf32> to vector<64x8xbf16>
    %c15 = arith.constant 15 : index
    %c0_50 = arith.constant 0 : index
    %c0_51 = arith.constant 0 : index
    %71 = vector.load %arg4[%c15, %c0_50, %c0_51] : memref<16x8x4xbf16, #tpu.memory_space<vmem>>, vector<1x8x4xbf16>
    %72 = vector.shape_cast %71 : vector<1x8x4xbf16> to vector<8x4xbf16>
    %cst_52 = arith.constant dense<0.000000e+00> : vector<64x4xf32>
    %73 = tpu.matmul %70, %72, %cst_52 {dimension_numbers = #tpu.dot_dimension_numbers<[1], [0], [0], [1], [0, 0, 1, 1], [], []>} : vector<64x8xbf16>, vector<8x4xbf16>, vector<64x4xf32> -> vector<64x4xf32>
    %74 = arith.addf %67, %73 : vector<64x4xf32>
    %cst_53 = arith.constant 0.000000e+00 : f32
    %75 = vector.broadcast %cst_53 : f32 to vector<64x4xf32>
    %c1_54 = arith.constant 1 : index
    %c2_55 = arith.constant 2 : index
    %c0_56 = arith.constant 0 : index
    %76 = vector.load %arg6[%c1_54, %c2_55, %c0_56] : memref<10x10x8xf32, #tpu.memory_space<vmem>>, vector<8x8x8xf32>
    %77 = vector.shape_cast %76 : vector<8x8x8xf32> to vector<64x8xf32>
    %78 = arith.truncf %77 : vector<64x8xf32> to vector<64x8xbf16>
    %c4 = arith.constant 4 : index
    %c0_57 = arith.constant 0 : index
    %c0_58 = arith.constant 0 : index
    %79 = vector.load %arg4[%c4, %c0_57, %c0_58] : memref<16x8x4xbf16, #tpu.memory_space<vmem>>, vector<1x8x4xbf16>
    %80 = vector.shape_cast %79 : vector<1x8x4xbf16> to vector<8x4xbf16>
    %cst_59 = arith.constant dense<0.000000e+00> : vector<64x4xf32>
    %81 = tpu.matmul %78, %80, %cst_59 {dimension_numbers = #tpu.dot_dimension_numbers<[1], [0], [0], [1], [0, 0, 1, 1], [], []>} : vector<64x8xbf16>, vector<8x4xbf16>, vector<64x4xf32> -> vector<64x4xf32>
    %82 = arith.addf %75, %81 : vector<64x4xf32>
    %c1_60 = arith.constant 1 : index
    %c1_61 = arith.constant 1 : index
    %c0_62 = arith.constant 0 : index
    %83 = vector.load %arg6[%c1_60, %c1_61, %c0_62] : memref<10x10x8xf32, #tpu.memory_space<vmem>>, vector<8x8x8xf32>
    %84 = vector.shape_cast %83 : vector<8x8x8xf32> to vector<64x8xf32>
    %85 = arith.truncf %84 : vector<64x8xf32> to vector<64x8xbf16>
    %c6 = arith.constant 6 : index
    %c0_63 = arith.constant 0 : index
    %c0_64 = arith.constant 0 : index
    %86 = vector.load %arg4[%c6, %c0_63, %c0_64] : memref<16x8x4xbf16, #tpu.memory_space<vmem>>, vector<1x8x4xbf16>
    %87 = vector.shape_cast %86 : vector<1x8x4xbf16> to vector<8x4xbf16>
    %cst_65 = arith.constant dense<0.000000e+00> : vector<64x4xf32>
    %88 = tpu.matmul %85, %87, %cst_65 {dimension_numbers = #tpu.dot_dimension_numbers<[1], [0], [0], [1], [0, 0, 1, 1], [], []>} : vector<64x8xbf16>, vector<8x4xbf16>, vector<64x4xf32> -> vector<64x4xf32>
    %89 = arith.addf %82, %88 : vector<64x4xf32>
    %c0_66 = arith.constant 0 : index
    %c2_67 = arith.constant 2 : index
    %c0_68 = arith.constant 0 : index
    %90 = vector.load %arg6[%c0_66, %c2_67, %c0_68] : memref<10x10x8xf32, #tpu.memory_space<vmem>>, vector<8x8x8xf32>
    %91 = vector.shape_cast %90 : vector<8x8x8xf32> to vector<64x8xf32>
    %92 = arith.truncf %91 : vector<64x8xf32> to vector<64x8xbf16>
    %c12 = arith.constant 12 : index
    %c0_69 = arith.constant 0 : index
    %c0_70 = arith.constant 0 : index
    %93 = vector.load %arg4[%c12, %c0_69, %c0_70] : memref<16x8x4xbf16, #tpu.memory_space<vmem>>, vector<1x8x4xbf16>
    %94 = vector.shape_cast %93 : vector<1x8x4xbf16> to vector<8x4xbf16>
    %cst_71 = arith.constant dense<0.000000e+00> : vector<64x4xf32>
    %95 = tpu.matmul %92, %94, %cst_71 {dimension_numbers = #tpu.dot_dimension_numbers<[1], [0], [0], [1], [0, 0, 1, 1], [], []>} : vector<64x8xbf16>, vector<8x4xbf16>, vector<64x4xf32> -> vector<64x4xf32>
    %96 = arith.addf %89, %95 : vector<64x4xf32>
    %c0_72 = arith.constant 0 : index
    %c1_73 = arith.constant 1 : index
    %c0_74 = arith.constant 0 : index
    %97 = vector.load %arg6[%c0_72, %c1_73, %c0_74] : memref<10x10x8xf32, #tpu.memory_space<vmem>>, vector<8x8x8xf32>
    %98 = vector.shape_cast %97 : vector<8x8x8xf32> to vector<64x8xf32>
    %99 = arith.truncf %98 : vector<64x8xf32> to vector<64x8xbf16>
    %c14 = arith.constant 14 : index
    %c0_75 = arith.constant 0 : index
    %c0_76 = arith.constant 0 : index
    %100 = vector.load %arg4[%c14, %c0_75, %c0_76] : memref<16x8x4xbf16, #tpu.memory_space<vmem>>, vector<1x8x4xbf16>
    %101 = vector.shape_cast %100 : vector<1x8x4xbf16> to vector<8x4xbf16>
    %cst_77 = arith.constant dense<0.000000e+00> : vector<64x4xf32>
    %102 = tpu.matmul %99, %101, %cst_77 {dimension_numbers = #tpu.dot_dimension_numbers<[1], [0], [0], [1], [0, 0, 1, 1], [], []>} : vector<64x8xbf16>, vector<8x4xbf16>, vector<64x4xf32> -> vector<64x4xf32>
    %103 = arith.addf %96, %102 : vector<64x4xf32>
    %cst_78 = arith.constant 0.000000e+00 : f32
    %104 = vector.broadcast %cst_78 : f32 to vector<64x4xf32>
    %c2_79 = arith.constant 2 : index
    %c1_80 = arith.constant 1 : index
    %c0_81 = arith.constant 0 : index
    %105 = vector.load %arg6[%c2_79, %c1_80, %c0_81] : memref<10x10x8xf32, #tpu.memory_space<vmem>>, vector<8x8x8xf32>
    %106 = vector.shape_cast %105 : vector<8x8x8xf32> to vector<64x8xf32>
    %107 = arith.truncf %106 : vector<64x8xf32> to vector<64x8xbf16>
    %c1_82 = arith.constant 1 : index
    %c0_83 = arith.constant 0 : index
    %c0_84 = arith.constant 0 : index
    %108 = vector.load %arg4[%c1_82, %c0_83, %c0_84] : memref<16x8x4xbf16, #tpu.memory_space<vmem>>, vector<1x8x4xbf16>
    %109 = vector.shape_cast %108 : vector<1x8x4xbf16> to vector<8x4xbf16>
    %cst_85 = arith.constant dense<0.000000e+00> : vector<64x4xf32>
    %110 = tpu.matmul %107, %109, %cst_85 {dimension_numbers = #tpu.dot_dimension_numbers<[1], [0], [0], [1], [0, 0, 1, 1], [], []>} : vector<64x8xbf16>, vector<8x4xbf16>, vector<64x4xf32> -> vector<64x4xf32>
    %111 = arith.addf %104, %110 : vector<64x4xf32>
    %c2_86 = arith.constant 2 : index
    %c0_87 = arith.constant 0 : index
    %c0_88 = arith.constant 0 : index
    %112 = vector.load %arg6[%c2_86, %c0_87, %c0_88] : memref<10x10x8xf32, #tpu.memory_space<vmem>>, vector<8x8x8xf32>
    %113 = vector.shape_cast %112 : vector<8x8x8xf32> to vector<64x8xf32>
    %114 = arith.truncf %113 : vector<64x8xf32> to vector<64x8xbf16>
    %c3_89 = arith.constant 3 : index
    %c0_90 = arith.constant 0 : index
    %c0_91 = arith.constant 0 : index
    %115 = vector.load %arg4[%c3_89, %c0_90, %c0_91] : memref<16x8x4xbf16, #tpu.memory_space<vmem>>, vector<1x8x4xbf16>
    %116 = vector.shape_cast %115 : vector<1x8x4xbf16> to vector<8x4xbf16>
    %cst_92 = arith.constant dense<0.000000e+00> : vector<64x4xf32>
    %117 = tpu.matmul %114, %116, %cst_92 {dimension_numbers = #tpu.dot_dimension_numbers<[1], [0], [0], [1], [0, 0, 1, 1], [], []>} : vector<64x8xbf16>, vector<8x4xbf16>, vector<64x4xf32> -> vector<64x4xf32>
    %118 = arith.addf %111, %117 : vector<64x4xf32>
    %c1_93 = arith.constant 1 : index
    %c1_94 = arith.constant 1 : index
    %c0_95 = arith.constant 0 : index
    %119 = vector.load %arg6[%c1_93, %c1_94, %c0_95] : memref<10x10x8xf32, #tpu.memory_space<vmem>>, vector<8x8x8xf32>
    %120 = vector.shape_cast %119 : vector<8x8x8xf32> to vector<64x8xf32>
    %121 = arith.truncf %120 : vector<64x8xf32> to vector<64x8xbf16>
    %c9 = arith.constant 9 : index
    %c0_96 = arith.constant 0 : index
    %c0_97 = arith.constant 0 : index
    %122 = vector.load %arg4[%c9, %c0_96, %c0_97] : memref<16x8x4xbf16, #tpu.memory_space<vmem>>, vector<1x8x4xbf16>
    %123 = vector.shape_cast %122 : vector<1x8x4xbf16> to vector<8x4xbf16>
    %cst_98 = arith.constant dense<0.000000e+00> : vector<64x4xf32>
    %124 = tpu.matmul %121, %123, %cst_98 {dimension_numbers = #tpu.dot_dimension_numbers<[1], [0], [0], [1], [0, 0, 1, 1], [], []>} : vector<64x8xbf16>, vector<8x4xbf16>, vector<64x4xf32> -> vector<64x4xf32>
    %125 = arith.addf %118, %124 : vector<64x4xf32>
    %c1_99 = arith.constant 1 : index
    %c0_100 = arith.constant 0 : index
    %c0_101 = arith.constant 0 : index
    %126 = vector.load %arg6[%c1_99, %c0_100, %c0_101] : memref<10x10x8xf32, #tpu.memory_space<vmem>>, vector<8x8x8xf32>
    %127 = vector.shape_cast %126 : vector<8x8x8xf32> to vector<64x8xf32>
    %128 = arith.truncf %127 : vector<64x8xf32> to vector<64x8xbf16>
    %c11 = arith.constant 11 : index
    %c0_102 = arith.constant 0 : index
    %c0_103 = arith.constant 0 : index
    %129 = vector.load %arg4[%c11, %c0_102, %c0_103] : memref<16x8x4xbf16, #tpu.memory_space<vmem>>, vector<1x8x4xbf16>
    %130 = vector.shape_cast %129 : vector<1x8x4xbf16> to vector<8x4xbf16>
    %cst_104 = arith.constant dense<0.000000e+00> : vector<64x4xf32>
    %131 = tpu.matmul %128, %130, %cst_104 {dimension_numbers = #tpu.dot_dimension_numbers<[1], [0], [0], [1], [0, 0, 1, 1], [], []>} : vector<64x8xbf16>, vector<8x4xbf16>, vector<64x4xf32> -> vector<64x4xf32>
    %132 = arith.addf %125, %131 : vector<64x4xf32>
    %cst_105 = arith.constant 0.000000e+00 : f32
    %133 = vector.broadcast %cst_105 : f32 to vector<64x4xf32>
    %c2_106 = arith.constant 2 : index
    %c2_107 = arith.constant 2 : index
    %c0_108 = arith.constant 0 : index
    %134 = vector.load %arg6[%c2_106, %c2_107, %c0_108] : memref<10x10x8xf32, #tpu.memory_space<vmem>>, vector<8x8x8xf32>
    %135 = vector.shape_cast %134 : vector<8x8x8xf32> to vector<64x8xf32>
    %136 = arith.truncf %135 : vector<64x8xf32> to vector<64x8xbf16>
    %c0_109 = arith.constant 0 : index
    %c0_110 = arith.constant 0 : index
    %c0_111 = arith.constant 0 : index
    %137 = vector.load %arg4[%c0_109, %c0_110, %c0_111] : memref<16x8x4xbf16, #tpu.memory_space<vmem>>, vector<1x8x4xbf16>
    %138 = vector.shape_cast %137 : vector<1x8x4xbf16> to vector<8x4xbf16>
    %cst_112 = arith.constant dense<0.000000e+00> : vector<64x4xf32>
    %139 = tpu.matmul %136, %138, %cst_112 {dimension_numbers = #tpu.dot_dimension_numbers<[1], [0], [0], [1], [0, 0, 1, 1], [], []>} : vector<64x8xbf16>, vector<8x4xbf16>, vector<64x4xf32> -> vector<64x4xf32>
    %140 = arith.addf %133, %139 : vector<64x4xf32>
    %c2_113 = arith.constant 2 : index
    %c1_114 = arith.constant 1 : index
    %c0_115 = arith.constant 0 : index
    %141 = vector.load %arg6[%c2_113, %c1_114, %c0_115] : memref<10x10x8xf32, #tpu.memory_space<vmem>>, vector<8x8x8xf32>
    %142 = vector.shape_cast %141 : vector<8x8x8xf32> to vector<64x8xf32>
    %143 = arith.truncf %142 : vector<64x8xf32> to vector<64x8xbf16>
    %c2_116 = arith.constant 2 : index
    %c0_117 = arith.constant 0 : index
    %c0_118 = arith.constant 0 : index
    %144 = vector.load %arg4[%c2_116, %c0_117, %c0_118] : memref<16x8x4xbf16, #tpu.memory_space<vmem>>, vector<1x8x4xbf16>
    %145 = vector.shape_cast %144 : vector<1x8x4xbf16> to vector<8x4xbf16>
    %cst_119 = arith.constant dense<0.000000e+00> : vector<64x4xf32>
    %146 = tpu.matmul %143, %145, %cst_119 {dimension_numbers = #tpu.dot_dimension_numbers<[1], [0], [0], [1], [0, 0, 1, 1], [], []>} : vector<64x8xbf16>, vector<8x4xbf16>, vector<64x4xf32> -> vector<64x4xf32>
    %147 = arith.addf %140, %146 : vector<64x4xf32>
    %c1_120 = arith.constant 1 : index
    %c2_121 = arith.constant 2 : index
    %c0_122 = arith.constant 0 : index
    %148 = vector.load %arg6[%c1_120, %c2_121, %c0_122] : memref<10x10x8xf32, #tpu.memory_space<vmem>>, vector<8x8x8xf32>
    %149 = vector.shape_cast %148 : vector<8x8x8xf32> to vector<64x8xf32>
    %150 = arith.truncf %149 : vector<64x8xf32> to vector<64x8xbf16>
    %c8 = arith.constant 8 : index
    %c0_123 = arith.constant 0 : index
    %c0_124 = arith.constant 0 : index
    %151 = vector.load %arg4[%c8, %c0_123, %c0_124] : memref<16x8x4xbf16, #tpu.memory_space<vmem>>, vector<1x8x4xbf16>
    %152 = vector.shape_cast %151 : vector<1x8x4xbf16> to vector<8x4xbf16>
    %cst_125 = arith.constant dense<0.000000e+00> : vector<64x4xf32>
    %153 = tpu.matmul %150, %152, %cst_125 {dimension_numbers = #tpu.dot_dimension_numbers<[1], [0], [0], [1], [0, 0, 1, 1], [], []>} : vector<64x8xbf16>, vector<8x4xbf16>, vector<64x4xf32> -> vector<64x4xf32>
    %154 = arith.addf %147, %153 : vector<64x4xf32>
    %c1_126 = arith.constant 1 : index
    %c1_127 = arith.constant 1 : index
    %c0_128 = arith.constant 0 : index
    %155 = vector.load %arg6[%c1_126, %c1_127, %c0_128] : memref<10x10x8xf32, #tpu.memory_space<vmem>>, vector<8x8x8xf32>
    %156 = vector.shape_cast %155 : vector<8x8x8xf32> to vector<64x8xf32>
    %157 = arith.truncf %156 : vector<64x8xf32> to vector<64x8xbf16>
    %c10 = arith.constant 10 : index
    %c0_129 = arith.constant 0 : index
    %c0_130 = arith.constant 0 : index
    %158 = vector.load %arg4[%c10, %c0_129, %c0_130] : memref<16x8x4xbf16, #tpu.memory_space<vmem>>, vector<1x8x4xbf16>
    %159 = vector.shape_cast %158 : vector<1x8x4xbf16> to vector<8x4xbf16>
    %cst_131 = arith.constant dense<0.000000e+00> : vector<64x4xf32>
    %160 = tpu.matmul %157, %159, %cst_131 {dimension_numbers = #tpu.dot_dimension_numbers<[1], [0], [0], [1], [0, 0, 1, 1], [], []>} : vector<64x8xbf16>, vector<8x4xbf16>, vector<64x4xf32> -> vector<64x4xf32>
    %161 = arith.addf %154, %160 : vector<64x4xf32>
    %cst_132 = arith.constant dense<0.000000e+00> : vector<4xf32>
    %162 = vector.multi_reduction <add>, %74, %cst_132 [0] : vector<64x4xf32> to vector<4xf32>
    %163 = vector.shape_cast %162 : vector<4xf32> to vector<1x4xf32>
    %164 = arith.mulf %74, %74 : vector<64x4xf32>
    %cst_133 = arith.constant dense<0.000000e+00> : vector<4xf32>
    %165 = vector.multi_reduction <add>, %164, %cst_133 [0] : vector<64x4xf32> to vector<4xf32>
    %166 = vector.shape_cast %165 : vector<4xf32> to vector<1x4xf32>
    %cst_134 = arith.constant dense<0.000000e+00> : vector<4xf32>
    %167 = vector.multi_reduction <add>, %103, %cst_134 [0] : vector<64x4xf32> to vector<4xf32>
    %168 = vector.shape_cast %167 : vector<4xf32> to vector<1x4xf32>
    %169 = arith.addf %163, %168 : vector<1x4xf32>
    %170 = arith.mulf %103, %103 : vector<64x4xf32>
    %cst_135 = arith.constant dense<0.000000e+00> : vector<4xf32>
    %171 = vector.multi_reduction <add>, %170, %cst_135 [0] : vector<64x4xf32> to vector<4xf32>
    %172 = vector.shape_cast %171 : vector<4xf32> to vector<1x4xf32>
    %173 = arith.addf %166, %172 : vector<1x4xf32>
    %cst_136 = arith.constant dense<0.000000e+00> : vector<4xf32>
    %174 = vector.multi_reduction <add>, %132, %cst_136 [0] : vector<64x4xf32> to vector<4xf32>
    %175 = vector.shape_cast %174 : vector<4xf32> to vector<1x4xf32>
    %176 = arith.addf %169, %175 : vector<1x4xf32>
    %177 = arith.mulf %132, %132 : vector<64x4xf32>
    %cst_137 = arith.constant dense<0.000000e+00> : vector<4xf32>
    %178 = vector.multi_reduction <add>, %177, %cst_137 [0] : vector<64x4xf32> to vector<4xf32>
    %179 = vector.shape_cast %178 : vector<4xf32> to vector<1x4xf32>
    %180 = arith.addf %173, %179 : vector<1x4xf32>
    %cst_138 = arith.constant dense<0.000000e+00> : vector<4xf32>
    %181 = vector.multi_reduction <add>, %161, %cst_138 [0] : vector<64x4xf32> to vector<4xf32>
    %182 = vector.shape_cast %181 : vector<4xf32> to vector<1x4xf32>
    %183 = arith.addf %176, %182 : vector<1x4xf32>
    %184 = arith.mulf %161, %161 : vector<64x4xf32>
    %cst_139 = arith.constant dense<0.000000e+00> : vector<4xf32>
    %185 = vector.multi_reduction <add>, %184, %cst_139 [0] : vector<64x4xf32> to vector<4xf32>
    %186 = vector.shape_cast %185 : vector<4xf32> to vector<1x4xf32>
    %187 = arith.addf %180, %186 : vector<1x4xf32>
    %cst_140 = arith.constant 2.560000e+02 : f32
    %188 = vector.broadcast %cst_140 : f32 to vector<1x4xf32>
    %189 = arith.divf %183, %188 : vector<1x4xf32>
    %cst_141 = arith.constant 2.560000e+02 : f32
    %190 = vector.broadcast %cst_141 : f32 to vector<1x4xf32>
    %191 = arith.divf %187, %190 : vector<1x4xf32>
    %192 = arith.mulf %189, %189 : vector<1x4xf32>
    %193 = arith.subf %191, %192 : vector<1x4xf32>
    %cst_142 = arith.constant 9.99999974E-6 : f32
    %194 = vector.broadcast %cst_142 : f32 to vector<1x4xf32>
    %195 = arith.addf %193, %194 : vector<1x4xf32>
    %196 = math.rsqrt %195 : vector<1x4xf32>
    %197 = vector.broadcast %189 : vector<1x4xf32> to vector<64x4xf32>
    %198 = arith.subf %74, %197 : vector<64x4xf32>
    %199 = vector.broadcast %196 : vector<1x4xf32> to vector<64x4xf32>
    %200 = arith.mulf %198, %199 : vector<64x4xf32>
    %201 = vector.shape_cast %200 : vector<64x4xf32> to vector<8x8x4xf32>
    %c0_143 = arith.constant 0 : index
    %c0_144 = arith.constant 0 : index
    %c0_145 = arith.constant 0 : index
    %c0_146 = arith.constant 0 : index
    %202 = vector.load %arg5[%c0_143, %c0_144, %c0_145, %c0_146] : memref<1x32x8x4xf32, #tpu.memory_space<vmem>>, vector<1x8x8x4xf32>
    %203 = vector.shape_cast %202 : vector<1x8x8x4xf32> to vector<8x8x4xf32>
    %204 = vector.shape_cast %201 : vector<8x8x4xf32> to vector<1x8x8x4xf32>
    tpu.vector_store %arg5[%c0_143, %c0_144, %c0_145, %c0_146], %204 {strides = array<i32>} : memref<1x32x8x4xf32, #tpu.memory_space<vmem>>, vector<1x8x8x4xf32>,
    %205 = vector.broadcast %189 : vector<1x4xf32> to vector<64x4xf32>
    %206 = arith.subf %103, %205 : vector<64x4xf32>
    %207 = vector.broadcast %196 : vector<1x4xf32> to vector<64x4xf32>
    %208 = arith.mulf %206, %207 : vector<64x4xf32>
    %209 = vector.shape_cast %208 : vector<64x4xf32> to vector<8x8x4xf32>
    %c0_147 = arith.constant 0 : index
    %c8_148 = arith.constant 8 : index
    %c0_149 = arith.constant 0 : index
    %c0_150 = arith.constant 0 : index
    %210 = vector.load %arg5[%c0_147, %c8_148, %c0_149, %c0_150] : memref<1x32x8x4xf32, #tpu.memory_space<vmem>>, vector<1x8x8x4xf32>
    %211 = vector.shape_cast %210 : vector<1x8x8x4xf32> to vector<8x8x4xf32>
    %212 = vector.shape_cast %209 : vector<8x8x4xf32> to vector<1x8x8x4xf32>
    tpu.vector_store %arg5[%c0_147, %c8_148, %c0_149, %c0_150], %212 {strides = array<i32>} : memref<1x32x8x4xf32, #tpu.memory_space<vmem>>, vector<1x8x8x4xf32>,
    %213 = vector.broadcast %189 : vector<1x4xf32> to vector<64x4xf32>
    %214 = arith.subf %132, %213 : vector<64x4xf32>
    %215 = vector.broadcast %196 : vector<1x4xf32> to vector<64x4xf32>
    %216 = arith.mulf %214, %215 : vector<64x4xf32>
    %217 = vector.shape_cast %216 : vector<64x4xf32> to vector<8x8x4xf32>
    %c0_151 = arith.constant 0 : index
    %c16 = arith.constant 16 : index
    %c0_152 = arith.constant 0 : index
    %c0_153 = arith.constant 0 : index
    %218 = vector.load %arg5[%c0_151, %c16, %c0_152, %c0_153] : memref<1x32x8x4xf32, #tpu.memory_space<vmem>>, vector<1x8x8x4xf32>
    %219 = vector.shape_cast %218 : vector<1x8x8x4xf32> to vector<8x8x4xf32>
    %220 = vector.shape_cast %217 : vector<8x8x4xf32> to vector<1x8x8x4xf32>
    tpu.vector_store %arg5[%c0_151, %c16, %c0_152, %c0_153], %220 {strides = array<i32>} : memref<1x32x8x4xf32, #tpu.memory_space<vmem>>, vector<1x8x8x4xf32>,
    %221 = vector.broadcast %189 : vector<1x4xf32> to vector<64x4xf32>
    %222 = arith.subf %161, %221 : vector<64x4xf32>
    %223 = vector.broadcast %196 : vector<1x4xf32> to vector<64x4xf32>
    %224 = arith.mulf %222, %223 : vector<64x4xf32>
    %225 = vector.shape_cast %224 : vector<64x4xf32> to vector<8x8x4xf32>
    %c0_154 = arith.constant 0 : index
    %c24 = arith.constant 24 : index
    %c0_155 = arith.constant 0 : index
    %c0_156 = arith.constant 0 : index
    %226 = vector.load %arg5[%c0_154, %c24, %c0_155, %c0_156] : memref<1x32x8x4xf32, #tpu.memory_space<vmem>>, vector<1x8x8x4xf32>
    %227 = vector.shape_cast %226 : vector<1x8x8x4xf32> to vector<8x8x4xf32>
    %228 = vector.shape_cast %225 : vector<8x8x4xf32> to vector<1x8x8x4xf32>
    tpu.vector_store %arg5[%c0_154, %c24, %c0_155, %c0_156], %228 {strides = array<i32>} : memref<1x32x8x4xf32, #tpu.memory_space<vmem>>, vector<1x8x8x4xf32>,
    return
  }
  func.func @transform_0(%arg0: i32) -> (i32, i32, i32, i32) {
    %c0_i32 = arith.constant 0 : i32
    %c0_i32_0 = arith.constant 0 : i32
    %c0_i32_1 = arith.constant 0 : i32
    %c0_i32_2 = arith.constant 0 : i32
    return %arg0, %c0_i32, %c0_i32_0, %c0_i32_1 : i32, i32, i32, i32
  }
  func.func @transform_1(%arg0: i32) -> (i32, i32, i32) {
    %c0_i32 = arith.constant 0 : i32
    %c0_i32_0 = arith.constant 0 : i32
    %c0_i32_1 = arith.constant 0 : i32
    %c0_i32_2 = arith.constant 0 : i32
    return %c0_i32, %c0_i32_0, %c0_i32_1 : i32, i32, i32
  }
  func.func @transform_2(%arg0: i32) -> (i32, i32) {
    %c0_i32 = arith.constant 0 : i32
    %c0_i32_0 = arith.constant 0 : i32
    %c0_i32_1 = arith.constant 0 : i32
    return %c0_i32, %c0_i32_0 : i32, i32
  }
  func.func @transform_3(%arg0: i32) -> (i32, i32, i32) {
    %c0_i32 = arith.constant 0 : i32
    %c0_i32_0 = arith.constant 0 : i32
    %c0_i32_1 = arith.constant 0 : i32
    %c0_i32_2 = arith.constant 0 : i32
    return %c0_i32, %c0_i32_0, %c0_i32_1 : i32, i32, i32
  }
  func.func @transform_4(%arg0: i32) -> (i32, i32, i32, i32) {
    %c0_i32 = arith.constant 0 : i32
    %c0_i32_0 = arith.constant 0 : i32
    %c0_i32_1 = arith.constant 0 : i32
    %c0_i32_2 = arith.constant 0 : i32
    return %arg0, %c0_i32, %c0_i32_0, %c0_i32_1 : i32, i32, i32, i32
  }
}

</mosaic_0001>

<llo_original>
// kernel: unet_innermost_forward.1
$region0: #{unet_innermost_forward.1}
  #allocation0 [shape = 'u32[]', space=smem, size = 0x4, offset = 0x4, fixed_abs, tag = 'smem constant byte address 0x4 - core index']
  #allocation1 [shape = 'u32[144,128]{1,0:T(1,128)}', space=vmem, size = 0x12000, scoped, tag = 'internal scratch']
  #allocation2 [shape = 'f32[10,10,8]{2,1,0:T(8,128)}', space=vmem, size = 0x14000, scoped, tag = 'scratch operand']
  %s0 = inlined_call_operand.vmem [shape: bf16[2,9,9,16], index: 0, kind: input, shape index: {}]
  %s1 = inlined_call_operand.vmem [shape: bf16[4,16,8], index: 1, kind: input, shape index: {}]
  %s2 = inlined_call_operand.vmem [shape: f32[1,8], index: 2, kind: input, shape index: {}]
  %s3 = inlined_call_operand.vmem [shape: bf16[16,8,4], index: 3, kind: input, shape index: {}]
  %s4 = inlined_call_operand.vmem [shape: f32[2,32,8,4], index: 4, kind: output, shape index: {}]
  %s5 = sld [smem:[#allocation0]]
  $region49: #{unet_innermost_forward.1} parent=0
    _
  %s7 = ssub.s32 1, %s5
  %s8 = scalar_select 0, %s7, %s5
  loop: start=0, step=1, limit=4
  $region2: #{unet_innermost_forward.1} parent=0 // loop_pre_header
    _
  $region3: #{unet_innermost_forward.1} parent=0 // loop_header
    %s10 = sphi 0, %s14
    %p11 = scmp.ge.s32.totalorder %s10, 4
    %s20 = sphi 0, %s22
    %s23 = sphi 0, %s20
    %s24 = sphi 0, %s23
    %s40 = sphi 0, %s24
    %s44 = sphi 0, %s44
    %s46 = sphi 0, %s44
    %s47 = sphi 0, %s46
    %s61 = sphi 0, %s47
    %s65 = sphi 0, %s65
    %s67 = sphi 0, %s65
    %s68 = sphi 0, %s67
    %s82 = sphi 0, %s68
    %s86 = sphi 0, %s86
    %s88 = sphi 0, %s86
    %s89 = sphi 0, %s88
    %s103 = sphi 0, %s89
    %s109 = sphi 0, %s111
    %s112 = sphi 0, %s109
    %s113 = sphi 0, %s112
    %s129 = sphi 0, %s113
  $region4: #{unet_innermost_forward.1} parent=0 // loop_header_branch
    %13 = sbr.rel (%p11) target = $region8
  $region5: #{unet_innermost_forward.1} parent=0 // loop_body
    %s15 = ssub.s32 %s10, 1
    %s16 = ssub.s32 %s10, 2
    %s17 = sadd.s32 %s10, 1
    %s18 = ssub.s32 %s10, %s17
    %p19 = scmp.eq.s32.totalorder %s18, 0
    %s21 = sadd.s32 %s20, 1
    %s22 = scalar_select %p19, %s20, %s21
    %p25 = pneg %p19
    %p26 = scmp.eq.s32.totalorder %s10, 1
    %p27 = por %p25, %p26
    %p28 = scmp.ne.s32.totalorder %s20, %s23
    %p29 = scmp.eq.s32.totalorder %s10, 0
    %p30 = por %p28, %p29
    %p31 = scmp.ne.s32.totalorder %s20, %s23
    %p32 = scmp.eq.s32.totalorder %s15, 1
    %p33 = por %p31, %p32
    %p34 = scmp.ne.s32.totalorder %s23, %s24
    %p35 = scmp.eq.s32.totalorder %s15, 0
    %p36 = por %p34, %p35
    %p37 = scmp.ne.s32.totalorder %s23, %s24
    %p38 = scmp.eq.s32.totalorder %s16, 1
    %p39 = por %p37, %p38
    %p41 = scmp.ne.s32.totalorder %s24, %s40
    %p42 = scmp.eq.s32.totalorder %s16, 0
    %p43 = por %p41, %p42
    %s45 = sadd.s32 %s44, 1
    %p48 = scmp.eq.s32.totalorder %s10, 1
    %p49 = scmp.ne.s32.totalorder %s44, %s46
    %p50 = scmp.eq.s32.totalorder %s10, 0
    %p51 = por %p49, %p50
    %p52 = scmp.ne.s32.totalorder %s44, %s46
    %p53 = scmp.eq.s32.totalorder %s15, 1
    %p54 = por %p52, %p53
    %p55 = scmp.ne.s32.totalorder %s46, %s47
    %p56 = scmp.eq.s32.totalorder %s15, 0
    %p57 = por %p55, %p56
    %p58 = scmp.ne.s32.totalorder %s46, %s47
    %p59 = scmp.eq.s32.totalorder %s16, 1
    %p60 = por %p58, %p59
    %p62 = scmp.ne.s32.totalorder %s47, %s61
    %p63 = scmp.eq.s32.totalorder %s16, 0
    %p64 = por %p62, %p63
    %s66 = sadd.s32 %s65, 1
    %p69 = scmp.eq.s32.totalorder %s10, 1
    %p70 = scmp.ne.s32.totalorder %s65, %s67
    %p71 = scmp.eq.s32.totalorder %s10, 0
    %p72 = por %p70, %p71
    %p73 = scmp.ne.s32.totalorder %s65, %s67
    %p74 = scmp.eq.s32.totalorder %s15, 1
    %p75 = por %p73, %p74
    %p76 = scmp.ne.s32.totalorder %s67, %s68
    %p77 = scmp.eq.s32.totalorder %s15, 0
    %p78 = por %p76, %p77
    %p79 = scmp.ne.s32.totalorder %s67, %s68
    %p80 = scmp.eq.s32.totalorder %s16, 1
    %p81 = por %p79, %p80
    %p83 = scmp.ne.s32.totalorder %s68, %s82
    %p84 = scmp.eq.s32.totalorder %s16, 0
    %p85 = por %p83, %p84
    %s87 = sadd.s32 %s86, 1
    %p90 = scmp.eq.s32.totalorder %s10, 1
    %p91 = scmp.ne.s32.totalorder %s86, %s88
    %p92 = scmp.eq.s32.totalorder %s10, 0
    %p93 = por %p91, %p92
    %p94 = scmp.ne.s32.totalorder %s86, %s88
    %p95 = scmp.eq.s32.totalorder %s15, 1
    %p96 = por %p94, %p95
    %p97 = scmp.ne.s32.totalorder %s88, %s89
    %p98 = scmp.eq.s32.totalorder %s15, 0
    %p99 = por %p97, %p98
    %p100 = scmp.ne.s32.totalorder %s88, %s89
    %p101 = scmp.eq.s32.totalorder %s16, 1
    %p102 = por %p100, %p101
    %p104 = scmp.ne.s32.totalorder %s89, %s103
    %p105 = scmp.eq.s32.totalorder %s16, 0
    %p106 = por %p104, %p105
    %s107 = ssub.s32 %s10, %s17
    %p108 = scmp.eq.s32.totalorder %s107, 0
    %s110 = sadd.s32 %s109, 1
    %s111 = scalar_select %p108, %s109, %s110
    %p114 = pneg %p108
    %p115 = scmp.eq.s32.totalorder %s10, 1
    %p116 = por %p114, %p115
    %p117 = scmp.ne.s32.totalorder %s109, %s112
    %p118 = scmp.eq.s32.totalorder %s10, 0
    %p119 = por %p117, %p118
    %p120 = scmp.ne.s32.totalorder %s109, %s112
    %p121 = scmp.eq.s32.totalorder %s15, 1
    %p122 = por %p120, %p121
    %p123 = scmp.ne.s32.totalorder %s112, %s113
    %p124 = scmp.eq.s32.totalorder %s15, 0
    %p125 = por %p123, %p124
    %p126 = scmp.ne.s32.totalorder %s112, %s113
    %p127 = scmp.eq.s32.totalorder %s16, 1
    %p128 = por %p126, %p127
    %p130 = scmp.ne.s32.totalorder %s113, %s129
    %p131 = scmp.eq.s32.totalorder %s16, 0
    %p132 = por %p130, %p131
    %p133 = scmp.le.s32.totalorder 1, %s10
    %p134 = scmp.lt.s32.totalorder %s10, 3
    %p135 = pnand %p133, %p134
    %p136 = pneg %p135
    // Predicated region
    $region9: #{unet_innermost_forward.1} parent=5 // pred_check
      _
    $region10: #{unet_innermost_forward.1} parent=5 // pred_check_branch
      %138 = sbr.rel (%p135) target = $region12
    $region11: #{unet_innermost_forward.1} parent=5 // pred_region
      %s139 = ssub.s32 %s10, 1
      // Predicated region
      $region13: #{unet_innermost_forward.1} parent=11 // pred_check
        %p140 = pneg %p57
      $region14: #{unet_innermost_forward.1} parent=11 // pred_check_branch
        %142 = sbr.rel (%p140) target = $region16
      $region15: #{unet_innermost_forward.1} parent=11 // pred_region
        _
      $region16: #{unet_innermost_forward.1} parent=11 // pred_fallthru
        _
      // Predicated region
      $region17: #{unet_innermost_forward.1} parent=11 // pred_check
        %p143 = pneg %p78
      $region18: #{unet_innermost_forward.1} parent=11 // pred_check_branch
        %145 = sbr.rel (%p143) target = $region20
      $region19: #{unet_innermost_forward.1} parent=11 // pred_region
        _
      $region20: #{unet_innermost_forward.1} parent=11 // pred_fallthru
        _
      // Predicated region
      $region21: #{unet_innermost_forward.1} parent=11 // pred_check
        %p146 = pneg %p99
      $region22: #{unet_innermost_forward.1} parent=11 // pred_check_branch
        %148 = sbr.rel (%p146) target = $region24
      $region23: #{unet_innermost_forward.1} parent=11 // pred_region
        _
      $region24: #{unet_innermost_forward.1} parent=11 // pred_fallthru
        _
    $region12: #{unet_innermost_forward.1} parent=5 // pred_fallthru
      _
    %p149 = scmp.lt.s32.totalorder %s10, 2
    // Predicated region
    $region25: #{unet_innermost_forward.1} parent=5 // pred_check
      %p150 = pneg %p149
    $region26: #{unet_innermost_forward.1} parent=5 // pred_check_branch
      %152 = sbr.rel (%p150) target = $region28
    $region27: #{unet_innermost_forward.1} parent=5 // pred_region
      // Predicated region
      $region29: #{unet_innermost_forward.1} parent=27 // pred_check
        %p153 = pneg %p30
      $region30: #{unet_innermost_forward.1} parent=27 // pred_check_branch
        %155 = sbr.rel (%p153) target = $region32
      $region31: #{unet_innermost_forward.1} parent=27 // pred_region
        %p156 = scmp.lt.s32.totalorder %s10, 1
        %s157 = scalar_select %p156, %s10, 1
        %s158 = smul.addr %s157, 18
        %s159 = smul.addr %s158, 4
        %s160 = scalar_lea.vmem %s0, %s159
      $region32: #{unet_innermost_forward.1} parent=27 // pred_fallthru
        _
    $region28: #{unet_innermost_forward.1} parent=5 // pred_fallthru
      _
    %p161 = scmp.le.s32.totalorder 1, %s10
    %p162 = scmp.lt.s32.totalorder %s10, 3
    %p163 = pnand %p161, %p162
    %p164 = pneg %p163
    // Predicated region
    $region33: #{unet_innermost_forward.1} parent=5 // pred_check
      _
    $region34: #{unet_innermost_forward.1} parent=5 // pred_check_branch
      %166 = sbr.rel (%p163) target = $region36
    $region35: #{unet_innermost_forward.1} parent=5 // pred_region
      %s167 = ssub.s32 %s10, 1
      %p168 = scmp.lt.s32.totalorder %s15, 1
      %s169 = scalar_select %p168, %s15, 1
      %s170 = smul.addr %s169, 18
      %s171 = smul.addr %s170, 4
      %s172 = scalar_lea.vmem %s0, %s171
      %p173 = pneg %p36
      %p174 = pneg %p33
      %p175 = pneg %p57
      %p176 = pneg %p54
      %p177 = pneg %p78
      %p178 = pneg %p75
      %p179 = pneg %p99
      %p180 = pneg %p96
      %p181 = pneg %p125
      %p182 = pneg %p122
      %p183 = scmp.lt.s32.totalorder %s15, 1
      %s184 = scalar_select %p183, %s15, 1
      %s185 = smul.addr %s184, 32
      %s186 = smul.addr %s185, 8
      %s187 = scalar_lea.vmem %s4, %s186
      %p188 = scmp.lt.s32.totalorder %s15, 1
      %s189 = scalar_select %p188, %s15, 1
      %s190 = smul.addr %s189, 18
      %s191 = smul.addr %s190, 4
      %s192 = scalar_lea.vmem %s0, %s191
      %p193 = scmp.lt.s32.totalorder %s15, 1
      %s194 = scalar_select %p193, %s15, 1
      %s195 = smul.addr %s194, 32
      %s196 = smul.addr %s195, 8
      %s197 = scalar_lea.vmem %s4, %s196
      %v199 = vld [vmem:[%s192] sm:$0xf]
      %v200 = vld [vmem:[%s192 + $0x4] sm:$0x1]
      %v201 = vld [vmem:[%s192 + $0x8] sm:$0xf]
      %v202 = vld [vmem:[%s192 + $0xc] sm:$0x1]
      %v203 = vld [vmem:[%s192 + $0x10] sm:$0xf]
      %v204 = vld [vmem:[%s192 + $0x14] sm:$0x1]
      %v205 = vld [vmem:[%s192 + $0x18] sm:$0xf]
      %v206 = vld [vmem:[%s192 + $0x1c] sm:$0x1]
      %v207 = vld [vmem:[%s192 + $0x20] sm:$0xf]
      %v208 = vld [vmem:[%s192 + $0x24] sm:$0x1]
      %v209 = vld [vmem:[%s192 + $0x28] sm:$0xf]
      %v210 = vld [vmem:[%s192 + $0x2c] sm:$0x1]
      %v211 = vld [vmem:[%s192 + $0x30] sm:$0xf]
      %v212 = vld [vmem:[%s192 + $0x34] sm:$0x1]
      %v213 = vld [vmem:[%s192 + $0x38] sm:$0xf]
      %v214 = vld [vmem:[%s192 + $0x3c] sm:$0x1]
      %v215 = vld [vmem:[%s192 + $0x40] sm:$0xf]
      %v216 = vld [vmem:[%s192 + $0x44] sm:$0x1]
      %v217 = vunpack.c.l.bf16 %v199
      %v218 = vunpack.c.l.bf16 %v200
      %v219 = vunpack.c.l.bf16 %v201
      %v220 = vunpack.c.l.bf16 %v202
      %v221 = vunpack.c.l.bf16 %v203
      %v222 = vunpack.c.l.bf16 %v204
      %v223 = vunpack.c.l.bf16 %v205
      %v224 = vunpack.c.l.bf16 %v206
      %v225 = vunpack.c.l.bf16 %v207
      %v226 = vunpack.c.l.bf16 %v208
      %v227 = vunpack.c.l.bf16 %v209
      %v228 = vunpack.c.l.bf16 %v210
      %v229 = vunpack.c.l.bf16 %v211
      %v230 = vunpack.c.l.bf16 %v212
      %v231 = vunpack.c.l.bf16 %v213
      %v232 = vunpack.c.l.bf16 %v214
      %v233 = vunpack.c.l.bf16 %v215
      %v234 = vunpack.c.l.bf16 %v216
      %vm235 = vcmp.gt.f32.partialorder %v217, 0.0
      %vm236 = vcmp.gt.f32.partialorder %v218, 0.0
      %vm237 = vcmp.gt.f32.partialorder %v219, 0.0
      %vm238 = vcmp.gt.f32.partialorder %v220, 0.0
      %vm239 = vcmp.gt.f32.partialorder %v221, 0.0
      %vm240 = vcmp.gt.f32.partialorder %v222, 0.0
      %vm241 = vcmp.gt.f32.partialorder %v223, 0.0
      %vm242 = vcmp.gt.f32.partialorder %v224, 0.0
      %vm243 = vcmp.gt.f32.partialorder %v225, 0.0
      %vm244 = vcmp.gt.f32.partialorder %v226, 0.0
      %vm245 = vcmp.gt.f32.partialorder %v227, 0.0
      %vm246 = vcmp.gt.f32.partialorder %v228, 0.0
      %vm247 = vcmp.gt.f32.partialorder %v229, 0.0
      %vm248 = vcmp.gt.f32.partialorder %v230, 0.0
      %vm249 = vcmp.gt.f32.partialorder %v231, 0.0
      %vm250 = vcmp.gt.f32.partialorder %v232, 0.0
      %vm251 = vcmp.gt.f32.partialorder %v233, 0.0
      %vm252 = vcmp.gt.f32.partialorder %v234, 0.0
      %v253 = vmul.f32 %v217, 0.2
      %v254 = vmul.f32 %v218, 0.2
      %v255 = vmul.f32 %v219, 0.2
      %v256 = vmul.f32 %v220, 0.2
      %v257 = vmul.f32 %v221, 0.2
      %v258 = vmul.f32 %v222, 0.2
      %v259 = vmul.f32 %v223, 0.2
      %v260 = vmul.f32 %v224, 0.2
      %v261 = vmul.f32 %v225, 0.2
      %v262 = vmul.f32 %v226, 0.2
      %v263 = vmul.f32 %v227, 0.2
      %v264 = vmul.f32 %v228, 0.2
      %v265 = vmul.f32 %v229, 0.2
      %v266 = vmul.f32 %v230, 0.2
      %v267 = vmul.f32 %v231, 0.2
      %v268 = vmul.f32 %v232, 0.2
      %v269 = vmul.f32 %v233, 0.2
      %v270 = vmul.f32 %v234, 0.2
      %v271 = vsel %vm235, %v217, %v253
      %v272 = vsel %vm236, %v218, %v254
      %v273 = vsel %vm237, %v219, %v255
      %v274 = vsel %vm238, %v220, %v256
      %v275 = vsel %vm239, %v221, %v257
      %v276 = vsel %vm240, %v222, %v258
      %v277 = vsel %vm241, %v223, %v259
      %v278 = vsel %vm242, %v224, %v260
      %v279 = vsel %vm243, %v225, %v261
      %v280 = vsel %vm244, %v226, %v262
      %v281 = vsel %vm245, %v227, %v263
      %v282 = vsel %vm246, %v228, %v264
      %v283 = vsel %vm247, %v229, %v265
      %v284 = vsel %vm248, %v230, %v266
      %v285 = vsel %vm249, %v231, %v267
      %v286 = vsel %vm250, %v232, %v268
      %v287 = vsel %vm251, %v233, %v269
      %v288 = vsel %vm252, %v234, %v270
      %v289 = vpack.c.bf16 %v273, %v271
      %v290 = vpack.c.bf16 %v277, %v275
      %v291 = vpack.c.bf16 %v281, %v279
      %v292 = vpack.c.bf16 %v285, %v283
      %v293 = vld [vmem:[%s1] sm:$0xf]
      %v294 = vld [vmem:[%s1 + $0x4] sm:$0xf]
      %vm311 = vcmask 1046528
      %v312 = vrot.slane %v271, 1
      %v313 = vrot.slane %v272, 1
      %v314 = vsel %vm311, %v312, %v313
      %v315 = vrot.slane %v273, 1
      %v316 = vrot.slane %v274, 1
      %v317 = vsel %vm311, %v315, %v316
      %v318 = vrot.slane %v275, 1
      %v319 = vrot.slane %v276, 1
      %v320 = vsel %vm311, %v318, %v319
      %v321 = vrot.slane %v277, 1
      %v322 = vrot.slane %v278, 1
      %v323 = vsel %vm311, %v321, %v322
      %v324 = vrot.slane %v279, 1
      %v325 = vrot.slane %v280, 1
      %v326 = vsel %vm311, %v324, %v325
      %v327 = vrot.slane %v281, 1
      %v328 = vrot.slane %v282, 1
      %v329 = vsel %vm311, %v327, %v328
      %v330 = vrot.slane %v283, 1
      %v331 = vrot.slane %v284, 1
      %v332 = vsel %vm311, %v330, %v331
      %v333 = vrot.slane %v285, 1
      %v334 = vrot.slane %v286, 1
      %v335 = vsel %vm311, %v333, %v334
      %v344 = vpack.c.bf16 %v317, %v314
      %v345 = vpack.c.bf16 %v323, %v320
      %v346 = vpack.c.bf16 %v329, %v326
      %v347 = vpack.c.bf16 %v335, %v332
      %s348 = scalar_lea.vmem %s1, 8
      %v349 = vld [vmem:[%s348] sm:$0xf]
      %v350 = vld [vmem:[%s348 + $0x4] sm:$0xf]
      %v353 = vunpack.c.l.b16 %v349
      %v354 = vunpack.c.l.b16 %v350
      %v355 = vpack.c.b16 %v354, %v353
      %vm357 = vcmask 130048
      %v359 = vsel %vm357, %v344, 0
      %v362 = vsel %vm357, %v345, 0
      %v365 = vsel %vm357, %v346, 0
      %v368 = vsel %vm357, %v347, 0
      %370 = vmatprep.subr.bf16.mxu0 0
      %371 = vmatpush1.bf16.msra.mxu0 %v355
      %372 = vmatprep.subr.bf16.mxu0 0
      %373 = vmatpush1.bf16.msra.mxu0 0
      %374 = vmatprep.subr.bf16.mxu0 0
      %375 = vmatpush1.bf16.msra.mxu0 0
      %376 = vmatprep.subr.bf16.mxu0 0
      %377 = vmatpush1.bf16.msra.mxu0 0
      %378 = vmatprep.subr.bf16.mxu0 0
      %379 = vmatpush1.bf16.msra.mxu0 0
      %380 = vmatprep.subr.bf16.mxu0 0
      %381 = vmatpush1.bf16.msra.mxu0 0
      %382 = vmatprep.subr.bf16.mxu0 0
      %383 = vmatpush1.bf16.msra.mxu0 0
      %384 = vmatprep.subr.bf16.mxu0 0
      %385 = vmatpush1.bf16.msra.mxu0 0
      %386 = vmatprep.subr.bf16.mxu0 0
      %387 = vmatpush1.bf16.msra.mxu0 0
      %388 = vmatprep.subr.bf16.mxu0 0
      %389 = vmatpush1.bf16.msra.mxu0 0
      %390 = vmatprep.subr.bf16.mxu0 0
      %391 = vmatpush1.bf16.msra.mxu0 0
      %392 = vmatprep.subr.bf16.mxu0 0
      %393 = vmatpush1.bf16.msra.mxu0 0
      %394 = vmatprep.subr.bf16.mxu0 0
      %395 = vmatpush1.bf16.msra.mxu0 0
      %396 = vmatprep.subr.bf16.mxu0 0
      %397 = vmatpush1.bf16.msra.mxu0 0
      %398 = vmatprep.subr.bf16.mxu0 0
      %399 = vmatpush1.bf16.msra.mxu0 0
      %400 = vmatprep.subr.bf16.mxu0 0
      %401 = vmatpush1.bf16.msra.mxu0 0
      %402 = vmatprep.mubr.bf16.mxu0 0
      %403 = vmatmul.mubr.bf16.gmra.mrb[0].mxu0 %v359
      %v404 = vpop.f32.mrb[0].mxu0
      %v405 = vadd.f32 0.0, %v404
      %v406 = vpop.f32.mrb[0].mxu0
      %v407 = vpop.f32.mrb[0].mxu0
      %v408 = vadd.f32 0.0, %v407
      %v409 = vpop.f32.mrb[0].mxu0
      %410 = vmatprep.mubr.bf16.mxu0 0
      %411 = vmatmul.mubr.bf16.gmra.mrb[0].mxu0 %v362
      %v412 = vpop.f32.mrb[0].mxu0
      %v413 = vadd.f32 0.0, %v412
      %v414 = vpop.f32.mrb[0].mxu0
      %v415 = vpop.f32.mrb[0].mxu0
      %v416 = vadd.f32 0.0, %v415
      %v417 = vpop.f32.mrb[0].mxu0
      %418 = vmatprep.mubr.bf16.mxu0 0
      %419 = vmatmul.mubr.bf16.gmra.mrb[0].mxu0 %v365
      %v420 = vpop.f32.mrb[0].mxu0
      %v421 = vadd.f32 0.0, %v420
      %v422 = vpop.f32.mrb[0].mxu0
      %v423 = vpop.f32.mrb[0].mxu0
      %v424 = vadd.f32 0.0, %v423
      %v425 = vpop.f32.mrb[0].mxu0
      %426 = vmatprep.mubr.bf16.mxu0 0
      %427 = vmatmul.mubr.bf16.gmra.mrb[0].mxu0 %v368
      %v428 = vpop.f32.mrb[0].mxu0
      %v429 = vadd.f32 0.0, %v428
      %v430 = vpop.f32.mrb[0].mxu0
      %v431 = vpop.f32.mrb[0].mxu0
      %v432 = vadd.f32 0.0, %v431
      %v433 = vpop.f32.mrb[0].mxu0
      %434 = vdwg.mxu0
      %v437 = vunpack.c.l.b16 %v293
      %v438 = vunpack.c.l.b16 %v294
      %v439 = vpack.c.b16 %v438, %v437
      %v442 = vsel %vm357, %v289, 0
      %v445 = vsel %vm357, %v290, 0
      %v448 = vsel %vm357, %v291, 0
      %v451 = vsel %vm357, %v292, 0
      %453 = vmatprep.subr.bf16.mxu0 0
      %454 = vmatpush1.bf16.msra.mxu0 %v439
      %455 = vmatprep.subr.bf16.mxu0 0
      %456 = vmatpush1.bf16.msra.mxu0 0
      %457 = vmatprep.subr.bf16.mxu0 0
      %458 = vmatpush1.bf16.msra.mxu0 0
      %459 = vmatprep.subr.bf16.mxu0 0
      %460 = vmatpush1.bf16.msra.mxu0 0
      %461 = vmatprep.subr.bf16.mxu0 0
      %462 = vmatpush1.bf16.msra.mxu0 0
      %463 = vmatprep.subr.bf16.mxu0 0
      %464 = vmatpush1.bf16.msra.mxu0 0
      %465 = vmatprep.subr.bf16.mxu0 0
      %466 = vmatpush1.bf16.msra.mxu0 0
      %467 = vmatprep.subr.bf16.mxu0 0
      %468 = vmatpush1.bf16.msra.mxu0 0
      %469 = vmatprep.subr.bf16.mxu0 0
      %470 = vmatpush1.bf16.msra.mxu0 0
      %471 = vmatprep.subr.bf16.mxu0 0
      %472 = vmatpush1.bf16.msra.mxu0 0
      %473 = vmatprep.subr.bf16.mxu0 0
      %474 = vmatpush1.bf16.msra.mxu0 0
      %475 = vmatprep.subr.bf16.mxu0 0
      %476 = vmatpush1.bf16.msra.mxu0 0
      %477 = vmatprep.subr.bf16.mxu0 0
      %478 = vmatpush1.bf16.msra.mxu0 0
      %479 = vmatprep.subr.bf16.mxu0 0
      %480 = vmatpush1.bf16.msra.mxu0 0
      %481 = vmatprep.subr.bf16.mxu0 0
      %482 = vmatpush1.bf16.msra.mxu0 0
      %483 = vmatprep.subr.bf16.mxu0 0
      %484 = vmatpush1.bf16.msra.mxu0 0
      %485 = vmatprep.mubr.bf16.mxu0 0
      %486 = vmatmul.mubr.bf16.gmra.mrb[0].mxu0 %v442
      %v487 = vpop.f32.mrb[0].mxu0
      %v488 = vadd.f32 %v405, %v487
      %v489 = vpop.f32.mrb[0].mxu0
      %v490 = vpop.f32.mrb[0].mxu0
      %v491 = vadd.f32 %v408, %v490
      %v492 = vpop.f32.mrb[0].mxu0
      %493 = vmatprep.mubr.bf16.mxu0 0
      %494 = vmatmul.mubr.bf16.gmra.mrb[0].mxu0 %v445
      %v495 = vpop.f32.mrb[0].mxu0
      %v496 = vadd.f32 %v413, %v495
      %v497 = vpop.f32.mrb[0].mxu0
      %v498 = vpop.f32.mrb[0].mxu0
      %v499 = vadd.f32 %v416, %v498
      %v500 = vpop.f32.mrb[0].mxu0
      %501 = vmatprep.mubr.bf16.mxu0 0
      %502 = vmatmul.mubr.bf16.gmra.mrb[0].mxu0 %v448
      %v503 = vpop.f32.mrb[0].mxu0
      %v504 = vadd.f32 %v421, %v503
      %v505 = vpop.f32.mrb[0].mxu0
      %v506 = vpop.f32.mrb[0].mxu0
      %v507 = vadd.f32 %v424, %v506
      %v508 = vpop.f32.mrb[0].mxu0
      %509 = vmatprep.mubr.bf16.mxu0 0
      %510 = vmatmul.mubr.bf16.gmra.mrb[0].mxu0 %v451
      %v511 = vpop.f32.mrb[0].mxu0
      %v512 = vadd.f32 %v429, %v511
      %v513 = vpop.f32.mrb[0].mxu0
      %v514 = vpop.f32.mrb[0].mxu0
      %v515 = vadd.f32 %v432, %v514
      %v516 = vpop.f32.mrb[0].mxu0
      %517 = vdwg.mxu0
      %v518 = vpack.c.bf16 %v275, %v273
      %v519 = vpack.c.bf16 %v279, %v277
      %v520 = vpack.c.bf16 %v283, %v281
      %v521 = vpack.c.bf16 %v287, %v285
      %s522 = scalar_lea.vmem %s1, 16
      %v523 = vld [vmem:[%s522] sm:$0xf]
      %v524 = vld [vmem:[%s522 + $0x4] sm:$0xf]
      %v527 = vunpack.c.l.b16 %v523
      %v528 = vunpack.c.l.b16 %v524
      %v529 = vpack.c.b16 %v528, %v527
      %v532 = vsel %vm357, %v518, 0
      %v535 = vsel %vm357, %v519, 0
      %v538 = vsel %vm357, %v520, 0
      %v541 = vsel %vm357, %v521, 0
      %543 = vmatprep.subr.bf16.mxu0 0
      %544 = vmatpush1.bf16.msra.mxu0 %v529
      %545 = vmatprep.subr.bf16.mxu0 0
      %546 = vmatpush1.bf16.msra.mxu0 0
      %547 = vmatprep.subr.bf16.mxu0 0
      %548 = vmatpush1.bf16.msra.mxu0 0
      %549 = vmatprep.subr.bf16.mxu0 0
      %550 = vmatpush1.bf16.msra.mxu0 0
      %551 = vmatprep.subr.bf16.mxu0 0
      %552 = vmatpush1.bf16.msra.mxu0 0
      %553 = vmatprep.subr.bf16.mxu0 0
      %554 = vmatpush1.bf16.msra.mxu0 0
      %555 = vmatprep.subr.bf16.mxu0 0
      %556 = vmatpush1.bf16.msra.mxu0 0
      %557 = vmatprep.subr.bf16.mxu0 0
      %558 = vmatpush1.bf16.msra.mxu0 0
      %559 = vmatprep.subr.bf16.mxu0 0
      %560 = vmatpush1.bf16.msra.mxu0 0
      %561 = vmatprep.subr.bf16.mxu0 0
      %562 = vmatpush1.bf16.msra.mxu0 0
      %563 = vmatprep.subr.bf16.mxu0 0
      %564 = vmatpush1.bf16.msra.mxu0 0
      %565 = vmatprep.subr.bf16.mxu0 0
      %566 = vmatpush1.bf16.msra.mxu0 0
      %567 = vmatprep.subr.bf16.mxu0 0
      %568 = vmatpush1.bf16.msra.mxu0 0
      %569 = vmatprep.subr.bf16.mxu0 0
      %570 = vmatpush1.bf16.msra.mxu0 0
      %571 = vmatprep.subr.bf16.mxu0 0
      %572 = vmatpush1.bf16.msra.mxu0 0
      %573 = vmatprep.subr.bf16.mxu0 0
      %574 = vmatpush1.bf16.msra.mxu0 0
      %575 = vmatprep.mubr.bf16.mxu0 0
      %576 = vmatmul.mubr.bf16.gmra.mrb[0].mxu0 %v532
      %v577 = vpop.f32.mrb[0].mxu0
      %v578 = vadd.f32 0.0, %v577
      %v579 = vpop.f32.mrb[0].mxu0
      %v580 = vpop.f32.mrb[0].mxu0
      %v581 = vadd.f32 0.0, %v580
      %v582 = vpop.f32.mrb[0].mxu0
      %583 = vmatprep.mubr.bf16.mxu0 0
      %584 = vmatmul.mubr.bf16.gmra.mrb[0].mxu0 %v535
      %v585 = vpop.f32.mrb[0].mxu0
      %v586 = vadd.f32 0.0, %v585
      %v587 = vpop.f32.mrb[0].mxu0
      %v588 = vpop.f32.mrb[0].mxu0
      %v589 = vadd.f32 0.0, %v588
      %v590 = vpop.f32.mrb[0].mxu0
      %591 = vmatprep.mubr.bf16.mxu0 0
      %592 = vmatmul.mubr.bf16.gmra.mrb[0].mxu0 %v538
      %v593 = vpop.f32.mrb[0].mxu0
      %v594 = vadd.f32 0.0, %v593
      %v595 = vpop.f32.mrb[0].mxu0
      %v596 = vpop.f32.mrb[0].mxu0
      %v597 = vadd.f32 0.0, %v596
      %v598 = vpop.f32.mrb[0].mxu0
      %599 = vmatprep.mubr.bf16.mxu0 0
      %600 = vmatmul.mubr.bf16.gmra.mrb[0].mxu0 %v541
      %v601 = vpop.f32.mrb[0].mxu0
      %v602 = vadd.f32 0.0, %v601
      %v603 = vpop.f32.mrb[0].mxu0
      %v604 = vpop.f32.mrb[0].mxu0
      %v605 = vadd.f32 0.0, %v604
      %v606 = vpop.f32.mrb[0].mxu0
      %607 = vdwg.mxu0
      %v608 = vadd.f32 %v488, %v578
      %v609 = vadd.f32 %v491, %v581
      %v610 = vadd.f32 %v496, %v586
      %v611 = vadd.f32 %v499, %v589
      %v612 = vadd.f32 %v504, %v594
      %v613 = vadd.f32 %v507, %v597
      %v614 = vadd.f32 %v512, %v602
      %v615 = vadd.f32 %v515, %v605
      %v618 = vrot.slane %v287, 1
      %v619 = vrot.slane %v288, 1
      %v620 = vsel %vm311, %v618, %v619
      %v622 = vpack.c.bf16 %v320, %v317
      %v623 = vpack.c.bf16 %v326, %v323
      %v624 = vpack.c.bf16 %v332, %v329
      %v625 = vpack.c.bf16 %v620, %v335
      %s626 = scalar_lea.vmem %s1, 24
      %v627 = vld [vmem:[%s626] sm:$0xf]
      %v628 = vld [vmem:[%s626 + $0x4] sm:$0xf]
      %v631 = vunpack.c.l.b16 %v627
      %v632 = vunpack.c.l.b16 %v628
      %v633 = vpack.c.b16 %v632, %v631
      %v636 = vsel %vm357, %v622, 0
      %v639 = vsel %vm357, %v623, 0
      %v642 = vsel %vm357, %v624, 0
      %v645 = vsel %vm357, %v625, 0
      %647 = vmatprep.subr.bf16.mxu0 0
      %648 = vmatpush1.bf16.msra.mxu0 %v633
      %649 = vmatprep.subr.bf16.mxu0 0
      %650 = vmatpush1.bf16.msra.mxu0 0
      %651 = vmatprep.subr.bf16.mxu0 0
      %652 = vmatpush1.bf16.msra.mxu0 0
      %653 = vmatprep.subr.bf16.mxu0 0
      %654 = vmatpush1.bf16.msra.mxu0 0
      %655 = vmatprep.subr.bf16.mxu0 0
      %656 = vmatpush1.bf16.msra.mxu0 0
      %657 = vmatprep.subr.bf16.mxu0 0
      %658 = vmatpush1.bf16.msra.mxu0 0
      %659 = vmatprep.subr.bf16.mxu0 0
      %660 = vmatpush1.bf16.msra.mxu0 0
      %661 = vmatprep.subr.bf16.mxu0 0
      %662 = vmatpush1.bf16.msra.mxu0 0
      %663 = vmatprep.subr.bf16.mxu0 0
      %664 = vmatpush1.bf16.msra.mxu0 0
      %665 = vmatprep.subr.bf16.mxu0 0
      %666 = vmatpush1.bf16.msra.mxu0 0
      %667 = vmatprep.subr.bf16.mxu0 0
      %668 = vmatpush1.bf16.msra.mxu0 0
      %669 = vmatprep.subr.bf16.mxu0 0
      %670 = vmatpush1.bf16.msra.mxu0 0
      %671 = vmatprep.subr.bf16.mxu0 0
      %672 = vmatpush1.bf16.msra.mxu0 0
      %673 = vmatprep.subr.bf16.mxu0 0
      %674 = vmatpush1.bf16.msra.mxu0 0
      %675 = vmatprep.subr.bf16.mxu0 0
      %676 = vmatpush1.bf16.msra.mxu0 0
      %677 = vmatprep.subr.bf16.mxu0 0
      %678 = vmatpush1.bf16.msra.mxu0 0
      %679 = vmatprep.mubr.bf16.mxu0 0
      %680 = vmatmul.mubr.bf16.gmra.mrb[0].mxu0 %v636
      %v681 = vpop.f32.mrb[0].mxu0
      %v682 = vadd.f32 0.0, %v681
      %v683 = vpop.f32.mrb[0].mxu0
      %v684 = vpop.f32.mrb[0].mxu0
      %v685 = vadd.f32 0.0, %v684
      %v686 = vpop.f32.mrb[0].mxu0
      %687 = vmatprep.mubr.bf16.mxu0 0
      %688 = vmatmul.mubr.bf16.gmra.mrb[0].mxu0 %v639
      %v689 = vpop.f32.mrb[0].mxu0
      %v690 = vadd.f32 0.0, %v689
      %v691 = vpop.f32.mrb[0].mxu0
      %v692 = vpop.f32.mrb[0].mxu0
      %v693 = vadd.f32 0.0, %v692
      %v694 = vpop.f32.mrb[0].mxu0
      %695 = vmatprep.mubr.bf16.mxu0 0
      %696 = vmatmul.mubr.bf16.gmra.mrb[0].mxu0 %v642
      %v697 = vpop.f32.mrb[0].mxu0
      %v698 = vadd.f32 0.0, %v697
      %v699 = vpop.f32.mrb[0].mxu0
      %v700 = vpop.f32.mrb[0].mxu0
      %v701 = vadd.f32 0.0, %v700
      %v702 = vpop.f32.mrb[0].mxu0
      %703 = vmatprep.mubr.bf16.mxu0 0
      %704 = vmatmul.mubr.bf16.gmra.mrb[0].mxu0 %v645
      %v705 = vpop.f32.mrb[0].mxu0
      %v706 = vadd.f32 0.0, %v705
      %v707 = vpop.f32.mrb[0].mxu0
      %v708 = vpop.f32.mrb[0].mxu0
      %v709 = vadd.f32 0.0, %v708
      %v710 = vpop.f32.mrb[0].mxu0
      %711 = vdwg.mxu0
      %v712 = vadd.f32 %v608, %v682
      %v713 = vadd.f32 %v609, %v685
      %v714 = vadd.f32 %v610, %v690
      %v715 = vadd.f32 %v611, %v693
      %v716 = vadd.f32 %v612, %v698
      %v717 = vadd.f32 %v613, %v701
      %v718 = vadd.f32 %v614, %v706
      %v719 = vadd.f32 %v615, %v709
      %v720 = vld [vmem:[%s2] sm:$0x1]
      %v722 = vlaneseq
      %v723 = vshrl.u32 %v722, 7
      %v724 = vsub.s32 0, %v723
      %v725 = vrot.slane %v720, %v724
      %v727 = vadd.f32 %v712, %v725
      %v728 = vadd.f32 %v713, %v725
      %v729 = vadd.f32 %v714, %v725
      %v730 = vadd.f32 %v715, %v725
      %v731 = vadd.f32 %v716, %v725
      %v732 = vadd.f32 %v717, %v725
      %v733 = vadd.f32 %v718, %v725
      %v734 = vadd.f32 %v719, %v725
      %v735 = vmax.f32 %v727, 0.0
      %v736 = vmax.f32 %v728, 0.0
      %v737 = vmax.f32 %v729, 0.0
      %v738 = vmax.f32 %v730, 0.0
      %v739 = vmax.f32 %v731, 0.0
      %v740 = vmax.f32 %v732, 0.0
      %v741 = vmax.f32 %v733, 0.0
      %v742 = vmax.f32 %v734, 0.0
      %vm743 = vcmask 64512
      %744 = vst.msk [vmem:[#allocation2] sm:$0xff] %vm743, 0.0
      %vm745 = vcmask 58368
      %746 = vst.msk [vmem:[#allocation2 + $0x8] sm:$0x3] %vm745, 0.0
      %747 = vst.msk [vmem:[#allocation2 + $0x10] sm:$0xff] %vm743, 0.0
      %748 = vst.msk [vmem:[#allocation2 + $0x18] sm:$0x3] %vm745, 0.0
      %749 = vst.msk [vmem:[#allocation2 + $0x20] sm:$0xff] %vm743, 0.0
      %750 = vst.msk [vmem:[#allocation2 + $0x28] sm:$0x3] %vm745, 0.0
      %751 = vst.msk [vmem:[#allocation2 + $0x30] sm:$0xff] %vm743, 0.0
      %752 = vst.msk [vmem:[#allocation2 + $0x38] sm:$0x3] %vm745, 0.0
      %753 = vst.msk [vmem:[#allocation2 + $0x40] sm:$0xff] %vm743, 0.0
      %754 = vst.msk [vmem:[#allocation2 + $0x48] sm:$0x3] %vm745, 0.0
      %755 = vst.msk [vmem:[#allocation2 + $0x50] sm:$0xff] %vm743, 0.0
      %756 = vst.msk [vmem:[#allocation2 + $0x58] sm:$0x3] %vm745, 0.0
      %757 = vst.msk [vmem:[#allocation2 + $0x60] sm:$0xff] %vm743, 0.0
      %758 = vst.msk [vmem:[#allocation2 + $0x68] sm:$0x3] %vm745, 0.0
      %759 = vst.msk [vmem:[#allocation2 + $0x70] sm:$0xff] %vm743, 0.0
      %760 = vst.msk [vmem:[#allocation2 + $0x78] sm:$0x3] %vm745, 0.0
      %761 = vst.msk [vmem:[#allocation2 + $0x80] sm:$0xff] %vm743, 0.0
      %762 = vst.msk [vmem:[#allocation2 + $0x88] sm:$0x3] %vm745, 0.0
      %763 = vst.msk [vmem:[#allocation2 + $0x90] sm:$0xff] %vm743, 0.0
      %764 = vst.msk [vmem:[#allocation2 + $0x98] sm:$0x3] %vm745, 0.0
      %s765 = scalar_lea.vmem [#allocation2], 16
      %766 = vst.msk [vmem:[%s765 + $0x1] sm:$0xff] %vm743, %v735
      %767 = vst.msk [vmem:[%s765 + $0x11] sm:$0xff] %vm743, %v736
      %768 = vst.msk [vmem:[%s765 + $0x21] sm:$0xff] %vm743, %v737
      %769 = vst.msk [vmem:[%s765 + $0x31] sm:$0xff] %vm743, %v738
      %770 = vst.msk [vmem:[%s765 + $0x41] sm:$0xff] %vm743, %v739
      %771 = vst.msk [vmem:[%s765 + $0x51] sm:$0xff] %vm743, %v740
      %772 = vst.msk [vmem:[%s765 + $0x61] sm:$0xff] %vm743, %v741
      %773 = vst.msk [vmem:[%s765 + $0x71] sm:$0xff] %vm743, %v742
      %v774 = vld [vmem:[%s765 + $0x1] sm:$0xff]
      %v775 = vld [vmem:[%s765 + $0x11] sm:$0xff]
      %v776 = vld [vmem:[%s765 + $0x21] sm:$0xff]
      %v777 = vld [vmem:[%s765 + $0x31] sm:$0xff]
      %v778 = vld [vmem:[%s765 + $0x41] sm:$0xff]
      %v779 = vld [vmem:[%s765 + $0x51] sm:$0xff]
      %v780 = vld [vmem:[%s765 + $0x61] sm:$0xff]
      %v781 = vld [vmem:[%s765 + $0x71] sm:$0xff]
      %v782 = vpack.c.bf16 %v775, %v774
      %v783 = vpack.c.bf16 %v777, %v776
      %v784 = vpack.c.bf16 %v779, %v778
      %v785 = vpack.c.bf16 %v781, %v780
      %s786 = scalar_lea.vmem %s3, 20
      %v787 = vld [vmem:[%s786] sm:$0xf]
      %v788 = vld [vmem:[%s765] sm:$0xff]
      %v789 = vld [vmem:[%s765 + $0x10] sm:$0xff]
      %v790 = vld [vmem:[%s765 + $0x20] sm:$0xff]
      %v791 = vld [vmem:[%s765 + $0x30] sm:$0xff]
      %v792 = vld [vmem:[%s765 + $0x40] sm:$0xff]
      %v793 = vld [vmem:[%s765 + $0x50] sm:$0xff]
      %v794 = vld [vmem:[%s765 + $0x60] sm:$0xff]
      %v795 = vld [vmem:[%s765 + $0x70] sm:$0xff]
      %v796 = vpack.c.bf16 %v789, %v788
      %v797 = vpack.c.bf16 %v791, %v790
      %v798 = vpack.c.bf16 %v793, %v792
      %v799 = vpack.c.bf16 %v795, %v794
      %s800 = scalar_lea.vmem %s3, 28
      %v801 = vld [vmem:[%s800] sm:$0xf]
      %v803 = vsel %vm743, %v796, 0
      %v806 = vsel %vm743, %v797, 0
      %v809 = vsel %vm743, %v798, 0
      %v812 = vsel %vm743, %v799, 0
      %vm814 = vcmask 1043456
      %v816 = vsel %vm814, %v801, 0
      %818 = vmatprep.subr.bf16.mxu0 0
      %819 = vmatpush1.bf16.msra.mxu0 %v816
      %820 = vmatprep.subr.bf16.mxu0 0
      %821 = vmatpush1.bf16.msra.mxu0 0
      %822 = vmatprep.subr.bf16.mxu0 0
      %823 = vmatpush1.bf16.msra.mxu0 0
      %824 = vmatprep.subr.bf16.mxu0 0
      %825 = vmatpush1.bf16.msra.mxu0 0
      %826 = vmatprep.subr.bf16.mxu0 0
      %827 = vmatpush1.bf16.msra.mxu0 0
      %828 = vmatprep.subr.bf16.mxu0 0
      %829 = vmatpush1.bf16.msra.mxu0 0
      %830 = vmatprep.subr.bf16.mxu0 0
      %831 = vmatpush1.bf16.msra.mxu0 0
      %832 = vmatprep.subr.bf16.mxu0 0
      %833 = vmatpush1.bf16.msra.mxu0 0
      %834 = vmatprep.subr.bf16.mxu0 0
      %835 = vmatpush1.bf16.msra.mxu0 0
      %836 = vmatprep.subr.bf16.mxu0 0
      %837 = vmatpush1.bf16.msra.mxu0 0
      %838 = vmatprep.subr.bf16.mxu0 0
      %839 = vmatpush1.bf16.msra.mxu0 0
      %840 = vmatprep.subr.bf16.mxu0 0
      %841 = vmatpush1.bf16.msra.mxu0 0
      %842 = vmatprep.subr.bf16.mxu0 0
      %843 = vmatpush1.bf16.msra.mxu0 0
      %844 = vmatprep.subr.bf16.mxu0 0
      %845 = vmatpush1.bf16.msra.mxu0 0
      %846 = vmatprep.subr.bf16.mxu0 0
      %847 = vmatpush1.bf16.msra.mxu0 0
      %848 = vmatprep.subr.bf16.mxu0 0
      %849 = vmatpush1.bf16.msra.mxu0 0
      %850 = vmatprep.mubr.bf16.mxu0 0
      %851 = vmatmul.mubr.bf16.gmra.mrb[0].mxu0 %v803
      %v852 = vpop.f32.mrb[0].mxu0
      %v853 = vadd.f32 0.0, %v852
      %v854 = vpop.f32.mrb[0].mxu0
      %v855 = vpop.f32.mrb[0].mxu0
      %v856 = vadd.f32 0.0, %v855
      %v857 = vpop.f32.mrb[0].mxu0
      %858 = vmatprep.mubr.bf16.mxu0 0
      %859 = vmatmul.mubr.bf16.gmra.mrb[0].mxu0 %v806
      %v860 = vpop.f32.mrb[0].mxu0
      %v861 = vadd.f32 0.0, %v860
      %v862 = vpop.f32.mrb[0].mxu0
      %v863 = vpop.f32.mrb[0].mxu0
      %v864 = vadd.f32 0.0, %v863
      %v865 = vpop.f32.mrb[0].mxu0
      %866 = vmatprep.mubr.bf16.mxu0 0
      %867 = vmatmul.mubr.bf16.gmra.mrb[0].mxu0 %v809
      %v868 = vpop.f32.mrb[0].mxu0
      %v869 = vadd.f32 0.0, %v868
      %v870 = vpop.f32.mrb[0].mxu0
      %v871 = vpop.f32.mrb[0].mxu0
      %v872 = vadd.f32 0.0, %v871
      %v873 = vpop.f32.mrb[0].mxu0
      %874 = vmatprep.mubr.bf16.mxu0 0
      %875 = vmatmul.mubr.bf16.gmra.mrb[0].mxu0 %v812
      %v876 = vpop.f32.mrb[0].mxu0
      %v877 = vadd.f32 0.0, %v876
      %v878 = vpop.f32.mrb[0].mxu0
      %v879 = vpop.f32.mrb[0].mxu0
      %v880 = vadd.f32 0.0, %v879
      %v881 = vpop.f32.mrb[0].mxu0
      %882 = vdwg.mxu0
      %v884 = vsel %vm743, %v782, 0
      %v887 = vsel %vm743, %v783, 0
      %v890 = vsel %vm743, %v784, 0
      %v893 = vsel %vm743, %v785, 0
      %v896 = vsel %vm814, %v787, 0
      %898 = vmatprep.subr.bf16.mxu0 0
      %899 = vmatpush1.bf16.msra.mxu0 %v896
      %900 = vmatprep.subr.bf16.mxu0 0
      %901 = vmatpush1.bf16.msra.mxu0 0
      %902 = vmatprep.subr.bf16.mxu0 0
      %903 = vmatpush1.bf16.msra.mxu0 0
      %904 = vmatprep.subr.bf16.mxu0 0
      %905 = vmatpush1.bf16.msra.mxu0 0
      %906 = vmatprep.subr.bf16.mxu0 0
      %907 = vmatpush1.bf16.msra.mxu0 0
      %908 = vmatprep.subr.bf16.mxu0 0
      %909 = vmatpush1.bf16.msra.mxu0 0
      %910 = vmatprep.subr.bf16.mxu0 0
      %911 = vmatpush1.bf16.msra.mxu0 0
      %912 = vmatprep.subr.bf16.mxu0 0
      %913 = vmatpush1.bf16.msra.mxu0 0
      %914 = vmatprep.subr.bf16.mxu0 0
      %915 = vmatpush1.bf16.msra.mxu0 0
      %916 = vmatprep.subr.bf16.mxu0 0
      %917 = vmatpush1.bf16.msra.mxu0 0
      %918 = vmatprep.subr.bf16.mxu0 0
      %919 = vmatpush1.bf16.msra.mxu0 0
      %920 = vmatprep.subr.bf16.mxu0 0
      %921 = vmatpush1.bf16.msra.mxu0 0
      %922 = vmatprep.subr.bf16.mxu0 0
      %923 = vmatpush1.bf16.msra.mxu0 0
      %924 = vmatprep.subr.bf16.mxu0 0
      %925 = vmatpush1.bf16.msra.mxu0 0
      %926 = vmatprep.subr.bf16.mxu0 0
      %927 = vmatpush1.bf16.msra.mxu0 0
      %928 = vmatprep.subr.bf16.mxu0 0
      %929 = vmatpush1.bf16.msra.mxu0 0
      %930 = vmatprep.mubr.bf16.mxu0 0
      %931 = vmatmul.mubr.bf16.gmra.mrb[0].mxu0 %v884
      %v932 = vpop.f32.mrb[0].mxu0
      %v933 = vadd.f32 %v853, %v932
      %v934 = vpop.f32.mrb[0].mxu0
      %v935 = vpop.f32.mrb[0].mxu0
      %v936 = vadd.f32 %v856, %v935
      %v937 = vpop.f32.mrb[0].mxu0
      %938 = vmatprep.mubr.bf16.mxu0 0
      %939 = vmatmul.mubr.bf16.gmra.mrb[0].mxu0 %v887
      %v940 = vpop.f32.mrb[0].mxu0
      %v941 = vadd.f32 %v861, %v940
      %v942 = vpop.f32.mrb[0].mxu0
      %v943 = vpop.f32.mrb[0].mxu0
      %v944 = vadd.f32 %v864, %v943
      %v945 = vpop.f32.mrb[0].mxu0
      %946 = vmatprep.mubr.bf16.mxu0 0
      %947 = vmatmul.mubr.bf16.gmra.mrb[0].mxu0 %v890
      %v948 = vpop.f32.mrb[0].mxu0
      %v949 = vadd.f32 %v869, %v948
      %v950 = vpop.f32.mrb[0].mxu0
      %v951 = vpop.f32.mrb[0].mxu0
      %v952 = vadd.f32 %v872, %v951
      %v953 = vpop.f32.mrb[0].mxu0
      %954 = vmatprep.mubr.bf16.mxu0 0
      %955 = vmatmul.mubr.bf16.gmra.mrb[0].mxu0 %v893
      %v956 = vpop.f32.mrb[0].mxu0
      %v957 = vadd.f32 %v877, %v956
      %v958 = vpop.f32.mrb[0].mxu0
      %v959 = vpop.f32.mrb[0].mxu0
      %v960 = vadd.f32 %v880, %v959
      %v961 = vpop.f32.mrb[0].mxu0
      %962 = vdwg.mxu0
      %v963 = vld [vmem:[#allocation2 + $0x1] sm:$0xff]
      %v964 = vld [vmem:[#allocation2 + $0x11] sm:$0xff]
      %v965 = vld [vmem:[#allocation2 + $0x21] sm:$0xff]
      %v966 = vld [vmem:[#allocation2 + $0x31] sm:$0xff]
      %v967 = vld [vmem:[#allocation2 + $0x41] sm:$0xff]
      %v968 = vld [vmem:[#allocation2 + $0x51] sm:$0xff]
      %v969 = vld [vmem:[#allocation2 + $0x61] sm:$0xff]
      %v970 = vld [vmem:[#allocation2 + $0x71] sm:$0xff]
      %v971 = vpack.c.bf16 %v964, %v963
      %v972 = vpack.c.bf16 %v966, %v965
      %v973 = vpack.c.bf16 %v968, %v967
      %v974 = vpack.c.bf16 %v970, %v969
      %s975 = scalar_lea.vmem %s3, 52
      %v976 = vld [vmem:[%s975] sm:$0xf]
      %v978 = vsel %vm743, %v971, 0
      %v981 = vsel %vm743, %v972, 0
      %v984 = vsel %vm743, %v973, 0
      %v987 = vsel %vm743, %v974, 0
      %v990 = vsel %vm814, %v976, 0
      %992 = vmatprep.subr.bf16.mxu0 0
      %993 = vmatpush1.bf16.msra.mxu0 %v990
      %994 = vmatprep.subr.bf16.mxu0 0
      %995 = vmatpush1.bf16.msra.mxu0 0
      %996 = vmatprep.subr.bf16.mxu0 0
      %997 = vmatpush1.bf16.msra.mxu0 0
      %998 = vmatprep.subr.bf16.mxu0 0
      %999 = vmatpush1.bf16.msra.mxu0 0
      %1000 = vmatprep.subr.bf16.mxu0 0
      %1001 = vmatpush1.bf16.msra.mxu0 0
      %1002 = vmatprep.subr.bf16.mxu0 0
      %1003 = vmatpush1.bf16.msra.mxu0 0
      %1004 = vmatprep.subr.bf16.mxu0 0
      %1005 = vmatpush1.bf16.msra.mxu0 0
      %1006 = vmatprep.subr.bf16.mxu0 0
      %1007 = vmatpush1.bf16.msra.mxu0 0
      %1008 = vmatprep.subr.bf16.mxu0 0
      %1009 = vmatpush1.bf16.msra.mxu0 0
      %1010 = vmatprep.subr.bf16.mxu0 0
      %1011 = vmatpush1.bf16.msra.mxu0 0
      %1012 = vmatprep.subr.bf16.mxu0 0
      %1013 = vmatpush1.bf16.msra.mxu0 0
      %1014 = vmatprep.subr.bf16.mxu0 0
      %1015 = vmatpush1.bf16.msra.mxu0 0
      %1016 = vmatprep.subr.bf16.mxu0 0
      %1017 = vmatpush1.bf16.msra.mxu0 0
      %1018 = vmatprep.subr.bf16.mxu0 0
      %1019 = vmatpush1.bf16.msra.mxu0 0
      %1020 = vmatprep.subr.bf16.mxu0 0
      %1021 = vmatpush1.bf16.msra.mxu0 0
      %1022 = vmatprep.subr.bf16.mxu0 0
      %1023 = vmatpush1.bf16.msra.mxu0 0
      %1024 = vmatprep.mubr.bf16.mxu0 0
      %1025 = vmatmul.mubr.bf16.gmra.mrb[0].mxu0 %v978
      %v1026 = vpop.f32.mrb[0].mxu0
      %v1027 = vadd.f32 0.0, %v1026
      %v1028 = vpop.f32.mrb[0].mxu0
      %v1029 = vpop.f32.mrb[0].mxu0
      %v1030 = vadd.f32 0.0, %v1029
      %v1031 = vpop.f32.mrb[0].mxu0
      %1032 = vmatprep.mubr.bf16.mxu0 0
      %1033 = vmatmul.mubr.bf16.gmra.mrb[0].mxu0 %v981
      %v1034 = vpop.f32.mrb[0].mxu0
      %v1035 = vadd.f32 0.0, %v1034
      %v1036 = vpop.f32.mrb[0].mxu0
      %v1037 = vpop.f32.mrb[0].mxu0
      %v1038 = vadd.f32 0.0, %v1037
      %v1039 = vpop.f32.mrb[0].mxu0
      %1040 = vmatprep.mubr.bf16.mxu0 0
      %1041 = vmatmul.mubr.bf16.gmra.mrb[0].mxu0 %v984
      %v1042 = vpop.f32.mrb[0].mxu0
      %v1043 = vadd.f32 0.0, %v1042
      %v1044 = vpop.f32.mrb[0].mxu0
      %v1045 = vpop.f32.mrb[0].mxu0
      %v1046 = vadd.f32 0.0, %v1045
      %v1047 = vpop.f32.mrb[0].mxu0
      %1048 = vmatprep.mubr.bf16.mxu0 0
      %1049 = vmatmul.mubr.bf16.gmra.mrb[0].mxu0 %v987
      %v1050 = vpop.f32.mrb[0].mxu0
      %v1051 = vadd.f32 0.0, %v1050
      %v1052 = vpop.f32.mrb[0].mxu0
      %v1053 = vpop.f32.mrb[0].mxu0
      %v1054 = vadd.f32 0.0, %v1053
      %v1055 = vpop.f32.mrb[0].mxu0
      %1056 = vdwg.mxu0
      %v1057 = vadd.f32 %v933, %v1027
      %v1058 = vadd.f32 %v936, %v1030
      %v1059 = vadd.f32 %v941, %v1035
      %v1060 = vadd.f32 %v944, %v1038
      %v1061 = vadd.f32 %v949, %v1043
      %v1062 = vadd.f32 %v952, %v1046
      %v1063 = vadd.f32 %v957, %v1051
      %v1064 = vadd.f32 %v960, %v1054
      %v1065 = vld [vmem:[#allocation2] sm:$0xff]
      %v1066 = vld [vmem:[#allocation2 + $0x10] sm:$0xff]
      %v1067 = vld [vmem:[#allocation2 + $0x20] sm:$0xff]
      %v1068 = vld [vmem:[#allocation2 + $0x30] sm:$0xff]
      %v1069 = vld [vmem:[#allocation2 + $0x40] sm:$0xff]
      %v1070 = vld [vmem:[#allocation2 + $0x50] sm:$0xff]
      %v1071 = vld [vmem:[#allocation2 + $0x60] sm:$0xff]
      %v1072 = vld [vmem:[#allocation2 + $0x70] sm:$0xff]
      %v1073 = vpack.c.bf16 %v1066, %v1065
      %v1074 = vpack.c.bf16 %v1068, %v1067
      %v1075 = vpack.c.bf16 %v1070, %v1069
      %v1076 = vpack.c.bf16 %v1072, %v1071
      %s1077 = scalar_lea.vmem %s3, 60
      %v1078 = vld [vmem:[%s1077] sm:$0xf]
      %v1080 = vsel %vm743, %v1073, 0
      %v1083 = vsel %vm743, %v1074, 0
      %v1086 = vsel %vm743, %v1075, 0
      %v1089 = vsel %vm743, %v1076, 0
      %v1092 = vsel %vm814, %v1078, 0
      %1094 = vmatprep.subr.bf16.mxu0 0
      %1095 = vmatpush1.bf16.msra.mxu0 %v1092
      %1096 = vmatprep.subr.bf16.mxu0 0
      %1097 = vmatpush1.bf16.msra.mxu0 0
      %1098 = vmatprep.subr.bf16.mxu0 0
      %1099 = vmatpush1.bf16.msra.mxu0 0
      %1100 = vmatprep.subr.bf16.mxu0 0
      %1101 = vmatpush1.bf16.msra.mxu0 0
      %1102 = vmatprep.subr.bf16.mxu0 0
      %1103 = vmatpush1.bf16.msra.mxu0 0
      %1104 = vmatprep.subr.bf16.mxu0 0
      %1105 = vmatpush1.bf16.msra.mxu0 0
      %1106 = vmatprep.subr.bf16.mxu0 0
      %1107 = vmatpush1.bf16.msra.mxu0 0
      %1108 = vmatprep.subr.bf16.mxu0 0
      %1109 = vmatpush1.bf16.msra.mxu0 0
      %1110 = vmatprep.subr.bf16.mxu0 0
      %1111 = vmatpush1.bf16.msra.mxu0 0
      %1112 = vmatprep.subr.bf16.mxu0 0
      %1113 = vmatpush1.bf16.msra.mxu0 0
      %1114 = vmatprep.subr.bf16.mxu0 0
      %1115 = vmatpush1.bf16.msra.mxu0 0
      %1116 = vmatprep.subr.bf16.mxu0 0
      %1117 = vmatpush1.bf16.msra.mxu0 0
      %1118 = vmatprep.subr.bf16.mxu0 0
      %1119 = vmatpush1.bf16.msra.mxu0 0
      %1120 = vmatprep.subr.bf16.mxu0 0
      %1121 = vmatpush1.bf16.msra.mxu0 0
      %1122 = vmatprep.subr.bf16.mxu0 0
      %1123 = vmatpush1.bf16.msra.mxu0 0
      %1124 = vmatprep.subr.bf16.mxu0 0
      %1125 = vmatpush1.bf16.msra.mxu0 0
      %1126 = vmatprep.mubr.bf16.mxu0 0
      %1127 = vmatmul.mubr.bf16.gmra.mrb[0].mxu0 %v1080
      %v1128 = vpop.f32.mrb[0].mxu0
      %v1129 = vadd.f32 0.0, %v1128
      %v1130 = vpop.f32.mrb[0].mxu0
      %v1131 = vpop.f32.mrb[0].mxu0
      %v1132 = vadd.f32 0.0, %v1131
      %v1133 = vpop.f32.mrb[0].mxu0
      %1134 = vmatprep.mubr.bf16.mxu0 0
      %1135 = vmatmul.mubr.bf16.gmra.mrb[0].mxu0 %v1083
      %v1136 = vpop.f32.mrb[0].mxu0
      %v1137 = vadd.f32 0.0, %v1136
      %v1138 = vpop.f32.mrb[0].mxu0
      %v1139 = vpop.f32.mrb[0].mxu0
      %v1140 = vadd.f32 0.0, %v1139
      %v1141 = vpop.f32.mrb[0].mxu0
      %1142 = vmatprep.mubr.bf16.mxu0 0
      %1143 = vmatmul.mubr.bf16.gmra.mrb[0].mxu0 %v1086
      %v1144 = vpop.f32.mrb[0].mxu0
      %v1145 = vadd.f32 0.0, %v1144
      %v1146 = vpop.f32.mrb[0].mxu0
      %v1147 = vpop.f32.mrb[0].mxu0
      %v1148 = vadd.f32 0.0, %v1147
      %v1149 = vpop.f32.mrb[0].mxu0
      %1150 = vmatprep.mubr.bf16.mxu0 0
      %1151 = vmatmul.mubr.bf16.gmra.mrb[0].mxu0 %v1089
      %v1152 = vpop.f32.mrb[0].mxu0
      %v1153 = vadd.f32 0.0, %v1152
      %v1154 = vpop.f32.mrb[0].mxu0
      %v1155 = vpop.f32.mrb[0].mxu0
      %v1156 = vadd.f32 0.0, %v1155
      %v1157 = vpop.f32.mrb[0].mxu0
      %1158 = vdwg.mxu0
      %v1159 = vadd.f32 %v1057, %v1129
      %v1160 = vadd.f32 %v1058, %v1132
      %v1161 = vadd.f32 %v1059, %v1137
      %v1162 = vadd.f32 %v1060, %v1140
      %v1163 = vadd.f32 %v1061, %v1145
      %v1164 = vadd.f32 %v1062, %v1148
      %v1165 = vadd.f32 %v1063, %v1153
      %v1166 = vadd.f32 %v1064, %v1156
      %v1167 = vld [vmem:[%s765 + $0x2] sm:$0xff]
      %v1168 = vld [vmem:[%s765 + $0x12] sm:$0xff]
      %v1169 = vld [vmem:[%s765 + $0x22] sm:$0xff]
      %v1170 = vld [vmem:[%s765 + $0x32] sm:$0xff]
      %v1171 = vld [vmem:[%s765 + $0x42] sm:$0xff]
      %v1172 = vld [vmem:[%s765 + $0x52] sm:$0xff]
      %v1173 = vld [vmem:[%s765 + $0x62] sm:$0xff]
      %v1174 = vld [vmem:[%s765 + $0x72] sm:$0xff]
      %v1175 = vpack.c.bf16 %v1168, %v1167
      %v1176 = vpack.c.bf16 %v1170, %v1169
      %v1177 = vpack.c.bf16 %v1172, %v1171
      %v1178 = vpack.c.bf16 %v1174, %v1173
      %s1179 = scalar_lea.vmem %s3, 16
      %v1180 = vld [vmem:[%s1179] sm:$0xf]
      %s1181 = scalar_lea.vmem %s3, 24
      %v1182 = vld [vmem:[%s1181] sm:$0xf]
      %v1184 = vsel %vm814, %v1182, 0
      %1186 = vmatprep.subr.bf16.mxu0 0
      %1187 = vmatpush1.bf16.msra.mxu0 %v1184
      %1188 = vmatprep.subr.bf16.mxu0 0
      %1189 = vmatpush1.bf16.msra.mxu0 0
      %1190 = vmatprep.subr.bf16.mxu0 0
      %1191 = vmatpush1.bf16.msra.mxu0 0
      %1192 = vmatprep.subr.bf16.mxu0 0
      %1193 = vmatpush1.bf16.msra.mxu0 0
      %1194 = vmatprep.subr.bf16.mxu0 0
      %1195 = vmatpush1.bf16.msra.mxu0 0
      %1196 = vmatprep.subr.bf16.mxu0 0
      %1197 = vmatpush1.bf16.msra.mxu0 0
      %1198 = vmatprep.subr.bf16.mxu0 0
      %1199 = vmatpush1.bf16.msra.mxu0 0
      %1200 = vmatprep.subr.bf16.mxu0 0
      %1201 = vmatpush1.bf16.msra.mxu0 0
      %1202 = vmatprep.subr.bf16.mxu0 0
      %1203 = vmatpush1.bf16.msra.mxu0 0
      %1204 = vmatprep.subr.bf16.mxu0 0
      %1205 = vmatpush1.bf16.msra.mxu0 0
      %1206 = vmatprep.subr.bf16.mxu0 0
      %1207 = vmatpush1.bf16.msra.mxu0 0
      %1208 = vmatprep.subr.bf16.mxu0 0
      %1209 = vmatpush1.bf16.msra.mxu0 0
      %1210 = vmatprep.subr.bf16.mxu0 0
      %1211 = vmatpush1.bf16.msra.mxu0 0
      %1212 = vmatprep.subr.bf16.mxu0 0
      %1213 = vmatpush1.bf16.msra.mxu0 0
      %1214 = vmatprep.subr.bf16.mxu0 0
      %1215 = vmatpush1.bf16.msra.mxu0 0
      %1216 = vmatprep.subr.bf16.mxu0 0
      %1217 = vmatpush1.bf16.msra.mxu0 0
      %1218 = vmatprep.mubr.bf16.mxu0 0
      %1219 = vmatmul.mubr.bf16.gmra.mrb[0].mxu0 %v884
      %v1220 = vpop.f32.mrb[0].mxu0
      %v1221 = vadd.f32 0.0, %v1220
      %v1222 = vpop.f32.mrb[0].mxu0
      %v1223 = vpop.f32.mrb[0].mxu0
      %v1224 = vadd.f32 0.0, %v1223
      %v1225 = vpop.f32.mrb[0].mxu0
      %1226 = vmatprep.mubr.bf16.mxu0 0
      %1227 = vmatmul.mubr.bf16.gmra.mrb[0].mxu0 %v887
      %v1228 = vpop.f32.mrb[0].mxu0
      %v1229 = vadd.f32 0.0, %v1228
      %v1230 = vpop.f32.mrb[0].mxu0
      %v1231 = vpop.f32.mrb[0].mxu0
      %v1232 = vadd.f32 0.0, %v1231
      %v1233 = vpop.f32.mrb[0].mxu0
      %1234 = vmatprep.mubr.bf16.mxu0 0
      %1235 = vmatmul.mubr.bf16.gmra.mrb[0].mxu0 %v890
      %v1236 = vpop.f32.mrb[0].mxu0
      %v1237 = vadd.f32 0.0, %v1236
      %v1238 = vpop.f32.mrb[0].mxu0
      %v1239 = vpop.f32.mrb[0].mxu0
      %v1240 = vadd.f32 0.0, %v1239
      %v1241 = vpop.f32.mrb[0].mxu0
      %1242 = vmatprep.mubr.bf16.mxu0 0
      %1243 = vmatmul.mubr.bf16.gmra.mrb[0].mxu0 %v893
      %v1244 = vpop.f32.mrb[0].mxu0
      %v1245 = vadd.f32 0.0, %v1244
      %v1246 = vpop.f32.mrb[0].mxu0
      %v1247 = vpop.f32.mrb[0].mxu0
      %v1248 = vadd.f32 0.0, %v1247
      %v1249 = vpop.f32.mrb[0].mxu0
      %1250 = vdwg.mxu0
      %v1252 = vsel %vm743, %v1175, 0
      %v1255 = vsel %vm743, %v1176, 0
      %v1258 = vsel %vm743, %v1177, 0
      %v1261 = vsel %vm743, %v1178, 0
      %v1264 = vsel %vm814, %v1180, 0
      %1266 = vmatprep.subr.bf16.mxu0 0
      %1267 = vmatpush1.bf16.msra.mxu0 %v1264
      %1268 = vmatprep.subr.bf16.mxu0 0
      %1269 = vmatpush1.bf16.msra.mxu0 0
      %1270 = vmatprep.subr.bf16.mxu0 0
      %1271 = vmatpush1.bf16.msra.mxu0 0
      %1272 = vmatprep.subr.bf16.mxu0 0
      %1273 = vmatpush1.bf16.msra.mxu0 0
      %1274 = vmatprep.subr.bf16.mxu0 0
      %1275 = vmatpush1.bf16.msra.mxu0 0
      %1276 = vmatprep.subr.bf16.mxu0 0
      %1277 = vmatpush1.bf16.msra.mxu0 0
      %1278 = vmatprep.subr.bf16.mxu0 0
      %1279 = vmatpush1.bf16.msra.mxu0 0
      %1280 = vmatprep.subr.bf16.mxu0 0
      %1281 = vmatpush1.bf16.msra.mxu0 0
      %1282 = vmatprep.subr.bf16.mxu0 0
      %1283 = vmatpush1.bf16.msra.mxu0 0
      %1284 = vmatprep.subr.bf16.mxu0 0
      %1285 = vmatpush1.bf16.msra.mxu0 0
      %1286 = vmatprep.subr.bf16.mxu0 0
      %1287 = vmatpush1.bf16.msra.mxu0 0
      %1288 = vmatprep.subr.bf16.mxu0 0
      %1289 = vmatpush1.bf16.msra.mxu0 0
      %1290 = vmatprep.subr.bf16.mxu0 0
      %1291 = vmatpush1.bf16.msra.mxu0 0
      %1292 = vmatprep.subr.bf16.mxu0 0
      %1293 = vmatpush1.bf16.msra.mxu0 0
      %1294 = vmatprep.subr.bf16.mxu0 0
      %1295 = vmatpush1.bf16.msra.mxu0 0
      %1296 = vmatprep.subr.bf16.mxu0 0
      %1297 = vmatpush1.bf16.msra.mxu0 0
      %1298 = vmatprep.mubr.bf16.mxu0 0
      %1299 = vmatmul.mubr.bf16.gmra.mrb[0].mxu0 %v1252
      %v1300 = vpop.f32.mrb[0].mxu0
      %v1301 = vadd.f32 %v1221, %v1300
      %v1302 = vpop.f32.mrb[0].mxu0
      %v1303 = vpop.f32.mrb[0].mxu0
      %v1304 = vadd.f32 %v1224, %v1303
      %v1305 = vpop.f32.mrb[0].mxu0
      %1306 = vmatprep.mubr.bf16.mxu0 0
      %1307 = vmatmul.mubr.bf16.gmra.mrb[0].mxu0 %v1255
      %v1308 = vpop.f32.mrb[0].mxu0
      %v1309 = vadd.f32 %v1229, %v1308
      %v1310 = vpop.f32.mrb[0].mxu0
      %v1311 = vpop.f32.mrb[0].mxu0
      %v1312 = vadd.f32 %v1232, %v1311
      %v1313 = vpop.f32.mrb[0].mxu0
      %1314 = vmatprep.mubr.bf16.mxu0 0
      %1315 = vmatmul.mubr.bf16.gmra.mrb[0].mxu0 %v1258
      %v1316 = vpop.f32.mrb[0].mxu0
      %v1317 = vadd.f32 %v1237, %v1316
      %v1318 = vpop.f32.mrb[0].mxu0
      %v1319 = vpop.f32.mrb[0].mxu0
      %v1320 = vadd.f32 %v1240, %v1319
      %v1321 = vpop.f32.mrb[0].mxu0
      %1322 = vmatprep.mubr.bf16.mxu0 0
      %1323 = vmatmul.mubr.bf16.gmra.mrb[0].mxu0 %v1261
      %v1324 = vpop.f32.mrb[0].mxu0
      %v1325 = vadd.f32 %v1245, %v1324
      %v1326 = vpop.f32.mrb[0].mxu0
      %v1327 = vpop.f32.mrb[0].mxu0
      %v1328 = vadd.f32 %v1248, %v1327
      %v1329 = vpop.f32.mrb[0].mxu0
      %1330 = vdwg.mxu0
      %v1331 = vld [vmem:[#allocation2 + $0x2] sm:$0xff]
      %v1332 = vld [vmem:[#allocation2 + $0x12] sm:$0xff]
      %v1333 = vld [vmem:[#allocation2 + $0x22] sm:$0xff]
      %v1334 = vld [vmem:[#allocation2 + $0x32] sm:$0xff]
      %v1335 = vld [vmem:[#allocation2 + $0x42] sm:$0xff]
      %v1336 = vld [vmem:[#allocation2 + $0x52] sm:$0xff]
      %v1337 = vld [vmem:[#allocation2 + $0x62] sm:$0xff]
      %v1338 = vld [vmem:[#allocation2 + $0x72] sm:$0xff]
      %v1339 = vpack.c.bf16 %v1332, %v1331
      %v1340 = vpack.c.bf16 %v1334, %v1333
      %v1341 = vpack.c.bf16 %v1336, %v1335
      %v1342 = vpack.c.bf16 %v1338, %v1337
      %s1343 = scalar_lea.vmem %s3, 48
      %v1344 = vld [vmem:[%s1343] sm:$0xf]
      %v1346 = vsel %vm743, %v1339, 0
      %v1349 = vsel %vm743, %v1340, 0
      %v1352 = vsel %vm743, %v1341, 0
      %v1355 = vsel %vm743, %v1342, 0
      %v1358 = vsel %vm814, %v1344, 0
      %1360 = vmatprep.subr.bf16.mxu0 0
      %1361 = vmatpush1.bf16.msra.mxu0 %v1358
      %1362 = vmatprep.subr.bf16.mxu0 0
      %1363 = vmatpush1.bf16.msra.mxu0 0
      %1364 = vmatprep.subr.bf16.mxu0 0
      %1365 = vmatpush1.bf16.msra.mxu0 0
      %1366 = vmatprep.subr.bf16.mxu0 0
      %1367 = vmatpush1.bf16.msra.mxu0 0
      %1368 = vmatprep.subr.bf16.mxu0 0
      %1369 = vmatpush1.bf16.msra.mxu0 0
      %1370 = vmatprep.subr.bf16.mxu0 0
      %1371 = vmatpush1.bf16.msra.mxu0 0
      %1372 = vmatprep.subr.bf16.mxu0 0
      %1373 = vmatpush1.bf16.msra.mxu0 0
      %1374 = vmatprep.subr.bf16.mxu0 0
      %1375 = vmatpush1.bf16.msra.mxu0 0
      %1376 = vmatprep.subr.bf16.mxu0 0
      %1377 = vmatpush1.bf16.msra.mxu0 0
      %1378 = vmatprep.subr.bf16.mxu0 0
      %1379 = vmatpush1.bf16.msra.mxu0 0
      %1380 = vmatprep.subr.bf16.mxu0 0
      %1381 = vmatpush1.bf16.msra.mxu0 0
      %1382 = vmatprep.subr.bf16.mxu0 0
      %1383 = vmatpush1.bf16.msra.mxu0 0
      %1384 = vmatprep.subr.bf16.mxu0 0
      %1385 = vmatpush1.bf16.msra.mxu0 0
      %1386 = vmatprep.subr.bf16.mxu0 0
      %1387 = vmatpush1.bf16.msra.mxu0 0
      %1388 = vmatprep.subr.bf16.mxu0 0
      %1389 = vmatpush1.bf16.msra.mxu0 0
      %1390 = vmatprep.subr.bf16.mxu0 0
      %1391 = vmatpush1.bf16.msra.mxu0 0
      %1392 = vmatprep.mubr.bf16.mxu0 0
      %1393 = vmatmul.mubr.bf16.gmra.mrb[0].mxu0 %v1346
      %v1394 = vpop.f32.mrb[0].mxu0
      %v1395 = vadd.f32 0.0, %v1394
      %v1396 = vpop.f32.mrb[0].mxu0
      %v1397 = vpop.f32.mrb[0].mxu0
      %v1398 = vadd.f32 0.0, %v1397
      %v1399 = vpop.f32.mrb[0].mxu0
      %1400 = vmatprep.mubr.bf16.mxu0 0
      %1401 = vmatmul.mubr.bf16.gmra.mrb[0].mxu0 %v1349
      %v1402 = vpop.f32.mrb[0].mxu0
      %v1403 = vadd.f32 0.0, %v1402
      %v1404 = vpop.f32.mrb[0].mxu0
      %v1405 = vpop.f32.mrb[0].mxu0
      %v1406 = vadd.f32 0.0, %v1405
      %v1407 = vpop.f32.mrb[0].mxu0
      %1408 = vmatprep.mubr.bf16.mxu0 0
      %1409 = vmatmul.mubr.bf16.gmra.mrb[0].mxu0 %v1352
      %v1410 = vpop.f32.mrb[0].mxu0
      %v1411 = vadd.f32 0.0, %v1410
      %v1412 = vpop.f32.mrb[0].mxu0
      %v1413 = vpop.f32.mrb[0].mxu0
      %v1414 = vadd.f32 0.0, %v1413
      %v1415 = vpop.f32.mrb[0].mxu0
      %1416 = vmatprep.mubr.bf16.mxu0 0
      %1417 = vmatmul.mubr.bf16.gmra.mrb[0].mxu0 %v1355
      %v1418 = vpop.f32.mrb[0].mxu0
      %v1419 = vadd.f32 0.0, %v1418
      %v1420 = vpop.f32.mrb[0].mxu0
      %v1421 = vpop.f32.mrb[0].mxu0
      %v1422 = vadd.f32 0.0, %v1421
      %v1423 = vpop.f32.mrb[0].mxu0
      %1424 = vdwg.mxu0
      %v1425 = vadd.f32 %v1301, %v1395
      %v1426 = vadd.f32 %v1304, %v1398
      %v1427 = vadd.f32 %v1309, %v1403
      %v1428 = vadd.f32 %v1312, %v1406
      %v1429 = vadd.f32 %v1317, %v1411
      %v1430 = vadd.f32 %v1320, %v1414
      %v1431 = vadd.f32 %v1325, %v1419
      %v1432 = vadd.f32 %v1328, %v1422
      %s1433 = scalar_lea.vmem %s3, 56
      %v1434 = vld [vmem:[%s1433] sm:$0xf]
      %v1436 = vsel %vm814, %v1434, 0
      %1438 = vmatprep.subr.bf16.mxu0 0
      %1439 = vmatpush1.bf16.msra.mxu0 %v1436
      %1440 = vmatprep.subr.bf16.mxu0 0
      %1441 = vmatpush1.bf16.msra.mxu0 0
      %1442 = vmatprep.subr.bf16.mxu0 0
      %1443 = vmatpush1.bf16.msra.mxu0 0
      %1444 = vmatprep.subr.bf16.mxu0 0
      %1445 = vmatpush1.bf16.msra.mxu0 0
      %1446 = vmatprep.subr.bf16.mxu0 0
      %1447 = vmatpush1.bf16.msra.mxu0 0
      %1448 = vmatprep.subr.bf16.mxu0 0
      %1449 = vmatpush1.bf16.msra.mxu0 0
      %1450 = vmatprep.subr.bf16.mxu0 0
      %1451 = vmatpush1.bf16.msra.mxu0 0
      %1452 = vmatprep.subr.bf16.mxu0 0
      %1453 = vmatpush1.bf16.msra.mxu0 0
      %1454 = vmatprep.subr.bf16.mxu0 0
      %1455 = vmatpush1.bf16.msra.mxu0 0
      %1456 = vmatprep.subr.bf16.mxu0 0
      %1457 = vmatpush1.bf16.msra.mxu0 0
      %1458 = vmatprep.subr.bf16.mxu0 0
      %1459 = vmatpush1.bf16.msra.mxu0 0
      %1460 = vmatprep.subr.bf16.mxu0 0
      %1461 = vmatpush1.bf16.msra.mxu0 0
      %1462 = vmatprep.subr.bf16.mxu0 0
      %1463 = vmatpush1.bf16.msra.mxu0 0
      %1464 = vmatprep.subr.bf16.mxu0 0
      %1465 = vmatpush1.bf16.msra.mxu0 0
      %1466 = vmatprep.subr.bf16.mxu0 0
      %1467 = vmatpush1.bf16.msra.mxu0 0
      %1468 = vmatprep.subr.bf16.mxu0 0
      %1469 = vmatpush1.bf16.msra.mxu0 0
      %1470 = vmatprep.mubr.bf16.mxu0 0
      %1471 = vmatmul.mubr.bf16.gmra.mrb[0].mxu0 %v978
      %v1472 = vpop.f32.mrb[0].mxu0
      %v1473 = vadd.f32 0.0, %v1472
      %v1474 = vpop.f32.mrb[0].mxu0
      %v1475 = vpop.f32.mrb[0].mxu0
      %v1476 = vadd.f32 0.0, %v1475
      %v1477 = vpop.f32.mrb[0].mxu0
      %1478 = vmatprep.mubr.bf16.mxu0 0
      %1479 = vmatmul.mubr.bf16.gmra.mrb[0].mxu0 %v981
      %v1480 = vpop.f32.mrb[0].mxu0
      %v1481 = vadd.f32 0.0, %v1480
      %v1482 = vpop.f32.mrb[0].mxu0
      %v1483 = vpop.f32.mrb[0].mxu0
      %v1484 = vadd.f32 0.0, %v1483
      %v1485 = vpop.f32.mrb[0].mxu0
      %1486 = vmatprep.mubr.bf16.mxu0 0
      %1487 = vmatmul.mubr.bf16.gmra.mrb[0].mxu0 %v984
      %v1488 = vpop.f32.mrb[0].mxu0
      %v1489 = vadd.f32 0.0, %v1488
      %v1490 = vpop.f32.mrb[0].mxu0
      %v1491 = vpop.f32.mrb[0].mxu0
      %v1492 = vadd.f32 0.0, %v1491
      %v1493 = vpop.f32.mrb[0].mxu0
      %1494 = vmatprep.mubr.bf16.mxu0 0
      %1495 = vmatmul.mubr.bf16.gmra.mrb[0].mxu0 %v987
      %v1496 = vpop.f32.mrb[0].mxu0
      %v1497 = vadd.f32 0.0, %v1496
      %v1498 = vpop.f32.mrb[0].mxu0
      %v1499 = vpop.f32.mrb[0].mxu0
      %v1500 = vadd.f32 0.0, %v1499
      %v1501 = vpop.f32.mrb[0].mxu0
      %1502 = vdwg.mxu0
      %v1503 = vadd.f32 %v1425, %v1473
      %v1504 = vadd.f32 %v1426, %v1476
      %v1505 = vadd.f32 %v1427, %v1481
      %v1506 = vadd.f32 %v1428, %v1484
      %v1507 = vadd.f32 %v1429, %v1489
      %v1508 = vadd.f32 %v1430, %v1492
      %v1509 = vadd.f32 %v1431, %v1497
      %v1510 = vadd.f32 %v1432, %v1500
      %s1511 = scalar_lea.vmem [#allocation2], 32
      %v1512 = vld [vmem:[%s1511 + $0x1] sm:$0xff]
      %v1513 = vld [vmem:[%s1511 + $0x11] sm:$0xff]
      %v1514 = vld [vmem:[%s1511 + $0x21] sm:$0xff]
      %v1515 = vld [vmem:[%s1511 + $0x31] sm:$0xff]
      %v1516 = vld [vmem:[%s1511 + $0x41] sm:$0xff]
      %v1517 = vld [vmem:[%s1511 + $0x51] sm:$0xff]
      %v1518 = vld [vmem:[%s1511 + $0x61] sm:$0xff]
      %v1519 = vld [vmem:[%s1511 + $0x71] sm:$0xff]
      %v1520 = vpack.c.bf16 %v1513, %v1512
      %v1521 = vpack.c.bf16 %v1515, %v1514
      %v1522 = vpack.c.bf16 %v1517, %v1516
      %v1523 = vpack.c.bf16 %v1519, %v1518
      %s1524 = scalar_lea.vmem %s3, 4
      %v1525 = vld [vmem:[%s1524] sm:$0xf]
      %v1526 = vld [vmem:[%s1511] sm:$0xff]
      %v1527 = vld [vmem:[%s1511 + $0x10] sm:$0xff]
      %v1528 = vld [vmem:[%s1511 + $0x20] sm:$0xff]
      %v1529 = vld [vmem:[%s1511 + $0x30] sm:$0xff]
      %v1530 = vld [vmem:[%s1511 + $0x40] sm:$0xff]
      %v1531 = vld [vmem:[%s1511 + $0x50] sm:$0xff]
      %v1532 = vld [vmem:[%s1511 + $0x60] sm:$0xff]
      %v1533 = vld [vmem:[%s1511 + $0x70] sm:$0xff]
      %v1534 = vpack.c.bf16 %v1527, %v1526
      %v1535 = vpack.c.bf16 %v1529, %v1528
      %v1536 = vpack.c.bf16 %v1531, %v1530
      %v1537 = vpack.c.bf16 %v1533, %v1532
      %s1538 = scalar_lea.vmem %s3, 12
      %v1539 = vld [vmem:[%s1538] sm:$0xf]
      %v1541 = vsel %vm743, %v1534, 0
      %v1544 = vsel %vm743, %v1535, 0
      %v1547 = vsel %vm743, %v1536, 0
      %v1550 = vsel %vm743, %v1537, 0
      %v1553 = vsel %vm814, %v1539, 0
      %1555 = vmatprep.subr.bf16.mxu0 0
      %1556 = vmatpush1.bf16.msra.mxu0 %v1553
      %1557 = vmatprep.subr.bf16.mxu0 0
      %1558 = vmatpush1.bf16.msra.mxu0 0
      %1559 = vmatprep.subr.bf16.mxu0 0
      %1560 = vmatpush1.bf16.msra.mxu0 0
      %1561 = vmatprep.subr.bf16.mxu0 0
      %1562 = vmatpush1.bf16.msra.mxu0 0
      %1563 = vmatprep.subr.bf16.mxu0 0
      %1564 = vmatpush1.bf16.msra.mxu0 0
      %1565 = vmatprep.subr.bf16.mxu0 0
      %1566 = vmatpush1.bf16.msra.mxu0 0
      %1567 = vmatprep.subr.bf16.mxu0 0
      %1568 = vmatpush1.bf16.msra.mxu0 0
      %1569 = vmatprep.subr.bf16.mxu0 0
      %1570 = vmatpush1.bf16.msra.mxu0 0
      %1571 = vmatprep.subr.bf16.mxu0 0
      %1572 = vmatpush1.bf16.msra.mxu0 0
      %1573 = vmatprep.subr.bf16.mxu0 0
      %1574 = vmatpush1.bf16.msra.mxu0 0
      %1575 = vmatprep.subr.bf16.mxu0 0
      %1576 = vmatpush1.bf16.msra.mxu0 0
      %1577 = vmatprep.subr.bf16.mxu0 0
      %1578 = vmatpush1.bf16.msra.mxu0 0
      %1579 = vmatprep.subr.bf16.mxu0 0
      %1580 = vmatpush1.bf16.msra.mxu0 0
      %1581 = vmatprep.subr.bf16.mxu0 0
      %1582 = vmatpush1.bf16.msra.mxu0 0
      %1583 = vmatprep.subr.bf16.mxu0 0
      %1584 = vmatpush1.bf16.msra.mxu0 0
      %1585 = vmatprep.subr.bf16.mxu0 0
      %1586 = vmatpush1.bf16.msra.mxu0 0
      %1587 = vmatprep.mubr.bf16.mxu0 0
      %1588 = vmatmul.mubr.bf16.gmra.mrb[0].mxu0 %v1541
      %v1589 = vpop.f32.mrb[0].mxu0
      %v1590 = vadd.f32 0.0, %v1589
      %v1591 = vpop.f32.mrb[0].mxu0
      %v1592 = vpop.f32.mrb[0].mxu0
      %v1593 = vadd.f32 0.0, %v1592
      %v1594 = vpop.f32.mrb[0].mxu0
      %1595 = vmatprep.mubr.bf16.mxu0 0
      %1596 = vmatmul.mubr.bf16.gmra.mrb[0].mxu0 %v1544
      %v1597 = vpop.f32.mrb[0].mxu0
      %v1598 = vadd.f32 0.0, %v1597
      %v1599 = vpop.f32.mrb[0].mxu0
      %v1600 = vpop.f32.mrb[0].mxu0
      %v1601 = vadd.f32 0.0, %v1600
      %v1602 = vpop.f32.mrb[0].mxu0
      %1603 = vmatprep.mubr.bf16.mxu0 0
      %1604 = vmatmul.mubr.bf16.gmra.mrb[0].mxu0 %v1547
      %v1605 = vpop.f32.mrb[0].mxu0
      %v1606 = vadd.f32 0.0, %v1605
      %v1607 = vpop.f32.mrb[0].mxu0
      %v1608 = vpop.f32.mrb[0].mxu0
      %v1609 = vadd.f32 0.0, %v1608
      %v1610 = vpop.f32.mrb[0].mxu0
      %1611 = vmatprep.mubr.bf16.mxu0 0
      %1612 = vmatmul.mubr.bf16.gmra.mrb[0].mxu0 %v1550
      %v1613 = vpop.f32.mrb[0].mxu0
      %v1614 = vadd.f32 0.0, %v1613
      %v1615 = vpop.f32.mrb[0].mxu0
      %v1616 = vpop.f32.mrb[0].mxu0
      %v1617 = vadd.f32 0.0, %v1616
      %v1618 = vpop.f32.mrb[0].mxu0
      %1619 = vdwg.mxu0
      %v1621 = vsel %vm743, %v1520, 0
      %v1624 = vsel %vm743, %v1521, 0
      %v1627 = vsel %vm743, %v1522, 0
      %v1630 = vsel %vm743, %v1523, 0
      %v1633 = vsel %vm814, %v1525, 0
      %1635 = vmatprep.subr.bf16.mxu0 0
      %1636 = vmatpush1.bf16.msra.mxu0 %v1633
      %1637 = vmatprep.subr.bf16.mxu0 0
      %1638 = vmatpush1.bf16.msra.mxu0 0
      %1639 = vmatprep.subr.bf16.mxu0 0
      %1640 = vmatpush1.bf16.msra.mxu0 0
      %1641 = vmatprep.subr.bf16.mxu0 0
      %1642 = vmatpush1.bf16.msra.mxu0 0
      %1643 = vmatprep.subr.bf16.mxu0 0
      %1644 = vmatpush1.bf16.msra.mxu0 0
      %1645 = vmatprep.subr.bf16.mxu0 0
      %1646 = vmatpush1.bf16.msra.mxu0 0
      %1647 = vmatprep.subr.bf16.mxu0 0
      %1648 = vmatpush1.bf16.msra.mxu0 0
      %1649 = vmatprep.subr.bf16.mxu0 0
      %1650 = vmatpush1.bf16.msra.mxu0 0
      %1651 = vmatprep.subr.bf16.mxu0 0
      %1652 = vmatpush1.bf16.msra.mxu0 0
      %1653 = vmatprep.subr.bf16.mxu0 0
      %1654 = vmatpush1.bf16.msra.mxu0 0
      %1655 = vmatprep.subr.bf16.mxu0 0
      %1656 = vmatpush1.bf16.msra.mxu0 0
      %1657 = vmatprep.subr.bf16.mxu0 0
      %1658 = vmatpush1.bf16.msra.mxu0 0
      %1659 = vmatprep.subr.bf16.mxu0 0
      %1660 = vmatpush1.bf16.msra.mxu0 0
      %1661 = vmatprep.subr.bf16.mxu0 0
      %1662 = vmatpush1.bf16.msra.mxu0 0
      %1663 = vmatprep.subr.bf16.mxu0 0
      %1664 = vmatpush1.bf16.msra.mxu0 0
      %1665 = vmatprep.subr.bf16.mxu0 0
      %1666 = vmatpush1.bf16.msra.mxu0 0
      %1667 = vmatprep.mubr.bf16.mxu0 0
      %1668 = vmatmul.mubr.bf16.gmra.mrb[0].mxu0 %v1621
      %v1669 = vpop.f32.mrb[0].mxu0
      %v1670 = vadd.f32 %v1590, %v1669
      %v1671 = vpop.f32.mrb[0].mxu0
      %v1672 = vpop.f32.mrb[0].mxu0
      %v1673 = vadd.f32 %v1593, %v1672
      %v1674 = vpop.f32.mrb[0].mxu0
      %1675 = vmatprep.mubr.bf16.mxu0 0
      %1676 = vmatmul.mubr.bf16.gmra.mrb[0].mxu0 %v1624
      %v1677 = vpop.f32.mrb[0].mxu0
      %v1678 = vadd.f32 %v1598, %v1677
      %v1679 = vpop.f32.mrb[0].mxu0
      %v1680 = vpop.f32.mrb[0].mxu0
      %v1681 = vadd.f32 %v1601, %v1680
      %v1682 = vpop.f32.mrb[0].mxu0
      %1683 = vmatprep.mubr.bf16.mxu0 0
      %1684 = vmatmul.mubr.bf16.gmra.mrb[0].mxu0 %v1627
      %v1685 = vpop.f32.mrb[0].mxu0
      %v1686 = vadd.f32 %v1606, %v1685
      %v1687 = vpop.f32.mrb[0].mxu0
      %v1688 = vpop.f32.mrb[0].mxu0
      %v1689 = vadd.f32 %v1609, %v1688
      %v1690 = vpop.f32.mrb[0].mxu0
      %1691 = vmatprep.mubr.bf16.mxu0 0
      %1692 = vmatmul.mubr.bf16.gmra.mrb[0].mxu0 %v1630
      %v1693 = vpop.f32.mrb[0].mxu0
      %v1694 = vadd.f32 %v1614, %v1693
      %v1695 = vpop.f32.mrb[0].mxu0
      %v1696 = vpop.f32.mrb[0].mxu0
      %v1697 = vadd.f32 %v1617, %v1696
      %v1698 = vpop.f32.mrb[0].mxu0
      %1699 = vdwg.mxu0
      %s1700 = scalar_lea.vmem %s3, 36
      %v1701 = vld [vmem:[%s1700] sm:$0xf]
      %v1703 = vsel %vm814, %v1701, 0
      %1705 = vmatprep.subr.bf16.mxu0 0
      %1706 = vmatpush1.bf16.msra.mxu0 %v1703
      %1707 = vmatprep.subr.bf16.mxu0 0
      %1708 = vmatpush1.bf16.msra.mxu0 0
      %1709 = vmatprep.subr.bf16.mxu0 0
      %1710 = vmatpush1.bf16.msra.mxu0 0
      %1711 = vmatprep.subr.bf16.mxu0 0
      %1712 = vmatpush1.bf16.msra.mxu0 0
      %1713 = vmatprep.subr.bf16.mxu0 0
      %1714 = vmatpush1.bf16.msra.mxu0 0
      %1715 = vmatprep.subr.bf16.mxu0 0
      %1716 = vmatpush1.bf16.msra.mxu0 0
      %1717 = vmatprep.subr.bf16.mxu0 0
      %1718 = vmatpush1.bf16.msra.mxu0 0
      %1719 = vmatprep.subr.bf16.mxu0 0
      %1720 = vmatpush1.bf16.msra.mxu0 0
      %1721 = vmatprep.subr.bf16.mxu0 0
      %1722 = vmatpush1.bf16.msra.mxu0 0
      %1723 = vmatprep.subr.bf16.mxu0 0
      %1724 = vmatpush1.bf16.msra.mxu0 0
      %1725 = vmatprep.subr.bf16.mxu0 0
      %1726 = vmatpush1.bf16.msra.mxu0 0
      %1727 = vmatprep.subr.bf16.mxu0 0
      %1728 = vmatpush1.bf16.msra.mxu0 0
      %1729 = vmatprep.subr.bf16.mxu0 0
      %1730 = vmatpush1.bf16.msra.mxu0 0
      %1731 = vmatprep.subr.bf16.mxu0 0
      %1732 = vmatpush1.bf16.msra.mxu0 0
      %1733 = vmatprep.subr.bf16.mxu0 0
      %1734 = vmatpush1.bf16.msra.mxu0 0
      %1735 = vmatprep.subr.bf16.mxu0 0
      %1736 = vmatpush1.bf16.msra.mxu0 0
      %1737 = vmatprep.mubr.bf16.mxu0 0
      %1738 = vmatmul.mubr.bf16.gmra.mrb[0].mxu0 %v884
      %v1739 = vpop.f32.mrb[0].mxu0
      %v1740 = vadd.f32 0.0, %v1739
      %v1741 = vpop.f32.mrb[0].mxu0
      %v1742 = vpop.f32.mrb[0].mxu0
      %v1743 = vadd.f32 0.0, %v1742
      %v1744 = vpop.f32.mrb[0].mxu0
      %1745 = vmatprep.mubr.bf16.mxu0 0
      %1746 = vmatmul.mubr.bf16.gmra.mrb[0].mxu0 %v887
      %v1747 = vpop.f32.mrb[0].mxu0
      %v1748 = vadd.f32 0.0, %v1747
      %v1749 = vpop.f32.mrb[0].mxu0
      %v1750 = vpop.f32.mrb[0].mxu0
      %v1751 = vadd.f32 0.0, %v1750
      %v1752 = vpop.f32.mrb[0].mxu0
      %1753 = vmatprep.mubr.bf16.mxu0 0
      %1754 = vmatmul.mubr.bf16.gmra.mrb[0].mxu0 %v890
      %v1755 = vpop.f32.mrb[0].mxu0
      %v1756 = vadd.f32 0.0, %v1755
      %v1757 = vpop.f32.mrb[0].mxu0
      %v1758 = vpop.f32.mrb[0].mxu0
      %v1759 = vadd.f32 0.0, %v1758
      %v1760 = vpop.f32.mrb[0].mxu0
      %1761 = vmatprep.mubr.bf16.mxu0 0
      %1762 = vmatmul.mubr.bf16.gmra.mrb[0].mxu0 %v893
      %v1763 = vpop.f32.mrb[0].mxu0
      %v1764 = vadd.f32 0.0, %v1763
      %v1765 = vpop.f32.mrb[0].mxu0
      %v1766 = vpop.f32.mrb[0].mxu0
      %v1767 = vadd.f32 0.0, %v1766
      %v1768 = vpop.f32.mrb[0].mxu0
      %1769 = vdwg.mxu0
      %v1770 = vadd.f32 %v1670, %v1740
      %v1771 = vadd.f32 %v1673, %v1743
      %v1772 = vadd.f32 %v1678, %v1748
      %v1773 = vadd.f32 %v1681, %v1751
      %v1774 = vadd.f32 %v1686, %v1756
      %v1775 = vadd.f32 %v1689, %v1759
      %v1776 = vadd.f32 %v1694, %v1764
      %v1777 = vadd.f32 %v1697, %v1767
      %s1778 = scalar_lea.vmem %s3, 44
      %v1779 = vld [vmem:[%s1778] sm:$0xf]
      %v1781 = vsel %vm814, %v1779, 0
      %1783 = vmatprep.subr.bf16.mxu0 0
      %1784 = vmatpush1.bf16.msra.mxu0 %v1781
      %1785 = vmatprep.subr.bf16.mxu0 0
      %1786 = vmatpush1.bf16.msra.mxu0 0
      %1787 = vmatprep.subr.bf16.mxu0 0
      %1788 = vmatpush1.bf16.msra.mxu0 0
      %1789 = vmatprep.subr.bf16.mxu0 0
      %1790 = vmatpush1.bf16.msra.mxu0 0
      %1791 = vmatprep.subr.bf16.mxu0 0
      %1792 = vmatpush1.bf16.msra.mxu0 0
      %1793 = vmatprep.subr.bf16.mxu0 0
      %1794 = vmatpush1.bf16.msra.mxu0 0
      %1795 = vmatprep.subr.bf16.mxu0 0
      %1796 = vmatpush1.bf16.msra.mxu0 0
      %1797 = vmatprep.subr.bf16.mxu0 0
      %1798 = vmatpush1.bf16.msra.mxu0 0
      %1799 = vmatprep.subr.bf16.mxu0 0
      %1800 = vmatpush1.bf16.msra.mxu0 0
      %1801 = vmatprep.subr.bf16.mxu0 0
      %1802 = vmatpush1.bf16.msra.mxu0 0
      %1803 = vmatprep.subr.bf16.mxu0 0
      %1804 = vmatpush1.bf16.msra.mxu0 0
      %1805 = vmatprep.subr.bf16.mxu0 0
      %1806 = vmatpush1.bf16.msra.mxu0 0
      %1807 = vmatprep.subr.bf16.mxu0 0
      %1808 = vmatpush1.bf16.msra.mxu0 0
      %1809 = vmatprep.subr.bf16.mxu0 0
      %1810 = vmatpush1.bf16.msra.mxu0 0
      %1811 = vmatprep.subr.bf16.mxu0 0
      %1812 = vmatpush1.bf16.msra.mxu0 0
      %1813 = vmatprep.subr.bf16.mxu0 0
      %1814 = vmatpush1.bf16.msra.mxu0 0
      %1815 = vmatprep.mubr.bf16.mxu0 0
      %1816 = vmatmul.mubr.bf16.gmra.mrb[0].mxu0 %v803
      %v1817 = vpop.f32.mrb[0].mxu0
      %v1818 = vadd.f32 0.0, %v1817
      %v1819 = vpop.f32.mrb[0].mxu0
      %v1820 = vpop.f32.mrb[0].mxu0
      %v1821 = vadd.f32 0.0, %v1820
      %v1822 = vpop.f32.mrb[0].mxu0
      %1823 = vmatprep.mubr.bf16.mxu0 0
      %1824 = vmatmul.mubr.bf16.gmra.mrb[0].mxu0 %v806
      %v1825 = vpop.f32.mrb[0].mxu0
      %v1826 = vadd.f32 0.0, %v1825
      %v1827 = vpop.f32.mrb[0].mxu0
      %v1828 = vpop.f32.mrb[0].mxu0
      %v1829 = vadd.f32 0.0, %v1828
      %v1830 = vpop.f32.mrb[0].mxu0
      %1831 = vmatprep.mubr.bf16.mxu0 0
      %1832 = vmatmul.mubr.bf16.gmra.mrb[0].mxu0 %v809
      %v1833 = vpop.f32.mrb[0].mxu0
      %v1834 = vadd.f32 0.0, %v1833
      %v1835 = vpop.f32.mrb[0].mxu0
      %v1836 = vpop.f32.mrb[0].mxu0
      %v1837 = vadd.f32 0.0, %v1836
      %v1838 = vpop.f32.mrb[0].mxu0
      %1839 = vmatprep.mubr.bf16.mxu0 0
      %1840 = vmatmul.mubr.bf16.gmra.mrb[0].mxu0 %v812
      %v1841 = vpop.f32.mrb[0].mxu0
      %v1842 = vadd.f32 0.0, %v1841
      %v1843 = vpop.f32.mrb[0].mxu0
      %v1844 = vpop.f32.mrb[0].mxu0
      %v1845 = vadd.f32 0.0, %v1844
      %v1846 = vpop.f32.mrb[0].mxu0
      %1847 = vdwg.mxu0
      %v1848 = vadd.f32 %v1770, %v1818
      %v1849 = vadd.f32 %v1771, %v1821
      %v1850 = vadd.f32 %v1772, %v1826
      %v1851 = vadd.f32 %v1773, %v1829
      %v1852 = vadd.f32 %v1774, %v1834
      %v1853 = vadd.f32 %v1775, %v1837
      %v1854 = vadd.f32 %v1776, %v1842
      %v1855 = vadd.f32 %v1777, %v1845
      %v1856 = vld [vmem:[%s1511 + $0x2] sm:$0xff]
      %v1857 = vld [vmem:[%s1511 + $0x12] sm:$0xff]
      %v1858 = vld [vmem:[%s1511 + $0x22] sm:$0xff]
      %v1859 = vld [vmem:[%s1511 + $0x32] sm:$0xff]
      %v1860 = vld [vmem:[%s1511 + $0x42] sm:$0xff]
      %v1861 = vld [vmem:[%s1511 + $0x52] sm:$0xff]
      %v1862 = vld [vmem:[%s1511 + $0x62] sm:$0xff]
      %v1863 = vld [vmem:[%s1511 + $0x72] sm:$0xff]
      %v1864 = vpack.c.bf16 %v1857, %v1856
      %v1865 = vpack.c.bf16 %v1859, %v1858
      %v1866 = vpack.c.bf16 %v1861, %v1860
      %v1867 = vpack.c.bf16 %v1863, %v1862
      %v1868 = vld [vmem:[%s3] sm:$0xf]
      %s1869 = scalar_lea.vmem %s3, 8
      %v1870 = vld [vmem:[%s1869] sm:$0xf]
      %v1872 = vsel %vm814, %v1870, 0
      %1874 = vmatprep.subr.bf16.mxu0 0
      %1875 = vmatpush1.bf16.msra.mxu0 %v1872
      %1876 = vmatprep.subr.bf16.mxu0 0
      %1877 = vmatpush1.bf16.msra.mxu0 0
      %1878 = vmatprep.subr.bf16.mxu0 0
      %1879 = vmatpush1.bf16.msra.mxu0 0
      %1880 = vmatprep.subr.bf16.mxu0 0
      %1881 = vmatpush1.bf16.msra.mxu0 0
      %1882 = vmatprep.subr.bf16.mxu0 0
      %1883 = vmatpush1.bf16.msra.mxu0 0
      %1884 = vmatprep.subr.bf16.mxu0 0
      %1885 = vmatpush1.bf16.msra.mxu0 0
      %1886 = vmatprep.subr.bf16.mxu0 0
      %1887 = vmatpush1.bf16.msra.mxu0 0
      %1888 = vmatprep.subr.bf16.mxu0 0
      %1889 = vmatpush1.bf16.msra.mxu0 0
      %1890 = vmatprep.subr.bf16.mxu0 0
      %1891 = vmatpush1.bf16.msra.mxu0 0
      %1892 = vmatprep.subr.bf16.mxu0 0
      %1893 = vmatpush1.bf16.msra.mxu0 0
      %1894 = vmatprep.subr.bf16.mxu0 0
      %1895 = vmatpush1.bf16.msra.mxu0 0
      %1896 = vmatprep.subr.bf16.mxu0 0
      %1897 = vmatpush1.bf16.msra.mxu0 0
      %1898 = vmatprep.subr.bf16.mxu0 0
      %1899 = vmatpush1.bf16.msra.mxu0 0
      %1900 = vmatprep.subr.bf16.mxu0 0
      %1901 = vmatpush1.bf16.msra.mxu0 0
      %1902 = vmatprep.subr.bf16.mxu0 0
      %1903 = vmatpush1.bf16.msra.mxu0 0
      %1904 = vmatprep.subr.bf16.mxu0 0
      %1905 = vmatpush1.bf16.msra.mxu0 0
      %1906 = vmatprep.mubr.bf16.mxu0 0
      %1907 = vmatmul.mubr.bf16.gmra.mrb[0].mxu0 %v1621
      %v1908 = vpop.f32.mrb[0].mxu0
      %v1909 = vadd.f32 0.0, %v1908
      %v1910 = vpop.f32.mrb[0].mxu0
      %v1911 = vpop.f32.mrb[0].mxu0
      %v1912 = vadd.f32 0.0, %v1911
      %v1913 = vpop.f32.mrb[0].mxu0
      %1914 = vmatprep.mubr.bf16.mxu0 0
      %1915 = vmatmul.mubr.bf16.gmra.mrb[0].mxu0 %v1624
      %v1916 = vpop.f32.mrb[0].mxu0
      %v1917 = vadd.f32 0.0, %v1916
      %v1918 = vpop.f32.mrb[0].mxu0
      %v1919 = vpop.f32.mrb[0].mxu0
      %v1920 = vadd.f32 0.0, %v1919
      %v1921 = vpop.f32.mrb[0].mxu0
      %1922 = vmatprep.mubr.bf16.mxu0 0
      %1923 = vmatmul.mubr.bf16.gmra.mrb[0].mxu0 %v1627
      %v1924 = vpop.f32.mrb[0].mxu0
      %v1925 = vadd.f32 0.0, %v1924
      %v1926 = vpop.f32.mrb[0].mxu0
      %v1927 = vpop.f32.mrb[0].mxu0
      %v1928 = vadd.f32 0.0, %v1927
      %v1929 = vpop.f32.mrb[0].mxu0
      %1930 = vmatprep.mubr.bf16.mxu0 0
      %1931 = vmatmul.mubr.bf16.gmra.mrb[0].mxu0 %v1630
      %v1932 = vpop.f32.mrb[0].mxu0
      %v1933 = vadd.f32 0.0, %v1932
      %v1934 = vpop.f32.mrb[0].mxu0
      %v1935 = vpop.f32.mrb[0].mxu0
      %v1936 = vadd.f32 0.0, %v1935
      %v1937 = vpop.f32.mrb[0].mxu0
      %1938 = vdwg.mxu0
      %v1940 = vsel %vm743, %v1864, 0
      %v1943 = vsel %vm743, %v1865, 0
      %v1946 = vsel %vm743, %v1866, 0
      %v1949 = vsel %vm743, %v1867, 0
      %v1952 = vsel %vm814, %v1868, 0
      %1954 = vmatprep.subr.bf16.mxu0 0
      %1955 = vmatpush1.bf16.msra.mxu0 %v1952
      %1956 = vmatprep.subr.bf16.mxu0 0
      %1957 = vmatpush1.bf16.msra.mxu0 0
      %1958 = vmatprep.subr.bf16.mxu0 0
      %1959 = vmatpush1.bf16.msra.mxu0 0
      %1960 = vmatprep.subr.bf16.mxu0 0
      %1961 = vmatpush1.bf16.msra.mxu0 0
      %1962 = vmatprep.subr.bf16.mxu0 0
      %1963 = vmatpush1.bf16.msra.mxu0 0
      %1964 = vmatprep.subr.bf16.mxu0 0
      %1965 = vmatpush1.bf16.msra.mxu0 0
      %1966 = vmatprep.subr.bf16.mxu0 0
      %1967 = vmatpush1.bf16.msra.mxu0 0
      %1968 = vmatprep.subr.bf16.mxu0 0
      %1969 = vmatpush1.bf16.msra.mxu0 0
      %1970 = vmatprep.subr.bf16.mxu0 0
      %1971 = vmatpush1.bf16.msra.mxu0 0
      %1972 = vmatprep.subr.bf16.mxu0 0
      %1973 = vmatpush1.bf16.msra.mxu0 0
      %1974 = vmatprep.subr.bf16.mxu0 0
      %1975 = vmatpush1.bf16.msra.mxu0 0
      %1976 = vmatprep.subr.bf16.mxu0 0
      %1977 = vmatpush1.bf16.msra.mxu0 0
      %1978 = vmatprep.subr.bf16.mxu0 0
      %1979 = vmatpush1.bf16.msra.mxu0 0
      %1980 = vmatprep.subr.bf16.mxu0 0
      %1981 = vmatpush1.bf16.msra.mxu0 0
      %1982 = vmatprep.subr.bf16.mxu0 0
      %1983 = vmatpush1.bf16.msra.mxu0 0
      %1984 = vmatprep.subr.bf16.mxu0 0
      %1985 = vmatpush1.bf16.msra.mxu0 0
      %1986 = vmatprep.mubr.bf16.mxu0 0
      %1987 = vmatmul.mubr.bf16.gmra.mrb[0].mxu0 %v1940
      %v1988 = vpop.f32.mrb[0].mxu0
      %v1989 = vadd.f32 %v1909, %v1988
      %v1990 = vpop.f32.mrb[0].mxu0
      %v1991 = vpop.f32.mrb[0].mxu0
      %v1992 = vadd.f32 %v1912, %v1991
      %v1993 = vpop.f32.mrb[0].mxu0
      %1994 = vmatprep.mubr.bf16.mxu0 0
      %1995 = vmatmul.mubr.bf16.gmra.mrb[0].mxu0 %v1943
      %v1996 = vpop.f32.mrb[0].mxu0
      %v1997 = vadd.f32 %v1917, %v1996
      %v1998 = vpop.f32.mrb[0].mxu0
      %v1999 = vpop.f32.mrb[0].mxu0
      %v2000 = vadd.f32 %v1920, %v1999
      %v2001 = vpop.f32.mrb[0].mxu0
      %2002 = vmatprep.mubr.bf16.mxu0 0
      %2003 = vmatmul.mubr.bf16.gmra.mrb[0].mxu0 %v1946
      %v2004 = vpop.f32.mrb[0].mxu0
      %v2005 = vadd.f32 %v1925, %v2004
      %v2006 = vpop.f32.mrb[0].mxu0
      %v2007 = vpop.f32.mrb[0].mxu0
      %v2008 = vadd.f32 %v1928, %v2007
      %v2009 = vpop.f32.mrb[0].mxu0
      %2010 = vmatprep.mubr.bf16.mxu0 0
      %2011 = vmatmul.mubr.bf16.gmra.mrb[0].mxu0 %v1949
      %v2012 = vpop.f32.mrb[0].mxu0
      %v2013 = vadd.f32 %v1933, %v2012
      %v2014 = vpop.f32.mrb[0].mxu0
      %v2015 = vpop.f32.mrb[0].mxu0
      %v2016 = vadd.f32 %v1936, %v2015
      %v2017 = vpop.f32.mrb[0].mxu0
      %2018 = vdwg.mxu0
      %s2019 = scalar_lea.vmem %s3, 32
      %v2020 = vld [vmem:[%s2019] sm:$0xf]
      %v2022 = vsel %vm814, %v2020, 0
      %2024 = vmatprep.subr.bf16.mxu0 0
      %2025 = vmatpush1.bf16.msra.mxu0 %v2022
      %2026 = vmatprep.subr.bf16.mxu0 0
      %2027 = vmatpush1.bf16.msra.mxu0 0
      %2028 = vmatprep.subr.bf16.mxu0 0
      %2029 = vmatpush1.bf16.msra.mxu0 0
      %2030 = vmatprep.subr.bf16.mxu0 0
      %2031 = vmatpush1.bf16.msra.mxu0 0
      %2032 = vmatprep.subr.bf16.mxu0 0
      %2033 = vmatpush1.bf16.msra.mxu0 0
      %2034 = vmatprep.subr.bf16.mxu0 0
      %2035 = vmatpush1.bf16.msra.mxu0 0
      %2036 = vmatprep.subr.bf16.mxu0 0
      %2037 = vmatpush1.bf16.msra.mxu0 0
      %2038 = vmatprep.subr.bf16.mxu0 0
      %2039 = vmatpush1.bf16.msra.mxu0 0
      %2040 = vmatprep.subr.bf16.mxu0 0
      %2041 = vmatpush1.bf16.msra.mxu0 0
      %2042 = vmatprep.subr.bf16.mxu0 0
      %2043 = vmatpush1.bf16.msra.mxu0 0
      %2044 = vmatprep.subr.bf16.mxu0 0
      %2045 = vmatpush1.bf16.msra.mxu0 0
      %2046 = vmatprep.subr.bf16.mxu0 0
      %2047 = vmatpush1.bf16.msra.mxu0 0
      %2048 = vmatprep.subr.bf16.mxu0 0
      %2049 = vmatpush1.bf16.msra.mxu0 0
      %2050 = vmatprep.subr.bf16.mxu0 0
      %2051 = vmatpush1.bf16.msra.mxu0 0
      %2052 = vmatprep.subr.bf16.mxu0 0
      %2053 = vmatpush1.bf16.msra.mxu0 0
      %2054 = vmatprep.subr.bf16.mxu0 0
      %2055 = vmatpush1.bf16.msra.mxu0 0
      %2056 = vmatprep.mubr.bf16.mxu0 0
      %2057 = vmatmul.mubr.bf16.gmra.mrb[0].mxu0 %v1252
      %v2058 = vpop.f32.mrb[0].mxu0
      %v2059 = vadd.f32 0.0, %v2058
      %v2060 = vpop.f32.mrb[0].mxu0
      %v2061 = vpop.f32.mrb[0].mxu0
      %v2062 = vadd.f32 0.0, %v2061
      %v2063 = vpop.f32.mrb[0].mxu0
      %2064 = vmatprep.mubr.bf16.mxu0 0
      %2065 = vmatmul.mubr.bf16.gmra.mrb[0].mxu0 %v1255
      %v2066 = vpop.f32.mrb[0].mxu0
      %v2067 = vadd.f32 0.0, %v2066
      %v2068 = vpop.f32.mrb[0].mxu0
      %v2069 = vpop.f32.mrb[0].mxu0
      %v2070 = vadd.f32 0.0, %v2069
      %v2071 = vpop.f32.mrb[0].mxu0
      %2072 = vmatprep.mubr.bf16.mxu0 0
      %2073 = vmatmul.mubr.bf16.gmra.mrb[0].mxu0 %v1258
      %v2074 = vpop.f32.mrb[0].mxu0
      %v2075 = vadd.f32 0.0, %v2074
      %v2076 = vpop.f32.mrb[0].mxu0
      %v2077 = vpop.f32.mrb[0].mxu0
      %v2078 = vadd.f32 0.0, %v2077
      %v2079 = vpop.f32.mrb[0].mxu0
      %2080 = vmatprep.mubr.bf16.mxu0 0
      %2081 = vmatmul.mubr.bf16.gmra.mrb[0].mxu0 %v1261
      %v2082 = vpop.f32.mrb[0].mxu0
      %v2083 = vadd.f32 0.0, %v2082
      %v2084 = vpop.f32.mrb[0].mxu0
      %v2085 = vpop.f32.mrb[0].mxu0
      %v2086 = vadd.f32 0.0, %v2085
      %v2087 = vpop.f32.mrb[0].mxu0
      %2088 = vdwg.mxu0
      %v2089 = vadd.f32 %v1989, %v2059
      %v2090 = vadd.f32 %v1992, %v2062
      %v2091 = vadd.f32 %v1997, %v2067
      %v2092 = vadd.f32 %v2000, %v2070
      %v2093 = vadd.f32 %v2005, %v2075
      %v2094 = vadd.f32 %v2008, %v2078
      %v2095 = vadd.f32 %v2013, %v2083
      %v2096 = vadd.f32 %v2016, %v2086
      %s2097 = scalar_lea.vmem %s3, 40
      %v2098 = vld [vmem:[%s2097] sm:$0xf]
      %v2100 = vsel %vm814, %v2098, 0
      %2102 = vmatprep.subr.bf16.mxu0 0
      %2103 = vmatpush1.bf16.msra.mxu0 %v2100
      %2104 = vmatprep.subr.bf16.mxu0 0
      %2105 = vmatpush1.bf16.msra.mxu0 0
      %2106 = vmatprep.subr.bf16.mxu0 0
      %2107 = vmatpush1.bf16.msra.mxu0 0
      %2108 = vmatprep.subr.bf16.mxu0 0
      %2109 = vmatpush1.bf16.msra.mxu0 0
      %2110 = vmatprep.subr.bf16.mxu0 0
      %2111 = vmatpush1.bf16.msra.mxu0 0
      %2112 = vmatprep.subr.bf16.mxu0 0
      %2113 = vmatpush1.bf16.msra.mxu0 0
      %2114 = vmatprep.subr.bf16.mxu0 0
      %2115 = vmatpush1.bf16.msra.mxu0 0
      %2116 = vmatprep.subr.bf16.mxu0 0
      %2117 = vmatpush1.bf16.msra.mxu0 0
      %2118 = vmatprep.subr.bf16.mxu0 0
      %2119 = vmatpush1.bf16.msra.mxu0 0
      %2120 = vmatprep.subr.bf16.mxu0 0
      %2121 = vmatpush1.bf16.msra.mxu0 0
      %2122 = vmatprep.subr.bf16.mxu0 0
      %2123 = vmatpush1.bf16.msra.mxu0 0
      %2124 = vmatprep.subr.bf16.mxu0 0
      %2125 = vmatpush1.bf16.msra.mxu0 0
      %2126 = vmatprep.subr.bf16.mxu0 0
      %2127 = vmatpush1.bf16.msra.mxu0 0
      %2128 = vmatprep.subr.bf16.mxu0 0
      %2129 = vmatpush1.bf16.msra.mxu0 0
      %2130 = vmatprep.subr.bf16.mxu0 0
      %2131 = vmatpush1.bf16.msra.mxu0 0
      %2132 = vmatprep.subr.bf16.mxu0 0
      %2133 = vmatpush1.bf16.msra.mxu0 0
      %2134 = vmatprep.mubr.bf16.mxu0 0
      %2135 = vmatmul.mubr.bf16.gmra.mrb[0].mxu0 %v884
      %v2136 = vpop.f32.mrb[0].mxu0
      %v2137 = vadd.f32 0.0, %v2136
      %v2138 = vpop.f32.mrb[0].mxu0
      %v2139 = vpop.f32.mrb[0].mxu0
      %v2140 = vadd.f32 0.0, %v2139
      %v2141 = vpop.f32.mrb[0].mxu0
      %2142 = vmatprep.mubr.bf16.mxu0 0
      %2143 = vmatmul.mubr.bf16.gmra.mrb[0].mxu0 %v887
      %v2144 = vpop.f32.mrb[0].mxu0
      %v2145 = vadd.f32 0.0, %v2144
      %v2146 = vpop.f32.mrb[0].mxu0
      %v2147 = vpop.f32.mrb[0].mxu0
      %v2148 = vadd.f32 0.0, %v2147
      %v2149 = vpop.f32.mrb[0].mxu0
      %2150 = vmatprep.mubr.bf16.mxu0 0
      %2151 = vmatmul.mubr.bf16.gmra.mrb[0].mxu0 %v890
      %v2152 = vpop.f32.mrb[0].mxu0
      %v2153 = vadd.f32 0.0, %v2152
      %v2154 = vpop.f32.mrb[0].mxu0
      %v2155 = vpop.f32.mrb[0].mxu0
      %v2156 = vadd.f32 0.0, %v2155
      %v2157 = vpop.f32.mrb[0].mxu0
      %2158 = vmatprep.mubr.bf16.mxu0 0
      %2159 = vmatmul.mubr.bf16.gmra.mrb[0].mxu0 %v893
      %v2160 = vpop.f32.mrb[0].mxu0
      %v2161 = vadd.f32 0.0, %v2160
      %v2162 = vpop.f32.mrb[0].mxu0
      %v2163 = vpop.f32.mrb[0].mxu0
      %v2164 = vadd.f32 0.0, %v2163
      %v2165 = vpop.f32.mrb[0].mxu0
      %2166 = vdwg.mxu0
      %v2167 = vadd.f32 %v2089, %v2137
      %v2168 = vadd.f32 %v2090, %v2140
      %v2169 = vadd.f32 %v2091, %v2145
      %v2170 = vadd.f32 %v2092, %v2148
      %v2171 = vadd.f32 %v2093, %v2153
      %v2172 = vadd.f32 %v2094, %v2156
      %v2173 = vadd.f32 %v2095, %v2161
      %v2174 = vadd.f32 %v2096, %v2164
      %vm2175 = vcmask 31744
      %v2176 = vsel %vm2175, %v1159, 0.0
      %v2177 = vsel %vm2175, %v1160, 0.0
      %v2178 = vadd.f32 %v2176, %v2177
      %v2179 = vsel %vm2175, %v1161, 0.0
      %v2180 = vadd.f32 %v2178, %v2179
      %v2181 = vsel %vm2175, %v1162, 0.0
      %v2182 = vadd.f32 %v2180, %v2181
      %v2183 = vsel %vm2175, %v1163, 0.0
      %v2184 = vadd.f32 %v2182, %v2183
      %v2185 = vsel %vm2175, %v1164, 0.0
      %v2186 = vadd.f32 %v2184, %v2185
      %v2187 = vsel %vm2175, %v1165, 0.0
      %v2188 = vadd.f32 %v2186, %v2187
      %v2189 = vsel %vm2175, %v1166, 0.0
      %v2190 = vadd.f32 %v2188, %v2189
      %v2191 = vrot.slane %v2190, 4
      %v2192 = vadd.f32 %v2190, %v2191
      %v2193 = vrot.slane %v2192, 2
      %v2194 = vadd.f32 %v2192, %v2193
      %v2195 = vrot.slane %v2194, 1
      %v2196 = vadd.f32 %v2194, %v2195
      %v2197 = vmul.f32 %v1159, %v1159
      %v2198 = vmul.f32 %v1160, %v1160
      %v2199 = vmul.f32 %v1161, %v1161
      %v2200 = vmul.f32 %v1162, %v1162
      %v2201 = vmul.f32 %v1163, %v1163
      %v2202 = vmul.f32 %v1164, %v1164
      %v2203 = vmul.f32 %v1165, %v1165
      %v2204 = vmul.f32 %v1166, %v1166
      %v2205 = vsel %vm2175, %v2197, 0.0
      %v2206 = vsel %vm2175, %v2198, 0.0
      %v2207 = vadd.f32 %v2205, %v2206
      %v2208 = vsel %vm2175, %v2199, 0.0
      %v2209 = vadd.f32 %v2207, %v2208
      %v2210 = vsel %vm2175, %v2200, 0.0
      %v2211 = vadd.f32 %v2209, %v2210
      %v2212 = vsel %vm2175, %v2201, 0.0
      %v2213 = vadd.f32 %v2211, %v2212
      %v2214 = vsel %vm2175, %v2202, 0.0
      %v2215 = vadd.f32 %v2213, %v2214
      %v2216 = vsel %vm2175, %v2203, 0.0
      %v2217 = vadd.f32 %v2215, %v2216
      %v2218 = vsel %vm2175, %v2204, 0.0
      %v2219 = vadd.f32 %v2217, %v2218
      %v2220 = vrot.slane %v2219, 4
      %v2221 = vadd.f32 %v2219, %v2220
      %v2222 = vrot.slane %v2221, 2
      %v2223 = vadd.f32 %v2221, %v2222
      %v2224 = vrot.slane %v2223, 1
      %v2225 = vadd.f32 %v2223, %v2224
      %v2226 = vsel %vm2175, %v1503, 0.0
      %v2227 = vsel %vm2175, %v1504, 0.0
      %v2228 = vadd.f32 %v2226, %v2227
      %v2229 = vsel %vm2175, %v1505, 0.0
      %v2230 = vadd.f32 %v2228, %v2229
      %v2231 = vsel %vm2175, %v1506, 0.0
      %v2232 = vadd.f32 %v2230, %v2231
      %v2233 = vsel %vm2175, %v1507, 0.0
      %v2234 = vadd.f32 %v2232, %v2233
      %v2235 = vsel %vm2175, %v1508, 0.0
      %v2236 = vadd.f32 %v2234, %v2235
      %v2237 = vsel %vm2175, %v1509, 0.0
      %v2238 = vadd.f32 %v2236, %v2237
      %v2239 = vsel %vm2175, %v1510, 0.0
      %v2240 = vadd.f32 %v2238, %v2239
      %v2241 = vrot.slane %v2240, 4
      %v2242 = vadd.f32 %v2240, %v2241
      %v2243 = vrot.slane %v2242, 2
      %v2244 = vadd.f32 %v2242, %v2243
      %v2245 = vrot.slane %v2244, 1
      %v2246 = vadd.f32 %v2244, %v2245
      %v2247 = vadd.f32 %v2196, %v2246
      %v2248 = vmul.f32 %v1503, %v1503
      %v2249 = vmul.f32 %v1504, %v1504
      %v2250 = vmul.f32 %v1505, %v1505
      %v2251 = vmul.f32 %v1506, %v1506
      %v2252 = vmul.f32 %v1507, %v1507
      %v2253 = vmul.f32 %v1508, %v1508
      %v2254 = vmul.f32 %v1509, %v1509
      %v2255 = vmul.f32 %v1510, %v1510
      %v2256 = vsel %vm2175, %v2248, 0.0
      %v2257 = vsel %vm2175, %v2249, 0.0
      %v2258 = vadd.f32 %v2256, %v2257
      %v2259 = vsel %vm2175, %v2250, 0.0
      %v2260 = vadd.f32 %v2258, %v2259
      %v2261 = vsel %vm2175, %v2251, 0.0
      %v2262 = vadd.f32 %v2260, %v2261
      %v2263 = vsel %vm2175, %v2252, 0.0
      %v2264 = vadd.f32 %v2262, %v2263
      %v2265 = vsel %vm2175, %v2253, 0.0
      %v2266 = vadd.f32 %v2264, %v2265
      %v2267 = vsel %vm2175, %v2254, 0.0
      %v2268 = vadd.f32 %v2266, %v2267
      %v2269 = vsel %vm2175, %v2255, 0.0
      %v2270 = vadd.f32 %v2268, %v2269
      %v2271 = vrot.slane %v2270, 4
      %v2272 = vadd.f32 %v2270, %v2271
      %v2273 = vrot.slane %v2272, 2
      %v2274 = vadd.f32 %v2272, %v2273
      %v2275 = vrot.slane %v2274, 1
      %v2276 = vadd.f32 %v2274, %v2275
      %v2277 = vadd.f32 %v2225, %v2276
      %v2278 = vsel %vm2175, %v1848, 0.0
      %v2279 = vsel %vm2175, %v1849, 0.0
      %v2280 = vadd.f32 %v2278, %v2279
      %v2281 = vsel %vm2175, %v1850, 0.0
      %v2282 = vadd.f32 %v2280, %v2281
      %v2283 = vsel %vm2175, %v1851, 0.0
      %v2284 = vadd.f32 %v2282, %v2283
      %v2285 = vsel %vm2175, %v1852, 0.0
      %v2286 = vadd.f32 %v2284, %v2285
      %v2287 = vsel %vm2175, %v1853, 0.0
      %v2288 = vadd.f32 %v2286, %v2287
      %v2289 = vsel %vm2175, %v1854, 0.0
      %v2290 = vadd.f32 %v2288, %v2289
      %v2291 = vsel %vm2175, %v1855, 0.0
      %v2292 = vadd.f32 %v2290, %v2291
      %v2293 = vrot.slane %v2292, 4
      %v2294 = vadd.f32 %v2292, %v2293
      %v2295 = vrot.slane %v2294, 2
      %v2296 = vadd.f32 %v2294, %v2295
      %v2297 = vrot.slane %v2296, 1
      %v2298 = vadd.f32 %v2296, %v2297
      %v2299 = vadd.f32 %v2247, %v2298
      %v2300 = vmul.f32 %v1848, %v1848
      %v2301 = vmul.f32 %v1849, %v1849
      %v2302 = vmul.f32 %v1850, %v1850
      %v2303 = vmul.f32 %v1851, %v1851
      %v2304 = vmul.f32 %v1852, %v1852
      %v2305 = vmul.f32 %v1853, %v1853
      %v2306 = vmul.f32 %v1854, %v1854
      %v2307 = vmul.f32 %v1855, %v1855
      %v2308 = vsel %vm2175, %v2300, 0.0
      %v2309 = vsel %vm2175, %v2301, 0.0
      %v2310 = vadd.f32 %v2308, %v2309
      %v2311 = vsel %vm2175, %v2302, 0.0
      %v2312 = vadd.f32 %v2310, %v2311
      %v2313 = vsel %vm2175, %v2303, 0.0
      %v2314 = vadd.f32 %v2312, %v2313
      %v2315 = vsel %vm2175, %v2304, 0.0
      %v2316 = vadd.f32 %v2314, %v2315
      %v2317 = vsel %vm2175, %v2305, 0.0
      %v2318 = vadd.f32 %v2316, %v2317
      %v2319 = vsel %vm2175, %v2306, 0.0
      %v2320 = vadd.f32 %v2318, %v2319
      %v2321 = vsel %vm2175, %v2307, 0.0
      %v2322 = vadd.f32 %v2320, %v2321
      %v2323 = vrot.slane %v2322, 4
      %v2324 = vadd.f32 %v2322, %v2323
      %v2325 = vrot.slane %v2324, 2
      %v2326 = vadd.f32 %v2324, %v2325
      %v2327 = vrot.slane %v2326, 1
      %v2328 = vadd.f32 %v2326, %v2327
      %v2329 = vadd.f32 %v2277, %v2328
      %v2330 = vsel %vm2175, %v2167, 0.0
      %v2331 = vsel %vm2175, %v2168, 0.0
      %v2332 = vadd.f32 %v2330, %v2331
      %v2333 = vsel %vm2175, %v2169, 0.0
      %v2334 = vadd.f32 %v2332, %v2333
      %v2335 = vsel %vm2175, %v2170, 0.0
      %v2336 = vadd.f32 %v2334, %v2335
      %v2337 = vsel %vm2175, %v2171, 0.0
      %v2338 = vadd.f32 %v2336, %v2337
      %v2339 = vsel %vm2175, %v2172, 0.0
      %v2340 = vadd.f32 %v2338, %v2339
      %v2341 = vsel %vm2175, %v2173, 0.0
      %v2342 = vadd.f32 %v2340, %v2341
      %v2343 = vsel %vm2175, %v2174, 0.0
      %v2344 = vadd.f32 %v2342, %v2343
      %v2345 = vrot.slane %v2344, 4
      %v2346 = vadd.f32 %v2344, %v2345
      %v2347 = vrot.slane %v2346, 2
      %v2348 = vadd.f32 %v2346, %v2347
      %v2349 = vrot.slane %v2348, 1
      %v2350 = vadd.f32 %v2348, %v2349
      %v2351 = vadd.f32 %v2299, %v2350
      %v2352 = vmul.f32 %v2167, %v2167
      %v2353 = vmul.f32 %v2168, %v2168
      %v2354 = vmul.f32 %v2169, %v2169
      %v2355 = vmul.f32 %v2170, %v2170
      %v2356 = vmul.f32 %v2171, %v2171
      %v2357 = vmul.f32 %v2172, %v2172
      %v2358 = vmul.f32 %v2173, %v2173
      %v2359 = vmul.f32 %v2174, %v2174
      %v2360 = vsel %vm2175, %v2352, 0.0
      %v2361 = vsel %vm2175, %v2353, 0.0
      %v2362 = vadd.f32 %v2360, %v2361
      %v2363 = vsel %vm2175, %v2354, 0.0
      %v2364 = vadd.f32 %v2362, %v2363
      %v2365 = vsel %vm2175, %v2355, 0.0
      %v2366 = vadd.f32 %v2364, %v2365
      %v2367 = vsel %vm2175, %v2356, 0.0
      %v2368 = vadd.f32 %v2366, %v2367
      %v2369 = vsel %vm2175, %v2357, 0.0
      %v2370 = vadd.f32 %v2368, %v2369
      %v2371 = vsel %vm2175, %v2358, 0.0
      %v2372 = vadd.f32 %v2370, %v2371
      %v2373 = vsel %vm2175, %v2359, 0.0
      %v2374 = vadd.f32 %v2372, %v2373
      %v2375 = vrot.slane %v2374, 4
      %v2376 = vadd.f32 %v2374, %v2375
      %v2377 = vrot.slane %v2376, 2
      %v2378 = vadd.f32 %v2376, %v2377
      %v2379 = vrot.slane %v2378, 1
      %v2380 = vadd.f32 %v2378, %v2379
      %v2381 = vadd.f32 %v2329, %v2380
      %v2382 = vrcp.pop 256.0
      %v2383 = vmul.f32 %v2351, %v2382
      %v2384 = vmul.f32 %v2381, %v2382
      %v2385 = vmul.f32 %v2383, %v2383
      %v2386 = vsub.f32 %v2384, %v2385
      %v2387 = vadd.f32 %v2386, 1e-05
      %v2388 = vrsqrt.pop %v2387
      %v2389 = vsub.f32 %v1159, %v2383
      %v2390 = vsub.f32 %v1160, %v2383
      %v2391 = vsub.f32 %v1161, %v2383
      %v2392 = vsub.f32 %v1162, %v2383
      %v2393 = vsub.f32 %v1163, %v2383
      %v2394 = vsub.f32 %v1164, %v2383
      %v2395 = vsub.f32 %v1165, %v2383
      %v2396 = vsub.f32 %v1166, %v2383
      %v2397 = vmul.f32 %v2389, %v2388
      %v2398 = vmul.f32 %v2390, %v2388
      %v2399 = vmul.f32 %v2391, %v2388
      %v2400 = vmul.f32 %v2392, %v2388
      %v2401 = vmul.f32 %v2393, %v2388
      %v2402 = vmul.f32 %v2394, %v2388
      %v2403 = vmul.f32 %v2395, %v2388
      %v2404 = vmul.f32 %v2396, %v2388
      %2405 = vst.msk [vmem:[%s197] sm:$0xff] %vm2175, %v2397
      %2406 = vst.msk [vmem:[%s197 + $0x8] sm:$0xff] %vm2175, %v2398
      %2407 = vst.msk [vmem:[%s197 + $0x10] sm:$0xff] %vm2175, %v2399
      %2408 = vst.msk [vmem:[%s197 + $0x18] sm:$0xff] %vm2175, %v2400
      %2409 = vst.msk [vmem:[%s197 + $0x20] sm:$0xff] %vm2175, %v2401
      %2410 = vst.msk [vmem:[%s197 + $0x28] sm:$0xff] %vm2175, %v2402
      %2411 = vst.msk [vmem:[%s197 + $0x30] sm:$0xff] %vm2175, %v2403
      %2412 = vst.msk [vmem:[%s197 + $0x38] sm:$0xff] %vm2175, %v2404
      %v2413 = vsub.f32 %v1503, %v2383
      %v2414 = vsub.f32 %v1504, %v2383
      %v2415 = vsub.f32 %v1505, %v2383
      %v2416 = vsub.f32 %v1506, %v2383
      %v2417 = vsub.f32 %v1507, %v2383
      %v2418 = vsub.f32 %v1508, %v2383
      %v2419 = vsub.f32 %v1509, %v2383
      %v2420 = vsub.f32 %v1510, %v2383
      %v2421 = vmul.f32 %v2413, %v2388
      %v2422 = vmul.f32 %v2414, %v2388
      %v2423 = vmul.f32 %v2415, %v2388
      %v2424 = vmul.f32 %v2416, %v2388
      %v2425 = vmul.f32 %v2417, %v2388
      %v2426 = vmul.f32 %v2418, %v2388
      %v2427 = vmul.f32 %v2419, %v2388
      %v2428 = vmul.f32 %v2420, %v2388
      %s2429 = scalar_lea.vmem %s197, 64
      %2430 = vst.msk [vmem:[%s2429] sm:$0xff] %vm2175, %v2421
      %2431 = vst.msk [vmem:[%s2429 + $0x8] sm:$0xff] %vm2175, %v2422
      %2432 = vst.msk [vmem:[%s2429 + $0x10] sm:$0xff] %vm2175, %v2423
      %2433 = vst.msk [vmem:[%s2429 + $0x18] sm:$0xff] %vm2175, %v2424
      %2434 = vst.msk [vmem:[%s2429 + $0x20] sm:$0xff] %vm2175, %v2425
      %2435 = vst.msk [vmem:[%s2429 + $0x28] sm:$0xff] %vm2175, %v2426
      %2436 = vst.msk [vmem:[%s2429 + $0x30] sm:$0xff] %vm2175, %v2427
      %2437 = vst.msk [vmem:[%s2429 + $0x38] sm:$0xff] %vm2175, %v2428
      %v2438 = vsub.f32 %v1848, %v2383
      %v2439 = vsub.f32 %v1849, %v2383
      %v2440 = vsub.f32 %v1850, %v2383
      %v2441 = vsub.f32 %v1851, %v2383
      %v2442 = vsub.f32 %v1852, %v2383
      %v2443 = vsub.f32 %v1853, %v2383
      %v2444 = vsub.f32 %v1854, %v2383
      %v2445 = vsub.f32 %v1855, %v2383
      %v2446 = vmul.f32 %v2438, %v2388
      %v2447 = vmul.f32 %v2439, %v2388
      %v2448 = vmul.f32 %v2440, %v2388
      %v2449 = vmul.f32 %v2441, %v2388
      %v2450 = vmul.f32 %v2442, %v2388
      %v2451 = vmul.f32 %v2443, %v2388
      %v2452 = vmul.f32 %v2444, %v2388
      %v2453 = vmul.f32 %v2445, %v2388
      %s2454 = scalar_lea.vmem %s197, 128
      %2455 = vst.msk [vmem:[%s2454] sm:$0xff] %vm2175, %v2446
      %2456 = vst.msk [vmem:[%s2454 + $0x8] sm:$0xff] %vm2175, %v2447
      %2457 = vst.msk [vmem:[%s2454 + $0x10] sm:$0xff] %vm2175, %v2448
      %2458 = vst.msk [vmem:[%s2454 + $0x18] sm:$0xff] %vm2175, %v2449
      %2459 = vst.msk [vmem:[%s2454 + $0x20] sm:$0xff] %vm2175, %v2450
      %2460 = vst.msk [vmem:[%s2454 + $0x28] sm:$0xff] %vm2175, %v2451
      %2461 = vst.msk [vmem:[%s2454 + $0x30] sm:$0xff] %vm2175, %v2452
      %2462 = vst.msk [vmem:[%s2454 + $0x38] sm:$0xff] %vm2175, %v2453
      %v2463 = vsub.f32 %v2167, %v2383
      %v2464 = vsub.f32 %v2168, %v2383
      %v2465 = vsub.f32 %v2169, %v2383
      %v2466 = vsub.f32 %v2170, %v2383
      %v2467 = vsub.f32 %v2171, %v2383
      %v2468 = vsub.f32 %v2172, %v2383
      %v2469 = vsub.f32 %v2173, %v2383
      %v2470 = vsub.f32 %v2174, %v2383
      %v2471 = vmul.f32 %v2463, %v2388
      %v2472 = vmul.f32 %v2464, %v2388
      %v2473 = vmul.f32 %v2465, %v2388
      %v2474 = vmul.f32 %v2466, %v2388
      %v2475 = vmul.f32 %v2467, %v2388
      %v2476 = vmul.f32 %v2468, %v2388
      %v2477 = vmul.f32 %v2469, %v2388
      %v2478 = vmul.f32 %v2470, %v2388
      %s2479 = scalar_lea.vmem %s197, 192
      %2480 = vst.msk [vmem:[%s2479] sm:$0xff] %vm2175, %v2471
      %2481 = vst.msk [vmem:[%s2479 + $0x8] sm:$0xff] %vm2175, %v2472
      %2482 = vst.msk [vmem:[%s2479 + $0x10] sm:$0xff] %vm2175, %v2473
      %2483 = vst.msk [vmem:[%s2479 + $0x18] sm:$0xff] %vm2175, %v2474
      %2484 = vst.msk [vmem:[%s2479 + $0x20] sm:$0xff] %vm2175, %v2475
      %2485 = vst.msk [vmem:[%s2479 + $0x28] sm:$0xff] %vm2175, %v2476
      %2486 = vst.msk [vmem:[%s2479 + $0x30] sm:$0xff] %vm2175, %v2477
      %2487 = vst.msk [vmem:[%s2479 + $0x38] sm:$0xff] %vm2175, %v2478
      %p2488 = scmp.lt.s32.totalorder %s15, 1
      %s2489 = scalar_select %p2488, %s15, 1
      %s2490 = smul.addr %s2489, 32
      %s2491 = smul.addr %s2490, 8
      %s2492 = scalar_lea.vmem %s4, %s2491
      // Predicated region
      $region37: #{unet_innermost_forward.1} parent=35 // pred_check
        %p2493 = pneg %p122
      $region38: #{unet_innermost_forward.1} parent=35 // pred_check_branch
        %2495 = sbr.rel (%p2493) target = $region40
      $region39: #{unet_innermost_forward.1} parent=35 // pred_region
        _
      $region40: #{unet_innermost_forward.1} parent=35 // pred_fallthru
        _
    $region36: #{unet_innermost_forward.1} parent=5 // pred_fallthru
      _
    %p2496 = scmp.le.s32.totalorder 2, %s10
    // Predicated region
    $region41: #{unet_innermost_forward.1} parent=5 // pred_check
      %p2497 = pneg %p2496
    $region42: #{unet_innermost_forward.1} parent=5 // pred_check_branch
      %2499 = sbr.rel (%p2497) target = $region44
    $region43: #{unet_innermost_forward.1} parent=5 // pred_region
      %s2500 = ssub.s32 %s10, 2
      // Predicated region
      $region45: #{unet_innermost_forward.1} parent=43 // pred_check
        %p2501 = pneg %p128
      $region46: #{unet_innermost_forward.1} parent=43 // pred_check_branch
        %2503 = sbr.rel (%p2501) target = $region48
      $region47: #{unet_innermost_forward.1} parent=43 // pred_region
        %p2504 = scmp.lt.s32.totalorder %s16, 1
        %s2505 = scalar_select %p2504, %s16, 1
        %s2506 = smul.addr %s2505, 32
        %s2507 = smul.addr %s2506, 8
        %s2508 = scalar_lea.vmem %s4, %s2507
      $region48: #{unet_innermost_forward.1} parent=43 // pred_fallthru
        _
    $region44: #{unet_innermost_forward.1} parent=5 // pred_fallthru
      _
  $region6: #{unet_innermost_forward.1} parent=0 // loop_footer
    %s14 = sadd.s32 1, %s10
  $region7: #{unet_innermost_forward.1} parent=0 // loop_footer_branch
    %9 = sbr.rel target = $region3
  $region8: #{unet_innermost_forward.1} parent=0 // loop_exit
    _

</llo_original>
